<compile_context>
chip_gen: v7x
topology: tpu7x:2x2x1
jax: 0.10.0
libtpu: 0.0.40
codegen_flags: <defaults>
</compile_context>

<pallas_src>
import functools
import math

import jax
import jax.numpy as jnp
from jax import lax
from jax.experimental import pallas as pl
from jax.experimental.pallas import tpu as pltpu


# ---------------------------------------------------------------------------
# Fused Pallas kernel: q-proj + (LayerNorm+) kv-proj + MHSA + out-proj
# ---------------------------------------------------------------------------
def _fused_attn_kernel(x_ref, xkv_ref, g_ref, b_ref, wq_ref, wk_ref, wv_ref,
                       wp_ref, mask_ref, rep_ref, o_ref, kvbd_ref,
                       *, num_heads, use_ln):
    """One (batch, query-row-tile) per grid step.

    x_ref    : (1, TN, C) bf16  query-side activation tile
    xkv_ref  : (1, M,  C) bf16  kv-side tokens (M = 3*(H/R)*(W/R) when R > 1)
    g_ref    : (1, C)     f32   LayerNorm gamma (unused when use_ln=False)
    b_ref    : (1, C)     f32   LayerNorm beta
    wq_ref   : (C, C)     bf16  q weight with softmax scale pre-folded
    wk_ref   : (C, C)     bf16  k weight (wkv[:, :C])
    wv_ref   : (C, C)     bf16  v weight (wkv[:, C:])
    wp_ref   : (C, C)     bf16  output projection weight
    mask_ref : (H*M, C)   bf16  block-diagonal head mask (1 where col-head == row-head)
    rep_ref  : (H*M, M)   bf16  row-replication operator (row r copies token r % M)
    o_ref    : (1, TN, C) f32   lane-dense output tile (heads merged on lanes)
    kvbd_ref : (2, H*M, C) bf16 VMEM scratch: [0]=block-diag K, [1]=block-diag V
    """
    H = num_heads

    # ---- per-batch work, hoisted out of the row-tile axis ------------------
    @pl.when(pl.program_id(1) == 0)
    def _build_kv():
        xkv = xkv_ref[0].astype(jnp.float32)                     # (M, C), LN in f32
        if use_ln:
            mean = jnp.mean(xkv, axis=-1, keepdims=True)
            xc = xkv - mean
            var = jnp.mean(xc * xc, axis=-1, keepdims=True)
            xkv = xc * lax.rsqrt(var + 1e-5) * g_ref[...] + b_ref[...]
        xkv_b = xkv.astype(jnp.bfloat16)
        k = jnp.dot(xkv_b, wk_ref[...],
                    preferred_element_type=jnp.float32).astype(jnp.bfloat16)  # (M, C)
        v = jnp.dot(xkv_b, wv_ref[...],
                    preferred_element_type=jnp.float32).astype(jnp.bfloat16)  # (M, C)
        # Replicate per head (MXU op with an exact 0/1 operator) and mask to a
        # block-diagonal layout: row h*M+m keeps only head h's hd columns.
        mask = mask_ref[...].astype(jnp.float32)                              # (H*M, C)
        rep = rep_ref[...]                                                    # (H*M, M)
        kvbd_ref[0] = (jnp.dot(rep, k, preferred_element_type=jnp.float32)
                       * mask).astype(jnp.bfloat16)
        kvbd_ref[1] = (jnp.dot(rep, v, preferred_element_type=jnp.float32)
                       * mask).astype(jnp.bfloat16)

    # ---- per row tile -------------------------------------------------------
    x = x_ref[0]                                                  # (TN, C) bf16
    q = jnp.dot(x, wq_ref[...], preferred_element_type=jnp.float32)  # scale folded in
    k_bd = kvbd_ref[0]                                            # (H*M, C) bf16
    v_bd = kvbd_ref[1]

    # One MXU op for all heads: S[:, h*M:(h+1)*M] == q_h @ k_h^T exactly
    # (off-head lanes of the block-diagonal K are zero).
    s = lax.dot_general(q.astype(jnp.bfloat16), k_bd,
                        (((1,), (1,)), ((), ())),
                        preferred_element_type=jnp.float32)       # (TN, H*M) f32

    # Softmax, elementwise path kept in f32 (v5e has no bf16 VPU).  Subtracting
    # the shared per-row max (over all heads) is mathematically identical to the
    # per-head max and avoids a segmented lane reduction.
    s = s - jnp.max(s, axis=-1, keepdims=True)
    p = jnp.exp(s).astype(jnp.bfloat16)                           # probs for the MXU

    pv = jnp.dot(p, v_bd, preferred_element_type=jnp.float32)         # (TN, C) head-merged
    l = jnp.dot(p, mask_ref[...], preferred_element_type=jnp.float32)  # per-head denom,
    #                                                            broadcast to each head's hd lanes
    out = pv * pl.reciprocal(l, approx=True)

    o_ref[0] = jnp.dot(out.astype(jnp.bfloat16), wp_ref[...],
                       preferred_element_type=jnp.float32).astype(o_ref.dtype)


def _pick_row_tile(n, c, m, h, vmem_budget_bytes=24 << 20):
    """Largest row tile that divides n while keeping the per-step working set
    within a conservative per-generation VMEM budget (v7x is the binding case)."""
    # Per-row bytes: x bf16 double-buffered (4C) + out f32 double-buffered (8C)
    # + f32 intermediates q/pv/l/out (~16C) + S and P rows (8*H*M).
    per_row = c * (2 * 2 + 2 * 4 + 4 * 4) + (h * m) * 2 * 4
    cap = max(16, vmem_budget_bytes // max(per_row, 1))
    if n <= cap:
        return n
    cap = int(min(cap, 2048))
    cap -= cap % 16                       # keep bf16 sublane packing friendly
    for t in range(cap, 15, -16):
        if n % t == 0:
            return t
    # TODO(synk): support a ragged final row tile (needs masking of the padded
    # query rows); for awkward N we currently fall back to one full-N block.
    return n


def pallas_fused_attention(x_layer, x_kv, ln_g, ln_b, wq_scaled, wk, wv, wproj,
                           head_mask, rep_mat, *, num_heads, use_ln,
                           single_buffer_consts=True):
    """x_layer: (B, N, C); x_kv: (B, M, C) -> (B, N, C)."""
    B, N, C = x_layer.shape
    M = x_kv.shape[1]
    HM = num_heads * M
    tn = _pick_row_tile(N, C, M, num_heads)
    nt = N // tn

    def const_spec(shape):
        """Grid-invariant operand: constant index_map, single-buffered."""
        index_map = lambda b, t, _s=shape: (0,) * len(_s)
        if single_buffer_consts:
            return pl.BlockSpec(shape, index_map, pipeline_mode=pl.Buffered(1))
        return pl.BlockSpec(shape, index_map)

    kern = functools.partial(_fused_attn_kernel, num_heads=num_heads, use_ln=use_ln)
    return pl.pallas_call(
        kern,
        out_shape=jax.ShapeDtypeStruct((B, N, C), x_layer.dtype),
        grid=(B, nt),
        in_specs=[
            pl.BlockSpec((1, tn, C), lambda b, t: (b, t, 0)),   # x (query tile)
            pl.BlockSpec((1, M, C), lambda b, t: (b, 0, 0)),    # kv tokens (per batch)
            const_spec((1, C)),                                 # ln gamma
            const_spec((1, C)),                                 # ln beta
            const_spec((C, C)),                                 # wq (scale folded)
            const_spec((C, C)),                                 # wk
            const_spec((C, C)),                                 # wv
            const_spec((C, C)),                                 # wproj
            const_spec((HM, C)),                                # block-diag head mask
            const_spec((HM, M)),                                # replication operator
        ],
        out_specs=pl.BlockSpec((1, tn, C), lambda b, t: (b, t, 0)),
        scratch_shapes=[pltpu.VMEM((2, HM, C), jnp.bfloat16)],  # block-diag K/V, per batch
        compiler_params=pltpu.CompilerParams(
            dimension_semantics=("parallel", "arbitrary"),
            vmem_limit_bytes=48 * 1024 * 1024,
        ),
    )(
        x_layer.astype(jnp.bfloat16), x_kv.astype(jnp.bfloat16),
        ln_g, ln_b,
        wq_scaled.astype(jnp.bfloat16), wk.astype(jnp.bfloat16),
        wv.astype(jnp.bfloat16), wproj.astype(jnp.bfloat16),
        head_mask.astype(jnp.bfloat16), rep_mat.astype(jnp.bfloat16),
    )


# ---------------------------------------------------------------------------
# Plain-JAX glue (tiny depthwise convs / pooling on the down-sampled KV path)
# ---------------------------------------------------------------------------
def depthwise_conv(x, w, b, stride, padding):
    """x: (B, C, H, W); w: (C, 1, kh, kw); b: (C,) or None."""
    C = x.shape[1]
    out = lax.conv_general_dilated(
        x, w, window_strides=stride, padding=padding,
        dimension_numbers=("NCHW", "OIHW", "NCHW"),
        feature_group_count=C,
    )
    if b is not None:
        out = out + b[None, :, None, None]
    return out


def avg_pool(x, r):
    B, C, H, W = x.shape
    return x.reshape(B, C, H // r, r, W // r, r).mean(axis=(3, 5))


def _build_kv_tokens(params, x, H, W, down_ratio):
    """Down-sampled KV tokens (B, M, C); returns (tokens, use_layernorm)."""
    B, C = x.shape[0], x.shape[1]
    if down_ratio == 1:
        return x.reshape(B, C, H * W).transpose(0, 2, 1), False
    R = down_ratio
    x1 = depthwise_conv(x, params["conv1a_w"], params["conv1a_b"], (1, R), "VALID")
    x1 = depthwise_conv(x1, params["conv1b_w"], params["conv1b_b"], (R, 1), "VALID")
    x2 = depthwise_conv(x, params["conv2_w"], params["conv2_b"], (R, R), "VALID")
    x3 = avg_pool(x, R)  # adaptive_avg_pool2d with divisible sizes == uniform pool
    x3 = depthwise_conv(x3, params["dw_w"], params["dw_b"], (1, 1), [(1, 1), (1, 1)])
    x_kv = jnp.concatenate(
        [x1.reshape(B, C, -1), x2.reshape(B, C, -1), x3.reshape(B, C, -1)], axis=2
    ).transpose(0, 2, 1)                                            # (B, M, C)
    return x_kv, True


# ---------------------------------------------------------------------------
# Parameter construction (deterministic, mirrors Attention.__init__ shapes)
# ---------------------------------------------------------------------------
def init_params(key, embed_dim, down_ratio):
    C, R = embed_dim, down_ratio
    ks = jax.random.split(key, 8)
    p = {
        # nn.Linear weights stored transposed: (in, out); trunc_normal std=0.02
        "wq": 0.02 * jax.random.normal(ks[0], (C, C), jnp.float32),
        "wkv": 0.02 * jax.random.normal(ks[1], (C, 2 * C), jnp.float32),
        "wproj": 0.02 * jax.random.normal(ks[2], (C, C), jnp.float32),
        # LayerNorm
        "ln_g": jnp.ones((1, C), jnp.float32),
        "ln_b": jnp.zeros((1, C), jnp.float32),
    }
    if down_ratio > 1:
        # depthwise conv weights: (C, 1, kh, kw), normal(0, sqrt(2/fan_out)), bias 0
        def conv_w(k, kh, kw):
            fan_out = kh * kw  # * C // groups(=C)
            return math.sqrt(2.0 / fan_out) * jax.random.normal(
                k, (C, 1, kh, kw), jnp.float32
            )

        p.update({
            "conv1a_w": conv_w(ks[3], 1, R), "conv1a_b": jnp.zeros((C,), jnp.float32),
            "conv1b_w": conv_w(ks[4], R, 1), "conv1b_b": jnp.zeros((C,), jnp.float32),
            "conv2_w": conv_w(ks[5], R, R), "conv2_b": jnp.zeros((C,), jnp.float32),
            "dw_w": conv_w(ks[6], 3, 3), "dw_b": jnp.zeros((C,), jnp.float32),
        })
    return p


# ---------------------------------------------------------------------------
# Full forward (matches Attention.forward semantics; dropout probs are 0)
# ---------------------------------------------------------------------------
def attention_forward(params, x, H, W, num_heads, down_ratio,
                      single_buffer_consts=True):
    B, C = x.shape[0], x.shape[1]
    N = H * W
    hd = C // num_heads
    scale = hd ** -0.5

    x_layer = x.reshape(B, C, N).transpose(0, 2, 1)                 # (B, N, C)
    x_kv, use_ln = _build_kv_tokens(params, x, H, W, down_ratio)    # (B, M, C)
    M = x_kv.shape[1]
    HM = num_heads * M

    # Constant head-structure operators for the block-diagonal formulation.
    row_head = jnp.arange(HM) // M
    head_mask = (row_head[:, None] == (jnp.arange(C) // hd)[None, :]).astype(jnp.float32)
    rep_mat = (jnp.arange(HM)[:, None] % M == jnp.arange(M)[None, :]).astype(jnp.float32)

    # Fold the softmax scale into the q weight (removes the per-score multiply).
    wq_scaled = params["wq"] * scale
    wk = params["wkv"][:, :C]
    wv = params["wkv"][:, C:]

    # Single fused kernel: q-proj + (LN+)kv-proj + attention + out-proj.
    return pallas_fused_attention(
        x_layer, x_kv, params["ln_g"], params["ln_b"],
        wq_scaled, wk, wv, params["wproj"], head_mask, rep_mat,
        num_heads=num_heads, use_ln=use_ln,
        single_buffer_consts=single_buffer_consts,
    )                                                               # (B, N, C)


# ---------------------------------------------------------------------------
# Pure-JAX f32 reference (mirrors the PyTorch module) for a sanity check
# ---------------------------------------------------------------------------
def attention_reference(params, x, H, W, num_heads, down_ratio):
    B, C = x.shape[0], x.shape[1]
    N = H * W
    hd = C // num_heads
    scale = hd ** -0.5
    x_layer = x.reshape(B, C, N).transpose(0, 2, 1)
    x_kv, use_ln = _build_kv_tokens(params, x, H, W, down_ratio)
    if use_ln:
        mu = jnp.mean(x_kv, axis=-1, keepdims=True)
        var = jnp.mean((x_kv - mu) ** 2, axis=-1, keepdims=True)
        x_kv = (x_kv - mu) * lax.rsqrt(var + 1e-5) * params["ln_g"] + params["ln_b"]
    q = (x_layer @ params["wq"]).reshape(B, N, num_heads, hd).transpose(0, 2, 1, 3)
    kv = (x_kv @ params["wkv"]).reshape(B, -1, 2, num_heads, hd).transpose(2, 0, 3, 1, 4)
    k, v = kv[0], kv[1]
    attn = jnp.einsum("bhqd,bhkd->bhqk", q, k) * scale
    attn = jax.nn.softmax(attn, axis=-1)
    out = jnp.einsum("bhqk,bhkd->bhqd", attn, v).transpose(0, 2, 1, 3).reshape(B, N, C)
    return out @ params["wproj"]


# ---------------------------------------------------------------------------
if __name__ == "__main__":
    def run_case(key, B, C, H, W, num_heads, down_ratio):
        assert H % down_ratio == 0 and W % down_ratio == 0 and C % num_heads == 0
        kx, kp = jax.random.split(key)
        x = jax.random.normal(kx, (B, C, H, W), jnp.float32)
        params = init_params(kp, C, down_ratio)
        fwd = functools.partial(attention_forward, H=H, W=W,
                                num_heads=num_heads, down_ratio=down_ratio)
        try:
            out = jax.jit(functools.partial(fwd, single_buffer_consts=True))(params, x)
            out = jax.block_until_ready(out)
        except Exception:
            # Fallback for JAX builds that reject pipeline_mode=pl.Buffered(1).
            out = jax.jit(functools.partial(fwd, single_buffer_consts=False))(params, x)
            out = jax.block_until_ready(out)
        ref = jax.jit(functools.partial(attention_reference, H=H, W=W,
                                        num_heads=num_heads,
                                        down_ratio=down_ratio))(params, x)
        ref = jax.block_until_ready(ref)
        assert out.shape == (B, H * W, C)
        assert bool(jnp.all(jnp.isfinite(out)))
        err = float(jnp.max(jnp.abs(out.astype(jnp.float32) - ref)))
        ref_scale = float(jnp.max(jnp.abs(ref)))
        # Loose tolerance: bf16 MXU operands + approximate softmax reciprocal.
        assert err <= 0.05 * max(ref_scale, 1e-3), (err, ref_scale)

    key = jax.random.PRNGKey(0)
    k1, k2 = jax.random.split(key)
    # Spatial-reduction path (down_ratio > 1: convs + LayerNorm on KV tokens).
    run_case(k1, B=2, C=32, H=16, W=16, num_heads=4, down_ratio=8)
    # Plain self-attention path (down_ratio == 1).
    run_case(k2, B=2, C=32, H=8, W=8, num_heads=4, down_ratio=1)
    print("KERNEL_OK")
</pallas_src>

<mosaic_0001>
module attributes {stable_mosaic.version = 11 : i64} {
  func.func @_fused_attn_kernel(%arg0: i32, %arg1: i32, %arg2: memref<1x256x32xbf16, #tpu.memory_space<vmem>>, %arg3: memref<1x12x32xbf16, #tpu.memory_space<vmem>>, %arg4: memref<1x32xf32, #tpu.memory_space<vmem>>, %arg5: memref<1x32xf32, #tpu.memory_space<vmem>>, %arg6: memref<32x32xbf16, #tpu.memory_space<vmem>>, %arg7: memref<32x32xbf16, #tpu.memory_space<vmem>>, %arg8: memref<32x32xbf16, #tpu.memory_space<vmem>>, %arg9: memref<32x32xbf16, #tpu.memory_space<vmem>>, %arg10: memref<48x32xbf16, #tpu.memory_space<vmem>>, %arg11: memref<48x12xbf16, #tpu.memory_space<vmem>>, %arg12: memref<1x256x32xf32, #tpu.memory_space<vmem>>, %arg13: memref<2x48x32xbf16, #tpu.memory_space<vmem>>) attributes {dimension_semantics = [#tpu.dimension_semantics<parallel>, #tpu.dimension_semantics<arbitrary>], iteration_bounds = array<i64: 2, 1>, scalar_prefetch = 0 : i64, scratch_operands = 1 : i64, tpu.core_type = #tpu.core_type<tc>, window_params = [{transform_indices = @transform_0, window_bounds = array<i64: 1, 256, 32>}, {transform_indices = @transform_1, window_bounds = array<i64: 1, 12, 32>}, {pipeline_mode = #tpu.pipeline_mode<synchronous>, transform_indices = @transform_2, window_bounds = array<i64: 1, 32>}, {pipeline_mode = #tpu.pipeline_mode<synchronous>, transform_indices = @transform_3, window_bounds = array<i64: 1, 32>}, {pipeline_mode = #tpu.pipeline_mode<synchronous>, transform_indices = @transform_4, window_bounds = array<i64: 32, 32>}, {pipeline_mode = #tpu.pipeline_mode<synchronous>, transform_indices = @transform_5, window_bounds = array<i64: 32, 32>}, {pipeline_mode = #tpu.pipeline_mode<synchronous>, transform_indices = @transform_6, window_bounds = array<i64: 32, 32>}, {pipeline_mode = #tpu.pipeline_mode<synchronous>, transform_indices = @transform_7, window_bounds = array<i64: 32, 32>}, {pipeline_mode = #tpu.pipeline_mode<synchronous>, transform_indices = @transform_8, window_bounds = array<i64: 48, 32>}, {pipeline_mode = #tpu.pipeline_mode<synchronous>, transform_indices = @transform_9, window_bounds = array<i64: 48, 12>}, {transform_indices = @transform_10, window_bounds = array<i64: 1, 256, 32>}]} {
    %c0_i32 = arith.constant 0 : i32
    %0 = arith.cmpi eq, %arg1, %c0_i32 : i32
    %1 = arith.extui %0 : i1 to i32
    %c0_i32_0 = arith.constant 0 : i32
    %2 = arith.cmpi ne, %1, %c0_i32_0 : i32
    scf.if %2 {
      %c0_22 = arith.constant 0 : index
      %c0_23 = arith.constant 0 : index
      %c0_24 = arith.constant 0 : index
      %30 = vector.load %arg3[%c0_22, %c0_23, %c0_24] : memref<1x12x32xbf16, #tpu.memory_space<vmem>>, vector<1x12x32xbf16>
      %31 = vector.shape_cast %30 : vector<1x12x32xbf16> to vector<12x32xbf16>
      %32 = arith.extf %31 : vector<12x32xbf16> to vector<12x32xf32>
      %cst_25 = arith.constant dense<0.000000e+00> : vector<12xf32>
      %33 = vector.multi_reduction <add>, %32, %cst_25 [1] : vector<12x32xf32> to vector<12xf32>
      %34 = vector.shape_cast %33 : vector<12xf32> to vector<12x1xf32>
      %cst_26 = arith.constant 3.200000e+01 : f32
      %35 = vector.broadcast %cst_26 : f32 to vector<12x1xf32>
      %36 = arith.divf %34, %35 : vector<12x1xf32>
      %37 = vector.broadcast %36 : vector<12x1xf32> to vector<12x32xf32>
      %38 = arith.subf %32, %37 : vector<12x32xf32>
      %39 = arith.mulf %38, %38 : vector<12x32xf32>
      %cst_27 = arith.constant dense<0.000000e+00> : vector<12xf32>
      %40 = vector.multi_reduction <add>, %39, %cst_27 [1] : vector<12x32xf32> to vector<12xf32>
      %41 = vector.shape_cast %40 : vector<12xf32> to vector<12x1xf32>
      %cst_28 = arith.constant 3.200000e+01 : f32
      %42 = vector.broadcast %cst_28 : f32 to vector<12x1xf32>
      %43 = arith.divf %41, %42 : vector<12x1xf32>
      %cst_29 = arith.constant 9.99999974E-6 : f32
      %44 = vector.broadcast %cst_29 : f32 to vector<12x1xf32>
      %45 = arith.addf %43, %44 : vector<12x1xf32>
      %46 = math.rsqrt %45 : vector<12x1xf32>
      %47 = vector.broadcast %46 : vector<12x1xf32> to vector<12x32xf32>
      %48 = arith.mulf %38, %47 : vector<12x32xf32>
      %c0_30 = arith.constant 0 : index
      %c0_31 = arith.constant 0 : index
      %49 = vector.load %arg4[%c0_30, %c0_31] : memref<1x32xf32, #tpu.memory_space<vmem>>, vector<1x32xf32>
      %50 = vector.broadcast %49 : vector<1x32xf32> to vector<12x32xf32>
      %51 = arith.mulf %48, %50 : vector<12x32xf32>
      %c0_32 = arith.constant 0 : index
      %c0_33 = arith.constant 0 : index
      %52 = vector.load %arg5[%c0_32, %c0_33] : memref<1x32xf32, #tpu.memory_space<vmem>>, vector<1x32xf32>
      %53 = vector.broadcast %52 : vector<1x32xf32> to vector<12x32xf32>
      %54 = arith.addf %51, %53 : vector<12x32xf32>
      %55 = arith.truncf %54 : vector<12x32xf32> to vector<12x32xbf16>
      %c0_34 = arith.constant 0 : index
      %c0_35 = arith.constant 0 : index
      %56 = vector.load %arg7[%c0_34, %c0_35] : memref<32x32xbf16, #tpu.memory_space<vmem>>, vector<32x32xbf16>
      %cst_36 = arith.constant dense<0.000000e+00> : vector<12x32xf32>
      %57 = tpu.matmul %55, %56, %cst_36 {dimension_numbers = #tpu.dot_dimension_numbers<[1], [0], [0], [1], [0, 0, 1, 1], [], []>} : vector<12x32xbf16>, vector<32x32xbf16>, vector<12x32xf32> -> vector<12x32xf32>
      %58 = arith.truncf %57 : vector<12x32xf32> to vector<12x32xbf16>
      %c0_37 = arith.constant 0 : index
      %c0_38 = arith.constant 0 : index
      %59 = vector.load %arg8[%c0_37, %c0_38] : memref<32x32xbf16, #tpu.memory_space<vmem>>, vector<32x32xbf16>
      %cst_39 = arith.constant dense<0.000000e+00> : vector<12x32xf32>
      %60 = tpu.matmul %55, %59, %cst_39 {dimension_numbers = #tpu.dot_dimension_numbers<[1], [0], [0], [1], [0, 0, 1, 1], [], []>} : vector<12x32xbf16>, vector<32x32xbf16>, vector<12x32xf32> -> vector<12x32xf32>
      %61 = arith.truncf %60 : vector<12x32xf32> to vector<12x32xbf16>
      %c0_40 = arith.constant 0 : index
      %c0_41 = arith.constant 0 : index
      %62 = vector.load %arg10[%c0_40, %c0_41] : memref<48x32xbf16, #tpu.memory_space<vmem>>, vector<48x32xbf16>
      %63 = arith.extf %62 : vector<48x32xbf16> to vector<48x32xf32>
      %c0_42 = arith.constant 0 : index
      %c0_43 = arith.constant 0 : index
      %64 = vector.load %arg11[%c0_42, %c0_43] : memref<48x12xbf16, #tpu.memory_space<vmem>>, vector<48x12xbf16>
      %cst_44 = arith.constant dense<0.000000e+00> : vector<48x32xf32>
      %65 = tpu.matmul %64, %58, %cst_44 {dimension_numbers = #tpu.dot_dimension_numbers<[1], [0], [0], [1], [0, 0, 1, 1], [], []>} : vector<48x12xbf16>, vector<12x32xbf16>, vector<48x32xf32> -> vector<48x32xf32>
      %66 = arith.mulf %65, %63 : vector<48x32xf32>
      %67 = arith.truncf %66 : vector<48x32xf32> to vector<48x32xbf16>
      %c0_45 = arith.constant 0 : index
      %c0_46 = arith.constant 0 : index
      %c0_47 = arith.constant 0 : index
      %68 = vector.load %arg13[%c0_45, %c0_46, %c0_47] : memref<2x48x32xbf16, #tpu.memory_space<vmem>>, vector<1x48x32xbf16>
      %69 = vector.shape_cast %68 : vector<1x48x32xbf16> to vector<48x32xbf16>
      %70 = vector.shape_cast %67 : vector<48x32xbf16> to vector<1x48x32xbf16>
      tpu.vector_store %arg13[%c0_45, %c0_46, %c0_47], %70 {strides = array<i32>} : memref<2x48x32xbf16, #tpu.memory_space<vmem>>, vector<1x48x32xbf16>,
      %cst_48 = arith.constant dense<0.000000e+00> : vector<48x32xf32>
      %71 = tpu.matmul %64, %61, %cst_48 {dimension_numbers = #tpu.dot_dimension_numbers<[1], [0], [0], [1], [0, 0, 1, 1], [], []>} : vector<48x12xbf16>, vector<12x32xbf16>, vector<48x32xf32> -> vector<48x32xf32>
      %72 = arith.mulf %71, %63 : vector<48x32xf32>
      %73 = arith.truncf %72 : vector<48x32xf32> to vector<48x32xbf16>
      %c1_49 = arith.constant 1 : index
      %c0_50 = arith.constant 0 : index
      %c0_51 = arith.constant 0 : index
      %74 = vector.load %arg13[%c1_49, %c0_50, %c0_51] : memref<2x48x32xbf16, #tpu.memory_space<vmem>>, vector<1x48x32xbf16>
      %75 = vector.shape_cast %74 : vector<1x48x32xbf16> to vector<48x32xbf16>
      %76 = vector.shape_cast %73 : vector<48x32xbf16> to vector<1x48x32xbf16>
      tpu.vector_store %arg13[%c1_49, %c0_50, %c0_51], %76 {strides = array<i32>} : memref<2x48x32xbf16, #tpu.memory_space<vmem>>, vector<1x48x32xbf16>,
    } else {
    }
    %c0 = arith.constant 0 : index
    %c0_1 = arith.constant 0 : index
    %c0_2 = arith.constant 0 : index
    %3 = vector.load %arg2[%c0, %c0_1, %c0_2] : memref<1x256x32xbf16, #tpu.memory_space<vmem>>, vector<1x256x32xbf16>
    %4 = vector.shape_cast %3 : vector<1x256x32xbf16> to vector<256x32xbf16>
    %c0_3 = arith.constant 0 : index
    %c0_4 = arith.constant 0 : index
    %5 = vector.load %arg6[%c0_3, %c0_4] : memref<32x32xbf16, #tpu.memory_space<vmem>>, vector<32x32xbf16>
    %cst = arith.constant dense<0.000000e+00> : vector<256x32xf32>
    %6 = tpu.matmul %4, %5, %cst {dimension_numbers = #tpu.dot_dimension_numbers<[1], [0], [0], [1], [0, 0, 1, 1], [], []>} : vector<256x32xbf16>, vector<32x32xbf16>, vector<256x32xf32> -> vector<256x32xf32>
    %c0_5 = arith.constant 0 : index
    %c0_6 = arith.constant 0 : index
    %c0_7 = arith.constant 0 : index
    %7 = vector.load %arg13[%c0_5, %c0_6, %c0_7] : memref<2x48x32xbf16, #tpu.memory_space<vmem>>, vector<1x48x32xbf16>
    %8 = vector.shape_cast %7 : vector<1x48x32xbf16> to vector<48x32xbf16>
    %c1 = arith.constant 1 : index
    %c0_8 = arith.constant 0 : index
    %c0_9 = arith.constant 0 : index
    %9 = vector.load %arg13[%c1, %c0_8, %c0_9] : memref<2x48x32xbf16, #tpu.memory_space<vmem>>, vector<1x48x32xbf16>
    %10 = vector.shape_cast %9 : vector<1x48x32xbf16> to vector<48x32xbf16>
    %11 = arith.truncf %6 : vector<256x32xf32> to vector<256x32xbf16>
    %cst_10 = arith.constant dense<0.000000e+00> : vector<256x48xf32>
    %12 = tpu.matmul %11, %8, %cst_10 {dimension_numbers = #tpu.dot_dimension_numbers<[1], [1], [0], [0], [0, 0, 1, 0], [], []>} : vector<256x32xbf16>, vector<48x32xbf16>, vector<256x48xf32> -> vector<256x48xf32>
    %cst_11 = arith.constant dense<0xFF800000> : vector<256xf32>
    %13 = vector.multi_reduction <maximumf>, %12, %cst_11 [1] : vector<256x48xf32> to vector<256xf32>
    %14 = vector.shape_cast %13 : vector<256xf32> to vector<256x1xf32>
    %15 = vector.broadcast %14 : vector<256x1xf32> to vector<256x48xf32>
    %16 = arith.subf %12, %15 : vector<256x48xf32>
    %17 = math.exp %16 : vector<256x48xf32>
    %18 = arith.truncf %17 : vector<256x48xf32> to vector<256x48xbf16>
    %cst_12 = arith.constant dense<0.000000e+00> : vector<256x32xf32>
    %19 = tpu.matmul %18, %10, %cst_12 {dimension_numbers = #tpu.dot_dimension_numbers<[1], [0], [0], [1], [0, 0, 1, 1], [], []>} : vector<256x48xbf16>, vector<48x32xbf16>, vector<256x32xf32> -> vector<256x32xf32>
    %c0_13 = arith.constant 0 : index
    %c0_14 = arith.constant 0 : index
    %20 = vector.load %arg10[%c0_13, %c0_14] : memref<48x32xbf16, #tpu.memory_space<vmem>>, vector<48x32xbf16>
    %cst_15 = arith.constant dense<0.000000e+00> : vector<256x32xf32>
    %21 = tpu.matmul %18, %20, %cst_15 {dimension_numbers = #tpu.dot_dimension_numbers<[1], [0], [0], [1], [0, 0, 1, 1], [], []>} : vector<256x48xbf16>, vector<48x32xbf16>, vector<256x32xf32> -> vector<256x32xf32>
    %22 = tpu.reciprocal %21 {approx = true} : vector<256x32xf32> -> vector<256x32xf32>
    %23 = arith.mulf %19, %22 : vector<256x32xf32>
    %24 = arith.truncf %23 : vector<256x32xf32> to vector<256x32xbf16>
    %c0_16 = arith.constant 0 : index
    %c0_17 = arith.constant 0 : index
    %25 = vector.load %arg9[%c0_16, %c0_17] : memref<32x32xbf16, #tpu.memory_space<vmem>>, vector<32x32xbf16>
    %cst_18 = arith.constant dense<0.000000e+00> : vector<256x32xf32>
    %26 = tpu.matmul %24, %25, %cst_18 {dimension_numbers = #tpu.dot_dimension_numbers<[1], [0], [0], [1], [0, 0, 1, 1], [], []>} : vector<256x32xbf16>, vector<32x32xbf16>, vector<256x32xf32> -> vector<256x32xf32>
    %c0_19 = arith.constant 0 : index
    %c0_20 = arith.constant 0 : index
    %c0_21 = arith.constant 0 : index
    %27 = vector.load %arg12[%c0_19, %c0_20, %c0_21] : memref<1x256x32xf32, #tpu.memory_space<vmem>>, vector<1x256x32xf32>
    %28 = vector.shape_cast %27 : vector<1x256x32xf32> to vector<256x32xf32>
    %29 = vector.shape_cast %26 : vector<256x32xf32> to vector<1x256x32xf32>
    tpu.vector_store %arg12[%c0_19, %c0_20, %c0_21], %29 {strides = array<i32>} : memref<1x256x32xf32, #tpu.memory_space<vmem>>, vector<1x256x32xf32>,
    return
  }
  func.func @transform_0(%arg0: i32, %arg1: i32) -> (i32, i32, i32) {
    %c0_i32 = arith.constant 0 : i32
    %c0_i32_0 = arith.constant 0 : i32
    return %arg0, %arg1, %c0_i32 : i32, i32, i32
  }
  func.func @transform_1(%arg0: i32, %arg1: i32) -> (i32, i32, i32) {
    %c0_i32 = arith.constant 0 : i32
    %c0_i32_0 = arith.constant 0 : i32
    %c0_i32_1 = arith.constant 0 : i32
    return %arg0, %c0_i32, %c0_i32_0 : i32, i32, i32
  }
  func.func @transform_2(%arg0: i32, %arg1: i32) -> (i32, i32) {
    %c0_i32 = arith.constant 0 : i32
    %c0_i32_0 = arith.constant 0 : i32
    %c0_i32_1 = arith.constant 0 : i32
    return %c0_i32, %c0_i32_0 : i32, i32
  }
  func.func @transform_3(%arg0: i32, %arg1: i32) -> (i32, i32) {
    %c0_i32 = arith.constant 0 : i32
    %c0_i32_0 = arith.constant 0 : i32
    %c0_i32_1 = arith.constant 0 : i32
    return %c0_i32, %c0_i32_0 : i32, i32
  }
  func.func @transform_4(%arg0: i32, %arg1: i32) -> (i32, i32) {
    %c0_i32 = arith.constant 0 : i32
    %c0_i32_0 = arith.constant 0 : i32
    %c0_i32_1 = arith.constant 0 : i32
    return %c0_i32, %c0_i32_0 : i32, i32
  }
  func.func @transform_5(%arg0: i32, %arg1: i32) -> (i32, i32) {
    %c0_i32 = arith.constant 0 : i32
    %c0_i32_0 = arith.constant 0 : i32
    %c0_i32_1 = arith.constant 0 : i32
    return %c0_i32, %c0_i32_0 : i32, i32
  }
  func.func @transform_6(%arg0: i32, %arg1: i32) -> (i32, i32) {
    %c0_i32 = arith.constant 0 : i32
    %c0_i32_0 = arith.constant 0 : i32
    %c0_i32_1 = arith.constant 0 : i32
    return %c0_i32, %c0_i32_0 : i32, i32
  }
  func.func @transform_7(%arg0: i32, %arg1: i32) -> (i32, i32) {
    %c0_i32 = arith.constant 0 : i32
    %c0_i32_0 = arith.constant 0 : i32
    %c0_i32_1 = arith.constant 0 : i32
    return %c0_i32, %c0_i32_0 : i32, i32
  }
  func.func @transform_8(%arg0: i32, %arg1: i32) -> (i32, i32) {
    %c0_i32 = arith.constant 0 : i32
    %c0_i32_0 = arith.constant 0 : i32
    %c0_i32_1 = arith.constant 0 : i32
    return %c0_i32, %c0_i32_0 : i32, i32
  }
  func.func @transform_9(%arg0: i32, %arg1: i32) -> (i32, i32) {
    %c0_i32 = arith.constant 0 : i32
    %c0_i32_0 = arith.constant 0 : i32
    %c0_i32_1 = arith.constant 0 : i32
    return %c0_i32, %c0_i32_0 : i32, i32
  }
  func.func @transform_10(%arg0: i32, %arg1: i32) -> (i32, i32, i32) {
    %c0_i32 = arith.constant 0 : i32
    %c0_i32_0 = arith.constant 0 : i32
    return %arg0, %arg1, %c0_i32 : i32, i32, i32
  }
}

module attributes {stable_mosaic.version = 11 : i64} {
  func.func @_fused_attn_kernel(%arg0: i32, %arg1: i32, %arg2: memref<1x256x32xbf16, #tpu.memory_space<vmem>>, %arg3: memref<1x12x32xbf16, #tpu.memory_space<vmem>>, %arg4: memref<1x32xf32, #tpu.memory_space<vmem>>, %arg5: memref<1x32xf32, #tpu.memory_space<vmem>>, %arg6: memref<32x32xbf16, #tpu.memory_space<vmem>>, %arg7: memref<32x32xbf16, #tpu.memory_space<vmem>>, %arg8: memref<32x32xbf16, #tpu.memory_space<vmem>>, %arg9: memref<32x32xbf16, #tpu.memory_space<vmem>>, %arg10: memref<48x32xbf16, #tpu.memory_space<vmem>>, %arg11: memref<48x12xbf16, #tpu.memory_space<vmem>>, %arg12: memref<1x256x32xf32, #tpu.memory_space<vmem>>, %arg13: memref<2x48x32xbf16, #tpu.memory_space<vmem>>) attributes {dimension_semantics = [#tpu.dimension_semantics<parallel>, #tpu.dimension_semantics<arbitrary>], iteration_bounds = array<i64: 2, 1>, scalar_prefetch = 0 : i64, scratch_operands = 1 : i64, tpu.core_type = #tpu.core_type<tc>, window_params = [{transform_indices = @transform_0, window_bounds = array<i64: 1, 256, 32>}, {transform_indices = @transform_1, window_bounds = array<i64: 1, 12, 32>}, {pipeline_mode = #tpu.pipeline_mode<synchronous>, transform_indices = @transform_2, window_bounds = array<i64: 1, 32>}, {pipeline_mode = #tpu.pipeline_mode<synchronous>, transform_indices = @transform_3, window_bounds = array<i64: 1, 32>}, {pipeline_mode = #tpu.pipeline_mode<synchronous>, transform_indices = @transform_4, window_bounds = array<i64: 32, 32>}, {pipeline_mode = #tpu.pipeline_mode<synchronous>, transform_indices = @transform_5, window_bounds = array<i64: 32, 32>}, {pipeline_mode = #tpu.pipeline_mode<synchronous>, transform_indices = @transform_6, window_bounds = array<i64: 32, 32>}, {pipeline_mode = #tpu.pipeline_mode<synchronous>, transform_indices = @transform_7, window_bounds = array<i64: 32, 32>}, {pipeline_mode = #tpu.pipeline_mode<synchronous>, transform_indices = @transform_8, window_bounds = array<i64: 48, 32>}, {pipeline_mode = #tpu.pipeline_mode<synchronous>, transform_indices = @transform_9, window_bounds = array<i64: 48, 12>}, {transform_indices = @transform_10, window_bounds = array<i64: 1, 256, 32>}]} {
    %c0_i32 = arith.constant 0 : i32
    %0 = arith.cmpi eq, %arg1, %c0_i32 : i32
    %1 = arith.extui %0 : i1 to i32
    %c0_i32_0 = arith.constant 0 : i32
    %2 = arith.cmpi ne, %1, %c0_i32_0 : i32
    scf.if %2 {
      %c0_22 = arith.constant 0 : index
      %c0_23 = arith.constant 0 : index
      %c0_24 = arith.constant 0 : index
      %30 = vector.load %arg3[%c0_22, %c0_23, %c0_24] : memref<1x12x32xbf16, #tpu.memory_space<vmem>>, vector<1x12x32xbf16>
      %31 = vector.shape_cast %30 : vector<1x12x32xbf16> to vector<12x32xbf16>
      %32 = arith.extf %31 : vector<12x32xbf16> to vector<12x32xf32>
      %cst_25 = arith.constant dense<0.000000e+00> : vector<12xf32>
      %33 = vector.multi_reduction <add>, %32, %cst_25 [1] : vector<12x32xf32> to vector<12xf32>
      %34 = vector.shape_cast %33 : vector<12xf32> to vector<12x1xf32>
      %cst_26 = arith.constant 3.200000e+01 : f32
      %35 = vector.broadcast %cst_26 : f32 to vector<12x1xf32>
      %36 = arith.divf %34, %35 : vector<12x1xf32>
      %37 = vector.broadcast %36 : vector<12x1xf32> to vector<12x32xf32>
      %38 = arith.subf %32, %37 : vector<12x32xf32>
      %39 = arith.mulf %38, %38 : vector<12x32xf32>
      %cst_27 = arith.constant dense<0.000000e+00> : vector<12xf32>
      %40 = vector.multi_reduction <add>, %39, %cst_27 [1] : vector<12x32xf32> to vector<12xf32>
      %41 = vector.shape_cast %40 : vector<12xf32> to vector<12x1xf32>
      %cst_28 = arith.constant 3.200000e+01 : f32
      %42 = vector.broadcast %cst_28 : f32 to vector<12x1xf32>
      %43 = arith.divf %41, %42 : vector<12x1xf32>
      %cst_29 = arith.constant 9.99999974E-6 : f32
      %44 = vector.broadcast %cst_29 : f32 to vector<12x1xf32>
      %45 = arith.addf %43, %44 : vector<12x1xf32>
      %46 = math.rsqrt %45 : vector<12x1xf32>
      %47 = vector.broadcast %46 : vector<12x1xf32> to vector<12x32xf32>
      %48 = arith.mulf %38, %47 : vector<12x32xf32>
      %c0_30 = arith.constant 0 : index
      %c0_31 = arith.constant 0 : index
      %49 = vector.load %arg4[%c0_30, %c0_31] : memref<1x32xf32, #tpu.memory_space<vmem>>, vector<1x32xf32>
      %50 = vector.broadcast %49 : vector<1x32xf32> to vector<12x32xf32>
      %51 = arith.mulf %48, %50 : vector<12x32xf32>
      %c0_32 = arith.constant 0 : index
      %c0_33 = arith.constant 0 : index
      %52 = vector.load %arg5[%c0_32, %c0_33] : memref<1x32xf32, #tpu.memory_space<vmem>>, vector<1x32xf32>
      %53 = vector.broadcast %52 : vector<1x32xf32> to vector<12x32xf32>
      %54 = arith.addf %51, %53 : vector<12x32xf32>
      %55 = arith.truncf %54 : vector<12x32xf32> to vector<12x32xbf16>
      %c0_34 = arith.constant 0 : index
      %c0_35 = arith.constant 0 : index
      %56 = vector.load %arg7[%c0_34, %c0_35] : memref<32x32xbf16, #tpu.memory_space<vmem>>, vector<32x32xbf16>
      %cst_36 = arith.constant dense<0.000000e+00> : vector<12x32xf32>
      %57 = tpu.matmul %55, %56, %cst_36 {dimension_numbers = #tpu.dot_dimension_numbers<[1], [0], [0], [1], [0, 0, 1, 1], [], []>} : vector<12x32xbf16>, vector<32x32xbf16>, vector<12x32xf32> -> vector<12x32xf32>
      %58 = arith.truncf %57 : vector<12x32xf32> to vector<12x32xbf16>
      %c0_37 = arith.constant 0 : index
      %c0_38 = arith.constant 0 : index
      %59 = vector.load %arg8[%c0_37, %c0_38] : memref<32x32xbf16, #tpu.memory_space<vmem>>, vector<32x32xbf16>
      %cst_39 = arith.constant dense<0.000000e+00> : vector<12x32xf32>
      %60 = tpu.matmul %55, %59, %cst_39 {dimension_numbers = #tpu.dot_dimension_numbers<[1], [0], [0], [1], [0, 0, 1, 1], [], []>} : vector<12x32xbf16>, vector<32x32xbf16>, vector<12x32xf32> -> vector<12x32xf32>
      %61 = arith.truncf %60 : vector<12x32xf32> to vector<12x32xbf16>
      %c0_40 = arith.constant 0 : index
      %c0_41 = arith.constant 0 : index
      %62 = vector.load %arg10[%c0_40, %c0_41] : memref<48x32xbf16, #tpu.memory_space<vmem>>, vector<48x32xbf16>
      %63 = arith.extf %62 : vector<48x32xbf16> to vector<48x32xf32>
      %c0_42 = arith.constant 0 : index
      %c0_43 = arith.constant 0 : index
      %64 = vector.load %arg11[%c0_42, %c0_43] : memref<48x12xbf16, #tpu.memory_space<vmem>>, vector<48x12xbf16>
      %cst_44 = arith.constant dense<0.000000e+00> : vector<48x32xf32>
      %65 = tpu.matmul %64, %58, %cst_44 {dimension_numbers = #tpu.dot_dimension_numbers<[1], [0], [0], [1], [0, 0, 1, 1], [], []>} : vector<48x12xbf16>, vector<12x32xbf16>, vector<48x32xf32> -> vector<48x32xf32>
      %66 = arith.mulf %65, %63 : vector<48x32xf32>
      %67 = arith.truncf %66 : vector<48x32xf32> to vector<48x32xbf16>
      %c0_45 = arith.constant 0 : index
      %c0_46 = arith.constant 0 : index
      %c0_47 = arith.constant 0 : index
      %68 = vector.load %arg13[%c0_45, %c0_46, %c0_47] : memref<2x48x32xbf16, #tpu.memory_space<vmem>>, vector<1x48x32xbf16>
      %69 = vector.shape_cast %68 : vector<1x48x32xbf16> to vector<48x32xbf16>
      %70 = vector.shape_cast %67 : vector<48x32xbf16> to vector<1x48x32xbf16>
      tpu.vector_store %arg13[%c0_45, %c0_46, %c0_47], %70 {strides = array<i32>} : memref<2x48x32xbf16, #tpu.memory_space<vmem>>, vector<1x48x32xbf16>,
      %cst_48 = arith.constant dense<0.000000e+00> : vector<48x32xf32>
      %71 = tpu.matmul %64, %61, %cst_48 {dimension_numbers = #tpu.dot_dimension_numbers<[1], [0], [0], [1], [0, 0, 1, 1], [], []>} : vector<48x12xbf16>, vector<12x32xbf16>, vector<48x32xf32> -> vector<48x32xf32>
      %72 = arith.mulf %71, %63 : vector<48x32xf32>
      %73 = arith.truncf %72 : vector<48x32xf32> to vector<48x32xbf16>
      %c1_49 = arith.constant 1 : index
      %c0_50 = arith.constant 0 : index
      %c0_51 = arith.constant 0 : index
      %74 = vector.load %arg13[%c1_49, %c0_50, %c0_51] : memref<2x48x32xbf16, #tpu.memory_space<vmem>>, vector<1x48x32xbf16>
      %75 = vector.shape_cast %74 : vector<1x48x32xbf16> to vector<48x32xbf16>
      %76 = vector.shape_cast %73 : vector<48x32xbf16> to vector<1x48x32xbf16>
      tpu.vector_store %arg13[%c1_49, %c0_50, %c0_51], %76 {strides = array<i32>} : memref<2x48x32xbf16, #tpu.memory_space<vmem>>, vector<1x48x32xbf16>,
    } else {
    }
    %c0 = arith.constant 0 : index
    %c0_1 = arith.constant 0 : index
    %c0_2 = arith.constant 0 : index
    %3 = vector.load %arg2[%c0, %c0_1, %c0_2] : memref<1x256x32xbf16, #tpu.memory_space<vmem>>, vector<1x256x32xbf16>
    %4 = vector.shape_cast %3 : vector<1x256x32xbf16> to vector<256x32xbf16>
    %c0_3 = arith.constant 0 : index
    %c0_4 = arith.constant 0 : index
    %5 = vector.load %arg6[%c0_3, %c0_4] : memref<32x32xbf16, #tpu.memory_space<vmem>>, vector<32x32xbf16>
    %cst = arith.constant dense<0.000000e+00> : vector<256x32xf32>
    %6 = tpu.matmul %4, %5, %cst {dimension_numbers = #tpu.dot_dimension_numbers<[1], [0], [0], [1], [0, 0, 1, 1], [], []>} : vector<256x32xbf16>, vector<32x32xbf16>, vector<256x32xf32> -> vector<256x32xf32>
    %c0_5 = arith.constant 0 : index
    %c0_6 = arith.constant 0 : index
    %c0_7 = arith.constant 0 : index
    %7 = vector.load %arg13[%c0_5, %c0_6, %c0_7] : memref<2x48x32xbf16, #tpu.memory_space<vmem>>, vector<1x48x32xbf16>
    %8 = vector.shape_cast %7 : vector<1x48x32xbf16> to vector<48x32xbf16>
    %c1 = arith.constant 1 : index
    %c0_8 = arith.constant 0 : index
    %c0_9 = arith.constant 0 : index
    %9 = vector.load %arg13[%c1, %c0_8, %c0_9] : memref<2x48x32xbf16, #tpu.memory_space<vmem>>, vector<1x48x32xbf16>
    %10 = vector.shape_cast %9 : vector<1x48x32xbf16> to vector<48x32xbf16>
    %11 = arith.truncf %6 : vector<256x32xf32> to vector<256x32xbf16>
    %cst_10 = arith.constant dense<0.000000e+00> : vector<256x48xf32>
    %12 = tpu.matmul %11, %8, %cst_10 {dimension_numbers = #tpu.dot_dimension_numbers<[1], [1], [0], [0], [0, 0, 1, 0], [], []>} : vector<256x32xbf16>, vector<48x32xbf16>, vector<256x48xf32> -> vector<256x48xf32>
    %cst_11 = arith.constant dense<0xFF800000> : vector<256xf32>
    %13 = vector.multi_reduction <maximumf>, %12, %cst_11 [1] : vector<256x48xf32> to vector<256xf32>
    %14 = vector.shape_cast %13 : vector<256xf32> to vector<256x1xf32>
    %15 = vector.broadcast %14 : vector<256x1xf32> to vector<256x48xf32>
    %16 = arith.subf %12, %15 : vector<256x48xf32>
    %17 = math.exp %16 : vector<256x48xf32>
    %18 = arith.truncf %17 : vector<256x48xf32> to vector<256x48xbf16>
    %cst_12 = arith.constant dense<0.000000e+00> : vector<256x32xf32>
    %19 = tpu.matmul %18, %10, %cst_12 {dimension_numbers = #tpu.dot_dimension_numbers<[1], [0], [0], [1], [0, 0, 1, 1], [], []>} : vector<256x48xbf16>, vector<48x32xbf16>, vector<256x32xf32> -> vector<256x32xf32>
    %c0_13 = arith.constant 0 : index
    %c0_14 = arith.constant 0 : index
    %20 = vector.load %arg10[%c0_13, %c0_14] : memref<48x32xbf16, #tpu.memory_space<vmem>>, vector<48x32xbf16>
    %cst_15 = arith.constant dense<0.000000e+00> : vector<256x32xf32>
    %21 = tpu.matmul %18, %20, %cst_15 {dimension_numbers = #tpu.dot_dimension_numbers<[1], [0], [0], [1], [0, 0, 1, 1], [], []>} : vector<256x48xbf16>, vector<48x32xbf16>, vector<256x32xf32> -> vector<256x32xf32>
    %22 = tpu.reciprocal %21 {approx = true} : vector<256x32xf32> -> vector<256x32xf32>
    %23 = arith.mulf %19, %22 : vector<256x32xf32>
    %24 = arith.truncf %23 : vector<256x32xf32> to vector<256x32xbf16>
    %c0_16 = arith.constant 0 : index
    %c0_17 = arith.constant 0 : index
    %25 = vector.load %arg9[%c0_16, %c0_17] : memref<32x32xbf16, #tpu.memory_space<vmem>>, vector<32x32xbf16>
    %cst_18 = arith.constant dense<0.000000e+00> : vector<256x32xf32>
    %26 = tpu.matmul %24, %25, %cst_18 {dimension_numbers = #tpu.dot_dimension_numbers<[1], [0], [0], [1], [0, 0, 1, 1], [], []>} : vector<256x32xbf16>, vector<32x32xbf16>, vector<256x32xf32> -> vector<256x32xf32>
    %c0_19 = arith.constant 0 : index
    %c0_20 = arith.constant 0 : index
    %c0_21 = arith.constant 0 : index
    %27 = vector.load %arg12[%c0_19, %c0_20, %c0_21] : memref<1x256x32xf32, #tpu.memory_space<vmem>>, vector<1x256x32xf32>
    %28 = vector.shape_cast %27 : vector<1x256x32xf32> to vector<256x32xf32>
    %29 = vector.shape_cast %26 : vector<256x32xf32> to vector<1x256x32xf32>
    tpu.vector_store %arg12[%c0_19, %c0_20, %c0_21], %29 {strides = array<i32>} : memref<1x256x32xf32, #tpu.memory_space<vmem>>, vector<1x256x32xf32>,
    return
  }
  func.func @transform_0(%arg0: i32, %arg1: i32) -> (i32, i32, i32) {
    %c0_i32 = arith.constant 0 : i32
    %c0_i32_0 = arith.constant 0 : i32
    return %arg0, %arg1, %c0_i32 : i32, i32, i32
  }
  func.func @transform_1(%arg0: i32, %arg1: i32) -> (i32, i32, i32) {
    %c0_i32 = arith.constant 0 : i32
    %c0_i32_0 = arith.constant 0 : i32
    %c0_i32_1 = arith.constant 0 : i32
    return %arg0, %c0_i32, %c0_i32_0 : i32, i32, i32
  }
  func.func @transform_2(%arg0: i32, %arg1: i32) -> (i32, i32) {
    %c0_i32 = arith.constant 0 : i32
    %c0_i32_0 = arith.constant 0 : i32
    %c0_i32_1 = arith.constant 0 : i32
    return %c0_i32, %c0_i32_0 : i32, i32
  }
  func.func @transform_3(%arg0: i32, %arg1: i32) -> (i32, i32) {
    %c0_i32 = arith.constant 0 : i32
    %c0_i32_0 = arith.constant 0 : i32
    %c0_i32_1 = arith.constant 0 : i32
    return %c0_i32, %c0_i32_0 : i32, i32
  }
  func.func @transform_4(%arg0: i32, %arg1: i32) -> (i32, i32) {
    %c0_i32 = arith.constant 0 : i32
    %c0_i32_0 = arith.constant 0 : i32
    %c0_i32_1 = arith.constant 0 : i32
    return %c0_i32, %c0_i32_0 : i32, i32
  }
  func.func @transform_5(%arg0: i32, %arg1: i32) -> (i32, i32) {
    %c0_i32 = arith.constant 0 : i32
    %c0_i32_0 = arith.constant 0 : i32
    %c0_i32_1 = arith.constant 0 : i32
    return %c0_i32, %c0_i32_0 : i32, i32
  }
  func.func @transform_6(%arg0: i32, %arg1: i32) -> (i32, i32) {
    %c0_i32 = arith.constant 0 : i32
    %c0_i32_0 = arith.constant 0 : i32
    %c0_i32_1 = arith.constant 0 : i32
    return %c0_i32, %c0_i32_0 : i32, i32
  }
  func.func @transform_7(%arg0: i32, %arg1: i32) -> (i32, i32) {
    %c0_i32 = arith.constant 0 : i32
    %c0_i32_0 = arith.constant 0 : i32
    %c0_i32_1 = arith.constant 0 : i32
    return %c0_i32, %c0_i32_0 : i32, i32
  }
  func.func @transform_8(%arg0: i32, %arg1: i32) -> (i32, i32) {
    %c0_i32 = arith.constant 0 : i32
    %c0_i32_0 = arith.constant 0 : i32
    %c0_i32_1 = arith.constant 0 : i32
    return %c0_i32, %c0_i32_0 : i32, i32
  }
  func.func @transform_9(%arg0: i32, %arg1: i32) -> (i32, i32) {
    %c0_i32 = arith.constant 0 : i32
    %c0_i32_0 = arith.constant 0 : i32
    %c0_i32_1 = arith.constant 0 : i32
    return %c0_i32, %c0_i32_0 : i32, i32
  }
  func.func @transform_10(%arg0: i32, %arg1: i32) -> (i32, i32, i32) {
    %c0_i32 = arith.constant 0 : i32
    %c0_i32_0 = arith.constant 0 : i32
    return %arg0, %arg1, %c0_i32 : i32, i32, i32
  }
}

</mosaic_0001>

<llo_original>
// kernel: attention_forward.1
$region0: #{attention_forward.1}
  #allocation0 [shape = 'u32[]', space=smem, size = 0x4, offset = 0x4, fixed_abs, tag = 'smem constant byte address 0x4 - core index']
  #allocation1 [shape = 'u32[144,128]{1,0:T(1,128)}', space=vmem, size = 0x12000, scoped, tag = 'internal scratch']
  #allocation2 [shape = 'bf16[2,48,32]{2,1,0:T(16,128)(2,1)}', space=vmem, size = 0x6000, scoped, tag = 'scratch operand']
  %s0 = inlined_call_operand.vmem [shape: bf16[2,256,32], index: 0, kind: input, shape index: {}]
  %s1 = inlined_call_operand.vmem [shape: bf16[2,12,32], index: 1, kind: input, shape index: {}]
  %s2 = inlined_call_operand.vmem [shape: f32[1,32], index: 2, kind: input, shape index: {}]
  %s3 = inlined_call_operand.vmem [shape: f32[1,32], index: 3, kind: input, shape index: {}]
  %s4 = inlined_call_operand.vmem [shape: bf16[32,32], index: 4, kind: input, shape index: {}]
  %s5 = inlined_call_operand.vmem [shape: bf16[32,32], index: 5, kind: input, shape index: {}]
  %s6 = inlined_call_operand.vmem [shape: bf16[32,32], index: 6, kind: input, shape index: {}]
  %s7 = inlined_call_operand.vmem [shape: bf16[32,32], index: 7, kind: input, shape index: {}]
  %s8 = inlined_call_operand.vmem [shape: bf16[48,32], index: 8, kind: input, shape index: {}]
  %s9 = inlined_call_operand.vmem [shape: bf16[48,12], index: 9, kind: input, shape index: {}]
  %s10 = inlined_call_operand.vmem [shape: f32[2,256,32], index: 10, kind: output, shape index: {}]
  %s11 = sld [smem:[#allocation0]]
  $region77: #{attention_forward.1} parent=0
    _
  %s13 = ssub.s32 1, %s11
  %s14 = scalar_select 0, %s13, %s11
  loop: start=0, step=1, limit=4
  $region2: #{attention_forward.1} parent=0 // loop_pre_header
    _
  $region3: #{attention_forward.1} parent=0 // loop_header
    %s16 = sphi 0, %s20
    %p17 = scmp.ge.s32.totalorder %s16, 4
    %s23 = sphi 0, %s35
    %s24 = sphi 0, %s31
    %s25 = sphi 0, %s23
    %s26 = sphi 0, %s24
    %s27 = sphi 0, %s25
    %s28 = sphi 0, %s26
    %s40 = sphi 0, %s42
    %s43 = sphi 0, %s40
    %s44 = sphi 0, %s43
    %s60 = sphi 0, %s44
    %s66 = sphi 0, %s68
    %s69 = sphi 0, %s66
    %s70 = sphi 0, %s69
    %s86 = sphi 0, %s70
    %s90 = sphi 0, %s90
    %s92 = sphi 0, %s90
    %s93 = sphi 0, %s92
    %s107 = sphi 0, %s93
    %s111 = sphi 0, %s111
    %s113 = sphi 0, %s111
    %s114 = sphi 0, %s113
    %s128 = sphi 0, %s114
    %s132 = sphi 0, %s132
    %s134 = sphi 0, %s132
    %s135 = sphi 0, %s134
    %s149 = sphi 0, %s135
    %s153 = sphi 0, %s153
    %s155 = sphi 0, %s153
    %s156 = sphi 0, %s155
    %s170 = sphi 0, %s156
    %s174 = sphi 0, %s174
    %s176 = sphi 0, %s174
    %s177 = sphi 0, %s176
    %s191 = sphi 0, %s177
    %s195 = sphi 0, %s195
    %s197 = sphi 0, %s195
    %s198 = sphi 0, %s197
    %s212 = sphi 0, %s198
    %s216 = sphi 0, %s216
    %s218 = sphi 0, %s216
    %s219 = sphi 0, %s218
    %s233 = sphi 0, %s219
    %s237 = sphi 0, %s237
    %s239 = sphi 0, %s237
    %s240 = sphi 0, %s239
    %s254 = sphi 0, %s240
    %s262 = sphi 0, %s264
    %s265 = sphi 0, %s262
    %s266 = sphi 0, %s265
    %s282 = sphi 0, %s266
  $region4: #{attention_forward.1} parent=0 // loop_header_branch
    %19 = sbr.rel (%p17) target = $region8
  $region5: #{attention_forward.1} parent=0 // loop_body
    %s21 = ssub.s32 %s16, 1
    %s22 = ssub.s32 %s16, 2
    %s29 = sadd.s32 1, %s24
    %p30 = scmp.ge.s32.totalorder %s29, 1
    %s31 = scalar_select %p30, 0, %s29
    %s32 = sadd.s32 1, %s23
    %s33 = scalar_select %p30, %s32, %s23
    %p34 = scmp.ge.s32.totalorder %s33, 2
    %s35 = scalar_select %p34, 0, %s33
    %s36 = ssub.s32 %s23, %s35
    %s37 = ssub.s32 %s24, %s31
    %s38 = sor.u32 %s36, %s37
    %p39 = scmp.eq.s32.totalorder %s38, 0
    %s41 = sadd.s32 %s40, 1
    %s42 = scalar_select %p39, %s40, %s41
    %p45 = pneg %p39
    %p46 = scmp.eq.s32.totalorder %s16, 1
    %p47 = por %p45, %p46
    %p48 = scmp.ne.s32.totalorder %s40, %s43
    %p49 = scmp.eq.s32.totalorder %s16, 0
    %p50 = por %p48, %p49
    %p51 = scmp.ne.s32.totalorder %s40, %s43
    %p52 = scmp.eq.s32.totalorder %s21, 1
    %p53 = por %p51, %p52
    %p54 = scmp.ne.s32.totalorder %s43, %s44
    %p55 = scmp.eq.s32.totalorder %s21, 0
    %p56 = por %p54, %p55
    %p57 = scmp.ne.s32.totalorder %s43, %s44
    %p58 = scmp.eq.s32.totalorder %s22, 1
    %p59 = por %p57, %p58
    %p61 = scmp.ne.s32.totalorder %s44, %s60
    %p62 = scmp.eq.s32.totalorder %s22, 0
    %p63 = por %p61, %p62
    %s64 = ssub.s32 %s23, %s35
    %p65 = scmp.eq.s32.totalorder %s64, 0
    %s67 = sadd.s32 %s66, 1
    %s68 = scalar_select %p65, %s66, %s67
    %p71 = pneg %p65
    %p72 = scmp.eq.s32.totalorder %s16, 1
    %p73 = por %p71, %p72
    %p74 = scmp.ne.s32.totalorder %s66, %s69
    %p75 = scmp.eq.s32.totalorder %s16, 0
    %p76 = por %p74, %p75
    %p77 = scmp.ne.s32.totalorder %s66, %s69
    %p78 = scmp.eq.s32.totalorder %s21, 1
    %p79 = por %p77, %p78
    %p80 = scmp.ne.s32.totalorder %s69, %s70
    %p81 = scmp.eq.s32.totalorder %s21, 0
    %p82 = por %p80, %p81
    %p83 = scmp.ne.s32.totalorder %s69, %s70
    %p84 = scmp.eq.s32.totalorder %s22, 1
    %p85 = por %p83, %p84
    %p87 = scmp.ne.s32.totalorder %s70, %s86
    %p88 = scmp.eq.s32.totalorder %s22, 0
    %p89 = por %p87, %p88
    %s91 = sadd.s32 %s90, 1
    %p94 = scmp.eq.s32.totalorder %s16, 1
    %p95 = scmp.ne.s32.totalorder %s90, %s92
    %p96 = scmp.eq.s32.totalorder %s16, 0
    %p97 = por %p95, %p96
    %p98 = scmp.ne.s32.totalorder %s90, %s92
    %p99 = scmp.eq.s32.totalorder %s21, 1
    %p100 = por %p98, %p99
    %p101 = scmp.ne.s32.totalorder %s92, %s93
    %p102 = scmp.eq.s32.totalorder %s21, 0
    %p103 = por %p101, %p102
    %p104 = scmp.ne.s32.totalorder %s92, %s93
    %p105 = scmp.eq.s32.totalorder %s22, 1
    %p106 = por %p104, %p105
    %p108 = scmp.ne.s32.totalorder %s93, %s107
    %p109 = scmp.eq.s32.totalorder %s22, 0
    %p110 = por %p108, %p109
    %s112 = sadd.s32 %s111, 1
    %p115 = scmp.eq.s32.totalorder %s16, 1
    %p116 = scmp.ne.s32.totalorder %s111, %s113
    %p117 = scmp.eq.s32.totalorder %s16, 0
    %p118 = por %p116, %p117
    %p119 = scmp.ne.s32.totalorder %s111, %s113
    %p120 = scmp.eq.s32.totalorder %s21, 1
    %p121 = por %p119, %p120
    %p122 = scmp.ne.s32.totalorder %s113, %s114
    %p123 = scmp.eq.s32.totalorder %s21, 0
    %p124 = por %p122, %p123
    %p125 = scmp.ne.s32.totalorder %s113, %s114
    %p126 = scmp.eq.s32.totalorder %s22, 1
    %p127 = por %p125, %p126
    %p129 = scmp.ne.s32.totalorder %s114, %s128
    %p130 = scmp.eq.s32.totalorder %s22, 0
    %p131 = por %p129, %p130
    %s133 = sadd.s32 %s132, 1
    %p136 = scmp.eq.s32.totalorder %s16, 1
    %p137 = scmp.ne.s32.totalorder %s132, %s134
    %p138 = scmp.eq.s32.totalorder %s16, 0
    %p139 = por %p137, %p138
    %p140 = scmp.ne.s32.totalorder %s132, %s134
    %p141 = scmp.eq.s32.totalorder %s21, 1
    %p142 = por %p140, %p141
    %p143 = scmp.ne.s32.totalorder %s134, %s135
    %p144 = scmp.eq.s32.totalorder %s21, 0
    %p145 = por %p143, %p144
    %p146 = scmp.ne.s32.totalorder %s134, %s135
    %p147 = scmp.eq.s32.totalorder %s22, 1
    %p148 = por %p146, %p147
    %p150 = scmp.ne.s32.totalorder %s135, %s149
    %p151 = scmp.eq.s32.totalorder %s22, 0
    %p152 = por %p150, %p151
    %s154 = sadd.s32 %s153, 1
    %p157 = scmp.eq.s32.totalorder %s16, 1
    %p158 = scmp.ne.s32.totalorder %s153, %s155
    %p159 = scmp.eq.s32.totalorder %s16, 0
    %p160 = por %p158, %p159
    %p161 = scmp.ne.s32.totalorder %s153, %s155
    %p162 = scmp.eq.s32.totalorder %s21, 1
    %p163 = por %p161, %p162
    %p164 = scmp.ne.s32.totalorder %s155, %s156
    %p165 = scmp.eq.s32.totalorder %s21, 0
    %p166 = por %p164, %p165
    %p167 = scmp.ne.s32.totalorder %s155, %s156
    %p168 = scmp.eq.s32.totalorder %s22, 1
    %p169 = por %p167, %p168
    %p171 = scmp.ne.s32.totalorder %s156, %s170
    %p172 = scmp.eq.s32.totalorder %s22, 0
    %p173 = por %p171, %p172
    %s175 = sadd.s32 %s174, 1
    %p178 = scmp.eq.s32.totalorder %s16, 1
    %p179 = scmp.ne.s32.totalorder %s174, %s176
    %p180 = scmp.eq.s32.totalorder %s16, 0
    %p181 = por %p179, %p180
    %p182 = scmp.ne.s32.totalorder %s174, %s176
    %p183 = scmp.eq.s32.totalorder %s21, 1
    %p184 = por %p182, %p183
    %p185 = scmp.ne.s32.totalorder %s176, %s177
    %p186 = scmp.eq.s32.totalorder %s21, 0
    %p187 = por %p185, %p186
    %p188 = scmp.ne.s32.totalorder %s176, %s177
    %p189 = scmp.eq.s32.totalorder %s22, 1
    %p190 = por %p188, %p189
    %p192 = scmp.ne.s32.totalorder %s177, %s191
    %p193 = scmp.eq.s32.totalorder %s22, 0
    %p194 = por %p192, %p193
    %s196 = sadd.s32 %s195, 1
    %p199 = scmp.eq.s32.totalorder %s16, 1
    %p200 = scmp.ne.s32.totalorder %s195, %s197
    %p201 = scmp.eq.s32.totalorder %s16, 0
    %p202 = por %p200, %p201
    %p203 = scmp.ne.s32.totalorder %s195, %s197
    %p204 = scmp.eq.s32.totalorder %s21, 1
    %p205 = por %p203, %p204
    %p206 = scmp.ne.s32.totalorder %s197, %s198
    %p207 = scmp.eq.s32.totalorder %s21, 0
    %p208 = por %p206, %p207
    %p209 = scmp.ne.s32.totalorder %s197, %s198
    %p210 = scmp.eq.s32.totalorder %s22, 1
    %p211 = por %p209, %p210
    %p213 = scmp.ne.s32.totalorder %s198, %s212
    %p214 = scmp.eq.s32.totalorder %s22, 0
    %p215 = por %p213, %p214
    %s217 = sadd.s32 %s216, 1
    %p220 = scmp.eq.s32.totalorder %s16, 1
    %p221 = scmp.ne.s32.totalorder %s216, %s218
    %p222 = scmp.eq.s32.totalorder %s16, 0
    %p223 = por %p221, %p222
    %p224 = scmp.ne.s32.totalorder %s216, %s218
    %p225 = scmp.eq.s32.totalorder %s21, 1
    %p226 = por %p224, %p225
    %p227 = scmp.ne.s32.totalorder %s218, %s219
    %p228 = scmp.eq.s32.totalorder %s21, 0
    %p229 = por %p227, %p228
    %p230 = scmp.ne.s32.totalorder %s218, %s219
    %p231 = scmp.eq.s32.totalorder %s22, 1
    %p232 = por %p230, %p231
    %p234 = scmp.ne.s32.totalorder %s219, %s233
    %p235 = scmp.eq.s32.totalorder %s22, 0
    %p236 = por %p234, %p235
    %s238 = sadd.s32 %s237, 1
    %p241 = scmp.eq.s32.totalorder %s16, 1
    %p242 = scmp.ne.s32.totalorder %s237, %s239
    %p243 = scmp.eq.s32.totalorder %s16, 0
    %p244 = por %p242, %p243
    %p245 = scmp.ne.s32.totalorder %s237, %s239
    %p246 = scmp.eq.s32.totalorder %s21, 1
    %p247 = por %p245, %p246
    %p248 = scmp.ne.s32.totalorder %s239, %s240
    %p249 = scmp.eq.s32.totalorder %s21, 0
    %p250 = por %p248, %p249
    %p251 = scmp.ne.s32.totalorder %s239, %s240
    %p252 = scmp.eq.s32.totalorder %s22, 1
    %p253 = por %p251, %p252
    %p255 = scmp.ne.s32.totalorder %s240, %s254
    %p256 = scmp.eq.s32.totalorder %s22, 0
    %p257 = por %p255, %p256
    %s258 = ssub.s32 %s23, %s35
    %s259 = ssub.s32 %s24, %s31
    %s260 = sor.u32 %s258, %s259
    %p261 = scmp.eq.s32.totalorder %s260, 0
    %s263 = sadd.s32 %s262, 1
    %s264 = scalar_select %p261, %s262, %s263
    %p267 = pneg %p261
    %p268 = scmp.eq.s32.totalorder %s16, 1
    %p269 = por %p267, %p268
    %p270 = scmp.ne.s32.totalorder %s262, %s265
    %p271 = scmp.eq.s32.totalorder %s16, 0
    %p272 = por %p270, %p271
    %p273 = scmp.ne.s32.totalorder %s262, %s265
    %p274 = scmp.eq.s32.totalorder %s21, 1
    %p275 = por %p273, %p274
    %p276 = scmp.ne.s32.totalorder %s265, %s266
    %p277 = scmp.eq.s32.totalorder %s21, 0
    %p278 = por %p276, %p277
    %p279 = scmp.ne.s32.totalorder %s265, %s266
    %p280 = scmp.eq.s32.totalorder %s22, 1
    %p281 = por %p279, %p280
    %p283 = scmp.ne.s32.totalorder %s266, %s282
    %p284 = scmp.eq.s32.totalorder %s22, 0
    %p285 = por %p283, %p284
    %p286 = scmp.le.s32.totalorder 1, %s16
    %p287 = scmp.lt.s32.totalorder %s16, 3
    %p288 = pnand %p286, %p287
    %p289 = pneg %p288
    // Predicated region
    $region9: #{attention_forward.1} parent=5 // pred_check
      _
    $region10: #{attention_forward.1} parent=5 // pred_check_branch
      %291 = sbr.rel (%p288) target = $region12
    $region11: #{attention_forward.1} parent=5 // pred_region
      %s292 = ssub.s32 %s16, 1
      // Predicated region
      $region13: #{attention_forward.1} parent=11 // pred_check
        %p293 = pneg %p103
      $region14: #{attention_forward.1} parent=11 // pred_check_branch
        %295 = sbr.rel (%p293) target = $region16
      $region15: #{attention_forward.1} parent=11 // pred_region
        _
      $region16: #{attention_forward.1} parent=11 // pred_fallthru
        _
      // Predicated region
      $region17: #{attention_forward.1} parent=11 // pred_check
        %p296 = pneg %p124
      $region18: #{attention_forward.1} parent=11 // pred_check_branch
        %298 = sbr.rel (%p296) target = $region20
      $region19: #{attention_forward.1} parent=11 // pred_region
        _
      $region20: #{attention_forward.1} parent=11 // pred_fallthru
        _
      // Predicated region
      $region21: #{attention_forward.1} parent=11 // pred_check
        %p299 = pneg %p145
      $region22: #{attention_forward.1} parent=11 // pred_check_branch
        %301 = sbr.rel (%p299) target = $region24
      $region23: #{attention_forward.1} parent=11 // pred_region
        _
      $region24: #{attention_forward.1} parent=11 // pred_fallthru
        _
      // Predicated region
      $region25: #{attention_forward.1} parent=11 // pred_check
        %p302 = pneg %p166
      $region26: #{attention_forward.1} parent=11 // pred_check_branch
        %304 = sbr.rel (%p302) target = $region28
      $region27: #{attention_forward.1} parent=11 // pred_region
        _
      $region28: #{attention_forward.1} parent=11 // pred_fallthru
        _
      // Predicated region
      $region29: #{attention_forward.1} parent=11 // pred_check
        %p305 = pneg %p187
      $region30: #{attention_forward.1} parent=11 // pred_check_branch
        %307 = sbr.rel (%p305) target = $region32
      $region31: #{attention_forward.1} parent=11 // pred_region
        _
      $region32: #{attention_forward.1} parent=11 // pred_fallthru
        _
      // Predicated region
      $region33: #{attention_forward.1} parent=11 // pred_check
        %p308 = pneg %p208
      $region34: #{attention_forward.1} parent=11 // pred_check_branch
        %310 = sbr.rel (%p308) target = $region36
      $region35: #{attention_forward.1} parent=11 // pred_region
        _
      $region36: #{attention_forward.1} parent=11 // pred_fallthru
        _
      // Predicated region
      $region37: #{attention_forward.1} parent=11 // pred_check
        %p311 = pneg %p229
      $region38: #{attention_forward.1} parent=11 // pred_check_branch
        %313 = sbr.rel (%p311) target = $region40
      $region39: #{attention_forward.1} parent=11 // pred_region
        _
      $region40: #{attention_forward.1} parent=11 // pred_fallthru
        _
      // Predicated region
      $region41: #{attention_forward.1} parent=11 // pred_check
        %p314 = pneg %p250
      $region42: #{attention_forward.1} parent=11 // pred_check_branch
        %316 = sbr.rel (%p314) target = $region44
      $region43: #{attention_forward.1} parent=11 // pred_region
        _
      $region44: #{attention_forward.1} parent=11 // pred_fallthru
        _
    $region12: #{attention_forward.1} parent=5 // pred_fallthru
      _
    %p317 = scmp.lt.s32.totalorder %s16, 2
    // Predicated region
    $region45: #{attention_forward.1} parent=5 // pred_check
      %p318 = pneg %p317
    $region46: #{attention_forward.1} parent=5 // pred_check_branch
      %320 = sbr.rel (%p318) target = $region48
    $region47: #{attention_forward.1} parent=5 // pred_region
      // Predicated region
      $region49: #{attention_forward.1} parent=47 // pred_check
        %p321 = pneg %p50
      $region50: #{attention_forward.1} parent=47 // pred_check_branch
        %323 = sbr.rel (%p321) target = $region52
      $region51: #{attention_forward.1} parent=47 // pred_region
        %s324 = smul.u32 32, %s24
        %p325 = scmp.lt.s32.totalorder %s23, 1
        %s326 = scalar_select %p325, %s23, 1
        %p327 = scmp.lt.s32.totalorder %s324, 31
        %s328 = scalar_select %p327, %s324, 31
        %s329 = smul.addr %s326, 32
        %s330 = sadd.s32 %s328, %s329
        %s331 = smul.addr %s330, 4
        %s332 = scalar_lea.vmem %s0, %s331
        %s333 = smul.u32 32, %s24
      $region52: #{attention_forward.1} parent=47 // pred_fallthru
        _
      // Predicated region
      $region53: #{attention_forward.1} parent=47 // pred_check
        %p334 = pneg %p76
      $region54: #{attention_forward.1} parent=47 // pred_check_branch
        %336 = sbr.rel (%p334) target = $region56
      $region55: #{attention_forward.1} parent=47 // pred_region
        %p337 = scmp.lt.s32.totalorder %s23, 1
        %s338 = scalar_select %p337, %s23, 1
        %s339 = smul.addr %s338, 2
        %s340 = smul.addr %s339, 4
        %s341 = scalar_lea.vmem %s1, %s340
      $region56: #{attention_forward.1} parent=47 // pred_fallthru
        _
    $region48: #{attention_forward.1} parent=5 // pred_fallthru
      _
    %p342 = scmp.le.s32.totalorder 1, %s16
    %p343 = scmp.lt.s32.totalorder %s16, 3
    %p344 = pnand %p342, %p343
    %p345 = pneg %p344
    // Predicated region
    $region57: #{attention_forward.1} parent=5 // pred_check
      _
    $region58: #{attention_forward.1} parent=5 // pred_check_branch
      %347 = sbr.rel (%p344) target = $region60
    $region59: #{attention_forward.1} parent=5 // pred_region
      %s348 = ssub.s32 %s16, 1
      %s349 = smul.u32 32, %s26
      %p350 = scmp.lt.s32.totalorder %s25, 1
      %s351 = scalar_select %p350, %s25, 1
      %p352 = scmp.lt.s32.totalorder %s349, 31
      %s353 = scalar_select %p352, %s349, 31
      %s354 = smul.addr %s351, 32
      %s355 = sadd.s32 %s353, %s354
      %s356 = smul.addr %s355, 4
      %s357 = scalar_lea.vmem %s0, %s356
      %p358 = pneg %p56
      %p359 = pneg %p53
      %p360 = scmp.lt.s32.totalorder %s25, 1
      %s361 = scalar_select %p360, %s25, 1
      %s362 = smul.addr %s361, 2
      %s363 = smul.addr %s362, 4
      %s364 = scalar_lea.vmem %s1, %s363
      %p365 = pneg %p82
      %p366 = pneg %p79
      %p367 = pneg %p103
      %p368 = pneg %p100
      %p369 = pneg %p124
      %p370 = pneg %p121
      %p371 = pneg %p145
      %p372 = pneg %p142
      %p373 = pneg %p166
      %p374 = pneg %p163
      %p375 = pneg %p187
      %p376 = pneg %p184
      %p377 = pneg %p208
      %p378 = pneg %p205
      %p379 = pneg %p229
      %p380 = pneg %p226
      %p381 = pneg %p250
      %p382 = pneg %p247
      %p383 = pneg %p278
      %p384 = pneg %p275
      %s385 = smul.u32 32, %s26
      %p386 = scmp.lt.s32.totalorder %s25, 1
      %s387 = scalar_select %p386, %s25, 1
      %p388 = scmp.lt.s32.totalorder %s385, 31
      %s389 = scalar_select %p388, %s385, 31
      %s390 = smul.addr %s387, 32
      %s391 = sadd.s32 %s389, %s390
      %s392 = smul.addr %s391, 8
      %s393 = scalar_lea.vmem %s10, %s392
      %s394 = smul.u32 32, %s26
      %p395 = scmp.lt.s32.totalorder %s25, 1
      %s396 = scalar_select %p395, %s25, 1
      %p397 = scmp.lt.s32.totalorder %s394, 31
      %s398 = scalar_select %p397, %s394, 31
      %s399 = smul.addr %s396, 32
      %s400 = sadd.s32 %s398, %s399
      %s401 = smul.addr %s400, 4
      %s402 = scalar_lea.vmem %s0, %s401
      %s403 = smul.u32 32, %s26
      %p404 = scmp.lt.s32.totalorder %s25, 1
      %s405 = scalar_select %p404, %s25, 1
      %s406 = smul.addr %s405, 2
      %s407 = smul.addr %s406, 4
      %s408 = scalar_lea.vmem %s1, %s407
      %s409 = smul.u32 32, %s26
      %p410 = scmp.lt.s32.totalorder %s25, 1
      %s411 = scalar_select %p410, %s25, 1
      %p412 = scmp.lt.s32.totalorder %s409, 31
      %s413 = scalar_select %p412, %s409, 31
      %s414 = smul.addr %s411, 32
      %s415 = sadd.s32 %s413, %s414
      %s416 = smul.addr %s415, 8
      %s417 = scalar_lea.vmem %s10, %s416
      %s418 = smul.u32 32, %s26
      %p420 = scmp.eq.s32.totalorder %s26, 0
      // Predicated region
      $region61: #{attention_forward.1} parent=59 // pred_check
        %p421 = pneg %p420
      $region62: #{attention_forward.1} parent=59 // pred_check_branch
        %423 = sbr.rel (%p421) target = $region64
      $region63: #{attention_forward.1} parent=59 // pred_region
        %v424 = vld [vmem:[%s408] sm:$0xf]
        %v425 = vld [vmem:[%s408 + $0x4] sm:$0x3]
        %v426 = vunpack.c.l.bf16 %v424
        %v427 = vunpack.c.l.bf16 %v425
        %vm428 = vcmask 261120
        %v429 = vsel %vm428, %v426, 0.0
        %430 = vadd.xlane.f32.xlu0 %v429
        %v431 = vpop.xlane.xlu0 %430
        %vm432 = vcmask 257024
        %v433 = vsel %vm432, %v427, 0.0
        %434 = vadd.xlane.f32.xlu0 %v433
        %v435 = vpop.xlane.xlu0 %434
        %v436 = vrcp.pop 32.0
        %v437 = vmul.f32 %v431, %v436
        %v438 = vmul.f32 %v435, %v436
        %v439 = vsub.f32 %v426, %v437
        %v440 = vsub.f32 %v427, %v438
        %v441 = vmul.f32 %v439, %v439
        %v442 = vmul.f32 %v440, %v440
        %v443 = vsel %vm428, %v441, 0.0
        %444 = vadd.xlane.f32.xlu0 %v443
        %v445 = vpop.xlane.xlu0 %444
        %v446 = vsel %vm432, %v442, 0.0
        %447 = vadd.xlane.f32.xlu0 %v446
        %v448 = vpop.xlane.xlu0 %447
        %v449 = vmul.f32 %v445, %v436
        %v450 = vmul.f32 %v448, %v436
        %v451 = vadd.f32 %v449, 1e-05
        %v452 = vadd.f32 %v450, 1e-05
        %v453 = vrsqrt.pop %v451
        %v454 = vrsqrt.pop %v452
        %v455 = vmul.f32 %v439, %v453
        %v456 = vmul.f32 %v440, %v454
        %v457 = vld [vmem:[%s2] sm:$0x1]
        %v459 = vlaneseq
        %v460 = vshrl.u32 %v459, 7
        %v461 = vsub.s32 0, %v460
        %v462 = vrot.slane %v457, %v461
        %v464 = vmul.f32 %v455, %v462
        %v465 = vmul.f32 %v456, %v462
        %v466 = vld [vmem:[%s3] sm:$0x1]
        %v468 = vlaneseq
        %v469 = vshrl.u32 %v468, 7
        %v470 = vsub.s32 0, %v469
        %v471 = vrot.slane %v466, %v470
        %v473 = vadd.f32 %v464, %v471
        %v474 = vadd.f32 %v465, %v471
        %v475 = vpack.c.bf16 %v474, %v473
        %v476 = vld [vmem:[%s5] sm:$0xf]
        %v477 = vld [vmem:[%s5 + $0x4] sm:$0xf]
        %v478 = vld [vmem:[%s5 + $0x8] sm:$0xf]
        %v479 = vld [vmem:[%s5 + $0xc] sm:$0xf]
        %v484 = vunpack.c.l.b16 %v476
        %v485 = vunpack.c.l.b16 %v477
        %v486 = vunpack.c.l.b16 %v478
        %v487 = vunpack.c.l.b16 %v479
        %v488 = vpack.c.b16 %v485, %v484
        %v489 = vpack.c.b16 %v487, %v486
        %v493 = vsel %vm428, %v475, 0
        %495 = vmatprep.subr.bf16.mxu0 0
        %496 = vmatpush1.bf16.msra.mxu0 %v488
        %497 = vmatprep.subr.bf16.mxu0 0
        %498 = vmatpush1.bf16.msra.mxu0 %v489
        %499 = vmatprep.subr.bf16.mxu0 0
        %500 = vmatpush1.bf16.msra.mxu0 0
        %501 = vmatprep.subr.bf16.mxu0 0
        %502 = vmatpush1.bf16.msra.mxu0 0
        %503 = vmatprep.subr.bf16.mxu0 0
        %504 = vmatpush1.bf16.msra.mxu0 0
        %505 = vmatprep.subr.bf16.mxu0 0
        %506 = vmatpush1.bf16.msra.mxu0 0
        %507 = vmatprep.subr.bf16.mxu0 0
        %508 = vmatpush1.bf16.msra.mxu0 0
        %509 = vmatprep.subr.bf16.mxu0 0
        %510 = vmatpush1.bf16.msra.mxu0 0
        %511 = vmatprep.subr.bf16.mxu0 0
        %512 = vmatpush1.bf16.msra.mxu0 0
        %513 = vmatprep.subr.bf16.mxu0 0
        %514 = vmatpush1.bf16.msra.mxu0 0
        %515 = vmatprep.subr.bf16.mxu0 0
        %516 = vmatpush1.bf16.msra.mxu0 0
        %517 = vmatprep.subr.bf16.mxu0 0
        %518 = vmatpush1.bf16.msra.mxu0 0
        %519 = vmatprep.subr.bf16.mxu0 0
        %520 = vmatpush1.bf16.msra.mxu0 0
        %521 = vmatprep.subr.bf16.mxu0 0
        %522 = vmatpush1.bf16.msra.mxu0 0
        %523 = vmatprep.subr.bf16.mxu0 0
        %524 = vmatpush1.bf16.msra.mxu0 0
        %525 = vmatprep.subr.bf16.mxu0 0
        %526 = vmatpush1.bf16.msra.mxu0 0
        %527 = vmatprep.mubr.bf16.mxu0 0
        %528 = vmatmul.mubr.bf16.gmra.mrb[0].mxu0 %v493
        %v529 = vpop.f32.mrb[0].mxu0
        %v530 = vadd.f32 0.0, %v529
        %v531 = vpop.f32.mrb[0].mxu0
        %v532 = vpop.f32.mrb[0].mxu0
        %v533 = vadd.f32 0.0, %v532
        %v534 = vpop.f32.mrb[0].mxu0
        %535 = vdwg.mxu0
        %v536 = vpack.c.bf16 %v533, %v530
        %v537 = vld [vmem:[%s6] sm:$0xf]
        %v538 = vld [vmem:[%s6 + $0x4] sm:$0xf]
        %v539 = vld [vmem:[%s6 + $0x8] sm:$0xf]
        %v540 = vld [vmem:[%s6 + $0xc] sm:$0xf]
        %v545 = vunpack.c.l.b16 %v537
        %v546 = vunpack.c.l.b16 %v538
        %v547 = vunpack.c.l.b16 %v539
        %v548 = vunpack.c.l.b16 %v540
        %v549 = vpack.c.b16 %v546, %v545
        %v550 = vpack.c.b16 %v548, %v547
        %553 = vmatprep.subr.bf16.mxu0 0
        %554 = vmatpush1.bf16.msra.mxu0 %v549
        %555 = vmatprep.subr.bf16.mxu0 0
        %556 = vmatpush1.bf16.msra.mxu0 %v550
        %557 = vmatprep.subr.bf16.mxu0 0
        %558 = vmatpush1.bf16.msra.mxu0 0
        %559 = vmatprep.subr.bf16.mxu0 0
        %560 = vmatpush1.bf16.msra.mxu0 0
        %561 = vmatprep.subr.bf16.mxu0 0
        %562 = vmatpush1.bf16.msra.mxu0 0
        %563 = vmatprep.subr.bf16.mxu0 0
        %564 = vmatpush1.bf16.msra.mxu0 0
        %565 = vmatprep.subr.bf16.mxu0 0
        %566 = vmatpush1.bf16.msra.mxu0 0
        %567 = vmatprep.subr.bf16.mxu0 0
        %568 = vmatpush1.bf16.msra.mxu0 0
        %569 = vmatprep.subr.bf16.mxu0 0
        %570 = vmatpush1.bf16.msra.mxu0 0
        %571 = vmatprep.subr.bf16.mxu0 0
        %572 = vmatpush1.bf16.msra.mxu0 0
        %573 = vmatprep.subr.bf16.mxu0 0
        %574 = vmatpush1.bf16.msra.mxu0 0
        %575 = vmatprep.subr.bf16.mxu0 0
        %576 = vmatpush1.bf16.msra.mxu0 0
        %577 = vmatprep.subr.bf16.mxu0 0
        %578 = vmatpush1.bf16.msra.mxu0 0
        %579 = vmatprep.subr.bf16.mxu0 0
        %580 = vmatpush1.bf16.msra.mxu0 0
        %581 = vmatprep.subr.bf16.mxu0 0
        %582 = vmatpush1.bf16.msra.mxu0 0
        %583 = vmatprep.subr.bf16.mxu0 0
        %584 = vmatpush1.bf16.msra.mxu0 0
        %585 = vmatprep.mubr.bf16.mxu0 0
        %586 = vmatmul.mubr.bf16.gmra.mrb[0].mxu0 %v493
        %v587 = vpop.f32.mrb[0].mxu0
        %v588 = vadd.f32 0.0, %v587
        %v589 = vpop.f32.mrb[0].mxu0
        %v590 = vpop.f32.mrb[0].mxu0
        %v591 = vadd.f32 0.0, %v590
        %v592 = vpop.f32.mrb[0].mxu0
        %593 = vdwg.mxu0
        %v594 = vpack.c.bf16 %v591, %v588
        %v595 = vld [vmem:[%s8] sm:$0xf]
        %v596 = vld [vmem:[%s8 + $0x4] sm:$0xf]
        %v597 = vld [vmem:[%s8 + $0x8] sm:$0xf]
        %v598 = vld [vmem:[%s8 + $0xc] sm:$0xf]
        %v599 = vld [vmem:[%s8 + $0x10] sm:$0xf]
        %v600 = vld [vmem:[%s8 + $0x14] sm:$0xf]
        %v601 = vunpack.c.l.bf16 %v595
        %v602 = vunpack.c.l.bf16 %v596
        %v603 = vunpack.c.l.bf16 %v597
        %v604 = vunpack.c.l.bf16 %v598
        %v605 = vunpack.c.l.bf16 %v599
        %v606 = vunpack.c.l.bf16 %v600
        %v607 = vld [vmem:[%s9] sm:$0xf]
        %v608 = vld [vmem:[%s9 + $0x4] sm:$0xf]
        %v609 = vld [vmem:[%s9 + $0x8] sm:$0xf]
        %v610 = vld [vmem:[%s9 + $0xc] sm:$0xf]
        %v611 = vld [vmem:[%s9 + $0x10] sm:$0xf]
        %v612 = vld [vmem:[%s9 + $0x14] sm:$0xf]
        %v619 = vunpack.c.l.b16 %v607
        %v620 = vunpack.c.l.b16 %v608
        %v621 = vunpack.c.l.b16 %v609
        %v622 = vunpack.c.l.b16 %v610
        %v623 = vunpack.c.l.b16 %v611
        %v624 = vunpack.c.l.b16 %v612
        %v625 = vpack.c.b16 %v620, %v619
        %v626 = vpack.c.b16 %v622, %v621
        %v627 = vpack.c.b16 %v624, %v623
        %vm628 = vcmask 97280
        %v630 = vsel %vm628, %v625, 0
        %v633 = vsel %vm628, %v626, 0
        %v636 = vsel %vm628, %v627, 0
        %vm638 = vcmask 1045504
        %v640 = vsel %vm638, %v536, 0
        %642 = vmatprep.subr.bf16.mxu0 0
        %643 = vmatpush1.bf16.msra.mxu0 %v640
        %644 = vmatprep.subr.bf16.mxu0 0
        %645 = vmatpush1.bf16.msra.mxu0 0
        %646 = vmatprep.subr.bf16.mxu0 0
        %647 = vmatpush1.bf16.msra.mxu0 0
        %648 = vmatprep.subr.bf16.mxu0 0
        %649 = vmatpush1.bf16.msra.mxu0 0
        %650 = vmatprep.subr.bf16.mxu0 0
        %651 = vmatpush1.bf16.msra.mxu0 0
        %652 = vmatprep.subr.bf16.mxu0 0
        %653 = vmatpush1.bf16.msra.mxu0 0
        %654 = vmatprep.subr.bf16.mxu0 0
        %655 = vmatpush1.bf16.msra.mxu0 0
        %656 = vmatprep.subr.bf16.mxu0 0
        %657 = vmatpush1.bf16.msra.mxu0 0
        %658 = vmatprep.subr.bf16.mxu0 0
        %659 = vmatpush1.bf16.msra.mxu0 0
        %660 = vmatprep.subr.bf16.mxu0 0
        %661 = vmatpush1.bf16.msra.mxu0 0
        %662 = vmatprep.subr.bf16.mxu0 0
        %663 = vmatpush1.bf16.msra.mxu0 0
        %664 = vmatprep.subr.bf16.mxu0 0
        %665 = vmatpush1.bf16.msra.mxu0 0
        %666 = vmatprep.subr.bf16.mxu0 0
        %667 = vmatpush1.bf16.msra.mxu0 0
        %668 = vmatprep.subr.bf16.mxu0 0
        %669 = vmatpush1.bf16.msra.mxu0 0
        %670 = vmatprep.subr.bf16.mxu0 0
        %671 = vmatpush1.bf16.msra.mxu0 0
        %672 = vmatprep.subr.bf16.mxu0 0
        %673 = vmatpush1.bf16.msra.mxu0 0
        %674 = vmatprep.mubr.bf16.mxu0 0
        %675 = vmatmul.mubr.bf16.gmra.mrb[0].mxu0 %v630
        %v676 = vpop.f32.mrb[0].mxu0
        %v677 = vadd.f32 0.0, %v676
        %v678 = vpop.f32.mrb[0].mxu0
        %v679 = vpop.f32.mrb[0].mxu0
        %v680 = vadd.f32 0.0, %v679
        %v681 = vpop.f32.mrb[0].mxu0
        %682 = vmatprep.mubr.bf16.mxu0 0
        %683 = vmatmul.mubr.bf16.gmra.mrb[0].mxu0 %v633
        %v684 = vpop.f32.mrb[0].mxu0
        %v685 = vadd.f32 0.0, %v684
        %v686 = vpop.f32.mrb[0].mxu0
        %v687 = vpop.f32.mrb[0].mxu0
        %v688 = vadd.f32 0.0, %v687
        %v689 = vpop.f32.mrb[0].mxu0
        %690 = vmatprep.mubr.bf16.mxu0 0
        %691 = vmatmul.mubr.bf16.gmra.mrb[0].mxu0 %v636
        %v692 = vpop.f32.mrb[0].mxu0
        %v693 = vadd.f32 0.0, %v692
        %v694 = vpop.f32.mrb[0].mxu0
        %v695 = vpop.f32.mrb[0].mxu0
        %v696 = vadd.f32 0.0, %v695
        %v697 = vpop.f32.mrb[0].mxu0
        %698 = vdwg.mxu0
        %v699 = vmul.f32 %v677, %v601
        %v700 = vmul.f32 %v680, %v602
        %v701 = vmul.f32 %v685, %v603
        %v702 = vmul.f32 %v688, %v604
        %v703 = vmul.f32 %v693, %v605
        %v704 = vmul.f32 %v696, %v606
        %v705 = vpack.c.bf16 %v700, %v699
        %v706 = vpack.c.bf16 %v702, %v701
        %v707 = vpack.c.bf16 %v704, %v703
        %708 = vst.msk [vmem:[#allocation2] sm:$0xff] %vm428, %v705
        %709 = vst.msk [vmem:[#allocation2 + $0x8] sm:$0xff] %vm428, %v706
        %710 = vst.msk [vmem:[#allocation2 + $0x10] sm:$0xff] %vm428, %v707
        %v712 = vsel %vm638, %v594, 0
        %714 = vmatprep.subr.bf16.mxu0 0
        %715 = vmatpush1.bf16.msra.mxu0 %v712
        %716 = vmatprep.subr.bf16.mxu0 0
        %717 = vmatpush1.bf16.msra.mxu0 0
        %718 = vmatprep.subr.bf16.mxu0 0
        %719 = vmatpush1.bf16.msra.mxu0 0
        %720 = vmatprep.subr.bf16.mxu0 0
        %721 = vmatpush1.bf16.msra.mxu0 0
        %722 = vmatprep.subr.bf16.mxu0 0
        %723 = vmatpush1.bf16.msra.mxu0 0
        %724 = vmatprep.subr.bf16.mxu0 0
        %725 = vmatpush1.bf16.msra.mxu0 0
        %726 = vmatprep.subr.bf16.mxu0 0
        %727 = vmatpush1.bf16.msra.mxu0 0
        %728 = vmatprep.subr.bf16.mxu0 0
        %729 = vmatpush1.bf16.msra.mxu0 0
        %730 = vmatprep.subr.bf16.mxu0 0
        %731 = vmatpush1.bf16.msra.mxu0 0
        %732 = vmatprep.subr.bf16.mxu0 0
        %733 = vmatpush1.bf16.msra.mxu0 0
        %734 = vmatprep.subr.bf16.mxu0 0
        %735 = vmatpush1.bf16.msra.mxu0 0
        %736 = vmatprep.subr.bf16.mxu0 0
        %737 = vmatpush1.bf16.msra.mxu0 0
        %738 = vmatprep.subr.bf16.mxu0 0
        %739 = vmatpush1.bf16.msra.mxu0 0
        %740 = vmatprep.subr.bf16.mxu0 0
        %741 = vmatpush1.bf16.msra.mxu0 0
        %742 = vmatprep.subr.bf16.mxu0 0
        %743 = vmatpush1.bf16.msra.mxu0 0
        %744 = vmatprep.subr.bf16.mxu0 0
        %745 = vmatpush1.bf16.msra.mxu0 0
        %746 = vmatprep.mubr.bf16.mxu0 0
        %747 = vmatmul.mubr.bf16.gmra.mrb[0].mxu0 %v630
        %v748 = vpop.f32.mrb[0].mxu0
        %v749 = vadd.f32 0.0, %v748
        %v750 = vpop.f32.mrb[0].mxu0
        %v751 = vpop.f32.mrb[0].mxu0
        %v752 = vadd.f32 0.0, %v751
        %v753 = vpop.f32.mrb[0].mxu0
        %754 = vmatprep.mubr.bf16.mxu0 0
        %755 = vmatmul.mubr.bf16.gmra.mrb[0].mxu0 %v633
        %v756 = vpop.f32.mrb[0].mxu0
        %v757 = vadd.f32 0.0, %v756
        %v758 = vpop.f32.mrb[0].mxu0
        %v759 = vpop.f32.mrb[0].mxu0
        %v760 = vadd.f32 0.0, %v759
        %v761 = vpop.f32.mrb[0].mxu0
        %762 = vmatprep.mubr.bf16.mxu0 0
        %763 = vmatmul.mubr.bf16.gmra.mrb[0].mxu0 %v636
        %v764 = vpop.f32.mrb[0].mxu0
        %v765 = vadd.f32 0.0, %v764
        %v766 = vpop.f32.mrb[0].mxu0
        %v767 = vpop.f32.mrb[0].mxu0
        %v768 = vadd.f32 0.0, %v767
        %v769 = vpop.f32.mrb[0].mxu0
        %770 = vdwg.mxu0
        %v771 = vmul.f32 %v749, %v601
        %v772 = vmul.f32 %v752, %v602
        %v773 = vmul.f32 %v757, %v603
        %v774 = vmul.f32 %v760, %v604
        %v775 = vmul.f32 %v765, %v605
        %v776 = vmul.f32 %v768, %v606
        %v777 = vpack.c.bf16 %v772, %v771
        %v778 = vpack.c.bf16 %v774, %v773
        %v779 = vpack.c.bf16 %v776, %v775
        %s780 = scalar_lea.vmem [#allocation2], 24
        %781 = vst.msk [vmem:[%s780] sm:$0xff] %vm428, %v777
        %782 = vst.msk [vmem:[%s780 + $0x8] sm:$0xff] %vm428, %v778
        %783 = vst.msk [vmem:[%s780 + $0x10] sm:$0xff] %vm428, %v779
      $region64: #{attention_forward.1} parent=59 // pred_fallthru
        _
      %v784 = vld [vmem:[%s402] sm:$0xf]
      %v785 = vld [vmem:[%s402 + $0x4] sm:$0xf]
      %v786 = vld [vmem:[%s402 + $0x8] sm:$0xf]
      %v787 = vld [vmem:[%s402 + $0xc] sm:$0xf]
      %v788 = vld [vmem:[%s402 + $0x10] sm:$0xf]
      %v789 = vld [vmem:[%s402 + $0x14] sm:$0xf]
      %v790 = vld [vmem:[%s402 + $0x18] sm:$0xf]
      %v791 = vld [vmem:[%s402 + $0x1c] sm:$0xf]
      %v792 = vld [vmem:[%s402 + $0x20] sm:$0xf]
      %v793 = vld [vmem:[%s402 + $0x24] sm:$0xf]
      %v794 = vld [vmem:[%s402 + $0x28] sm:$0xf]
      %v795 = vld [vmem:[%s402 + $0x2c] sm:$0xf]
      %v796 = vld [vmem:[%s402 + $0x30] sm:$0xf]
      %v797 = vld [vmem:[%s402 + $0x34] sm:$0xf]
      %v798 = vld [vmem:[%s402 + $0x38] sm:$0xf]
      %v799 = vld [vmem:[%s402 + $0x3c] sm:$0xf]
      %v800 = vld [vmem:[%s402 + $0x40] sm:$0xf]
      %v801 = vld [vmem:[%s402 + $0x44] sm:$0xf]
      %v802 = vld [vmem:[%s402 + $0x48] sm:$0xf]
      %v803 = vld [vmem:[%s402 + $0x4c] sm:$0xf]
      %v804 = vld [vmem:[%s402 + $0x50] sm:$0xf]
      %v805 = vld [vmem:[%s402 + $0x54] sm:$0xf]
      %v806 = vld [vmem:[%s402 + $0x58] sm:$0xf]
      %v807 = vld [vmem:[%s402 + $0x5c] sm:$0xf]
      %v808 = vld [vmem:[%s402 + $0x60] sm:$0xf]
      %v809 = vld [vmem:[%s402 + $0x64] sm:$0xf]
      %v810 = vld [vmem:[%s402 + $0x68] sm:$0xf]
      %v811 = vld [vmem:[%s402 + $0x6c] sm:$0xf]
      %v812 = vld [vmem:[%s402 + $0x70] sm:$0xf]
      %v813 = vld [vmem:[%s402 + $0x74] sm:$0xf]
      %v814 = vld [vmem:[%s402 + $0x78] sm:$0xf]
      %v815 = vld [vmem:[%s402 + $0x7c] sm:$0xf]
      %v816 = vld [vmem:[%s4] sm:$0xf]
      %v817 = vld [vmem:[%s4 + $0x4] sm:$0xf]
      %v818 = vld [vmem:[%s4 + $0x8] sm:$0xf]
      %v819 = vld [vmem:[%s4 + $0xc] sm:$0xf]
      %v852 = vunpack.c.l.b16 %v784
      %v853 = vunpack.c.l.b16 %v785
      %v854 = vunpack.c.l.b16 %v786
      %v855 = vunpack.c.l.b16 %v787
      %v856 = vunpack.c.l.b16 %v788
      %v857 = vunpack.c.l.b16 %v789
      %v858 = vunpack.c.l.b16 %v790
      %v859 = vunpack.c.l.b16 %v791
      %v860 = vunpack.c.l.b16 %v792
      %v861 = vunpack.c.l.b16 %v793
      %v862 = vunpack.c.l.b16 %v794
      %v863 = vunpack.c.l.b16 %v795
      %v864 = vunpack.c.l.b16 %v796
      %v865 = vunpack.c.l.b16 %v797
      %v866 = vunpack.c.l.b16 %v798
      %v867 = vunpack.c.l.b16 %v799
      %v868 = vunpack.c.l.b16 %v800
      %v869 = vunpack.c.l.b16 %v801
      %v870 = vunpack.c.l.b16 %v802
      %v871 = vunpack.c.l.b16 %v803
      %v872 = vunpack.c.l.b16 %v804
      %v873 = vunpack.c.l.b16 %v805
      %v874 = vunpack.c.l.b16 %v806
      %v875 = vunpack.c.l.b16 %v807
      %v876 = vunpack.c.l.b16 %v808
      %v877 = vunpack.c.l.b16 %v809
      %v878 = vunpack.c.l.b16 %v810
      %v879 = vunpack.c.l.b16 %v811
      %v880 = vunpack.c.l.b16 %v812
      %v881 = vunpack.c.l.b16 %v813
      %v882 = vunpack.c.l.b16 %v814
      %v883 = vunpack.c.l.b16 %v815
      %v884 = vpack.c.b16 %v853, %v852
      %v885 = vpack.c.b16 %v855, %v854
      %v886 = vpack.c.b16 %v857, %v856
      %v887 = vpack.c.b16 %v859, %v858
      %v888 = vpack.c.b16 %v861, %v860
      %v889 = vpack.c.b16 %v863, %v862
      %v890 = vpack.c.b16 %v865, %v864
      %v891 = vpack.c.b16 %v867, %v866
      %v892 = vpack.c.b16 %v869, %v868
      %v893 = vpack.c.b16 %v871, %v870
      %v894 = vpack.c.b16 %v873, %v872
      %v895 = vpack.c.b16 %v875, %v874
      %v896 = vpack.c.b16 %v877, %v876
      %v897 = vpack.c.b16 %v879, %v878
      %v898 = vpack.c.b16 %v881, %v880
      %v899 = vpack.c.b16 %v883, %v882
      %v904 = vunpack.c.l.b16 %v816
      %v905 = vunpack.c.l.b16 %v817
      %v906 = vunpack.c.l.b16 %v818
      %v907 = vunpack.c.l.b16 %v819
      %v908 = vpack.c.b16 %v905, %v904
      %v909 = vpack.c.b16 %v907, %v906
      %vm912 = vcmask 261120
      %v914 = vsel %vm912, %v884, 0
      %v917 = vsel %vm912, %v885, 0
      %v920 = vsel %vm912, %v886, 0
      %v923 = vsel %vm912, %v887, 0
      %v926 = vsel %vm912, %v888, 0
      %v929 = vsel %vm912, %v889, 0
      %v932 = vsel %vm912, %v890, 0
      %v935 = vsel %vm912, %v891, 0
      %v938 = vsel %vm912, %v892, 0
      %v941 = vsel %vm912, %v893, 0
      %v944 = vsel %vm912, %v894, 0
      %v947 = vsel %vm912, %v895, 0
      %v950 = vsel %vm912, %v896, 0
      %v953 = vsel %vm912, %v897, 0
      %v956 = vsel %vm912, %v898, 0
      %v959 = vsel %vm912, %v899, 0
      %961 = vmatprep.subr.bf16.mxu0 0
      %962 = vmatpush1.bf16.msra.mxu0 %v908
      %963 = vmatprep.subr.bf16.mxu0 0
      %964 = vmatpush1.bf16.msra.mxu0 %v909
      %965 = vmatprep.subr.bf16.mxu0 0
      %966 = vmatpush1.bf16.msra.mxu0 0
      %967 = vmatprep.subr.bf16.mxu0 0
      %968 = vmatpush1.bf16.msra.mxu0 0
      %969 = vmatprep.subr.bf16.mxu0 0
      %970 = vmatpush1.bf16.msra.mxu0 0
      %971 = vmatprep.subr.bf16.mxu0 0
      %972 = vmatpush1.bf16.msra.mxu0 0
      %973 = vmatprep.subr.bf16.mxu0 0
      %974 = vmatpush1.bf16.msra.mxu0 0
      %975 = vmatprep.subr.bf16.mxu0 0
      %976 = vmatpush1.bf16.msra.mxu0 0
      %977 = vmatprep.subr.bf16.mxu0 0
      %978 = vmatpush1.bf16.msra.mxu0 0
      %979 = vmatprep.subr.bf16.mxu0 0
      %980 = vmatpush1.bf16.msra.mxu0 0
      %981 = vmatprep.subr.bf16.mxu0 0
      %982 = vmatpush1.bf16.msra.mxu0 0
      %983 = vmatprep.subr.bf16.mxu0 0
      %984 = vmatpush1.bf16.msra.mxu0 0
      %985 = vmatprep.subr.bf16.mxu0 0
      %986 = vmatpush1.bf16.msra.mxu0 0
      %987 = vmatprep.subr.bf16.mxu0 0
      %988 = vmatpush1.bf16.msra.mxu0 0
      %989 = vmatprep.subr.bf16.mxu0 0
      %990 = vmatpush1.bf16.msra.mxu0 0
      %991 = vmatprep.subr.bf16.mxu0 0
      %992 = vmatpush1.bf16.msra.mxu0 0
      %993 = vmatprep.mubr.bf16.mxu0 0
      %994 = vmatmul.mubr.bf16.gmra.mrb[0].mxu0 %v914
      %v995 = vpop.f32.mrb[0].mxu0
      %v996 = vadd.f32 0.0, %v995
      %v997 = vpop.f32.mrb[0].mxu0
      %v998 = vpop.f32.mrb[0].mxu0
      %v999 = vadd.f32 0.0, %v998
      %v1000 = vpop.f32.mrb[0].mxu0
      %1001 = vmatprep.mubr.bf16.mxu0 0
      %1002 = vmatmul.mubr.bf16.gmra.mrb[0].mxu0 %v917
      %v1003 = vpop.f32.mrb[0].mxu0
      %v1004 = vadd.f32 0.0, %v1003
      %v1005 = vpop.f32.mrb[0].mxu0
      %v1006 = vpop.f32.mrb[0].mxu0
      %v1007 = vadd.f32 0.0, %v1006
      %v1008 = vpop.f32.mrb[0].mxu0
      %1009 = vmatprep.mubr.bf16.mxu0 0
      %1010 = vmatmul.mubr.bf16.gmra.mrb[0].mxu0 %v920
      %v1011 = vpop.f32.mrb[0].mxu0
      %v1012 = vadd.f32 0.0, %v1011
      %v1013 = vpop.f32.mrb[0].mxu0
      %v1014 = vpop.f32.mrb[0].mxu0
      %v1015 = vadd.f32 0.0, %v1014
      %v1016 = vpop.f32.mrb[0].mxu0
      %1017 = vmatprep.mubr.bf16.mxu0 0
      %1018 = vmatmul.mubr.bf16.gmra.mrb[0].mxu0 %v923
      %v1019 = vpop.f32.mrb[0].mxu0
      %v1020 = vadd.f32 0.0, %v1019
      %v1021 = vpop.f32.mrb[0].mxu0
      %v1022 = vpop.f32.mrb[0].mxu0
      %v1023 = vadd.f32 0.0, %v1022
      %v1024 = vpop.f32.mrb[0].mxu0
      %1025 = vmatprep.mubr.bf16.mxu0 0
      %1026 = vmatmul.mubr.bf16.gmra.mrb[0].mxu0 %v926
      %v1027 = vpop.f32.mrb[0].mxu0
      %v1028 = vadd.f32 0.0, %v1027
      %v1029 = vpop.f32.mrb[0].mxu0
      %v1030 = vpop.f32.mrb[0].mxu0
      %v1031 = vadd.f32 0.0, %v1030
      %v1032 = vpop.f32.mrb[0].mxu0
      %1033 = vmatprep.mubr.bf16.mxu0 0
      %1034 = vmatmul.mubr.bf16.gmra.mrb[0].mxu0 %v929
      %v1035 = vpop.f32.mrb[0].mxu0
      %v1036 = vadd.f32 0.0, %v1035
      %v1037 = vpop.f32.mrb[0].mxu0
      %v1038 = vpop.f32.mrb[0].mxu0
      %v1039 = vadd.f32 0.0, %v1038
      %v1040 = vpop.f32.mrb[0].mxu0
      %1041 = vmatprep.mubr.bf16.mxu0 0
      %1042 = vmatmul.mubr.bf16.gmra.mrb[0].mxu0 %v932
      %v1043 = vpop.f32.mrb[0].mxu0
      %v1044 = vadd.f32 0.0, %v1043
      %v1045 = vpop.f32.mrb[0].mxu0
      %v1046 = vpop.f32.mrb[0].mxu0
      %v1047 = vadd.f32 0.0, %v1046
      %v1048 = vpop.f32.mrb[0].mxu0
      %1049 = vmatprep.mubr.bf16.mxu0 0
      %1050 = vmatmul.mubr.bf16.gmra.mrb[0].mxu0 %v935
      %v1051 = vpop.f32.mrb[0].mxu0
      %v1052 = vadd.f32 0.0, %v1051
      %v1053 = vpop.f32.mrb[0].mxu0
      %v1054 = vpop.f32.mrb[0].mxu0
      %v1055 = vadd.f32 0.0, %v1054
      %v1056 = vpop.f32.mrb[0].mxu0
      %1057 = vmatprep.mubr.bf16.mxu0 0
      %1058 = vmatmul.mubr.bf16.gmra.mrb[0].mxu0 %v938
      %v1059 = vpop.f32.mrb[0].mxu0
      %v1060 = vadd.f32 0.0, %v1059
      %v1061 = vpop.f32.mrb[0].mxu0
      %v1062 = vpop.f32.mrb[0].mxu0
      %v1063 = vadd.f32 0.0, %v1062
      %v1064 = vpop.f32.mrb[0].mxu0
      %1065 = vmatprep.mubr.bf16.mxu0 0
      %1066 = vmatmul.mubr.bf16.gmra.mrb[0].mxu0 %v941
      %v1067 = vpop.f32.mrb[0].mxu0
      %v1068 = vadd.f32 0.0, %v1067
      %v1069 = vpop.f32.mrb[0].mxu0
      %v1070 = vpop.f32.mrb[0].mxu0
      %v1071 = vadd.f32 0.0, %v1070
      %v1072 = vpop.f32.mrb[0].mxu0
      %1073 = vmatprep.mubr.bf16.mxu0 0
      %1074 = vmatmul.mubr.bf16.gmra.mrb[0].mxu0 %v944
      %v1075 = vpop.f32.mrb[0].mxu0
      %v1076 = vadd.f32 0.0, %v1075
      %v1077 = vpop.f32.mrb[0].mxu0
      %v1078 = vpop.f32.mrb[0].mxu0
      %v1079 = vadd.f32 0.0, %v1078
      %v1080 = vpop.f32.mrb[0].mxu0
      %1081 = vmatprep.mubr.bf16.mxu0 0
      %1082 = vmatmul.mubr.bf16.gmra.mrb[0].mxu0 %v947
      %v1083 = vpop.f32.mrb[0].mxu0
      %v1084 = vadd.f32 0.0, %v1083
      %v1085 = vpop.f32.mrb[0].mxu0
      %v1086 = vpop.f32.mrb[0].mxu0
      %v1087 = vadd.f32 0.0, %v1086
      %v1088 = vpop.f32.mrb[0].mxu0
      %1089 = vmatprep.mubr.bf16.mxu0 0
      %1090 = vmatmul.mubr.bf16.gmra.mrb[0].mxu0 %v950
      %v1091 = vpop.f32.mrb[0].mxu0
      %v1092 = vadd.f32 0.0, %v1091
      %v1093 = vpop.f32.mrb[0].mxu0
      %v1094 = vpop.f32.mrb[0].mxu0
      %v1095 = vadd.f32 0.0, %v1094
      %v1096 = vpop.f32.mrb[0].mxu0
      %1097 = vmatprep.mubr.bf16.mxu0 0
      %1098 = vmatmul.mubr.bf16.gmra.mrb[0].mxu0 %v953
      %v1099 = vpop.f32.mrb[0].mxu0
      %v1100 = vadd.f32 0.0, %v1099
      %v1101 = vpop.f32.mrb[0].mxu0
      %v1102 = vpop.f32.mrb[0].mxu0
      %v1103 = vadd.f32 0.0, %v1102
      %v1104 = vpop.f32.mrb[0].mxu0
      %1105 = vmatprep.mubr.bf16.mxu0 0
      %1106 = vmatmul.mubr.bf16.gmra.mrb[0].mxu0 %v956
      %v1107 = vpop.f32.mrb[0].mxu0
      %v1108 = vadd.f32 0.0, %v1107
      %v1109 = vpop.f32.mrb[0].mxu0
      %v1110 = vpop.f32.mrb[0].mxu0
      %v1111 = vadd.f32 0.0, %v1110
      %v1112 = vpop.f32.mrb[0].mxu0
      %1113 = vmatprep.mubr.bf16.mxu0 0
      %1114 = vmatmul.mubr.bf16.gmra.mrb[0].mxu0 %v959
      %v1115 = vpop.f32.mrb[0].mxu0
      %v1116 = vadd.f32 0.0, %v1115
      %v1117 = vpop.f32.mrb[0].mxu0
      %v1118 = vpop.f32.mrb[0].mxu0
      %v1119 = vadd.f32 0.0, %v1118
      %v1120 = vpop.f32.mrb[0].mxu0
      %1121 = vdwg.mxu0
      %v1122 = vld [vmem:[#allocation2] sm:$0xff]
      %v1123 = vld [vmem:[#allocation2 + $0x8] sm:$0xff]
      %v1124 = vld [vmem:[#allocation2 + $0x10] sm:$0xff]
      %s1125 = scalar_lea.vmem [#allocation2], 24
      %v1126 = vld [vmem:[%s1125] sm:$0xff]
      %v1127 = vld [vmem:[%s1125 + $0x8] sm:$0xff]
      %v1128 = vld [vmem:[%s1125 + $0x10] sm:$0xff]
      %v1129 = vpack.c.bf16 %v999, %v996
      %v1130 = vpack.c.bf16 %v1007, %v1004
      %v1131 = vpack.c.bf16 %v1015, %v1012
      %v1132 = vpack.c.bf16 %v1023, %v1020
      %v1133 = vpack.c.bf16 %v1031, %v1028
      %v1134 = vpack.c.bf16 %v1039, %v1036
      %v1135 = vpack.c.bf16 %v1047, %v1044
      %v1136 = vpack.c.bf16 %v1055, %v1052
      %v1137 = vpack.c.bf16 %v1063, %v1060
      %v1138 = vpack.c.bf16 %v1071, %v1068
      %v1139 = vpack.c.bf16 %v1079, %v1076
      %v1140 = vpack.c.bf16 %v1087, %v1084
      %v1141 = vpack.c.bf16 %v1095, %v1092
      %v1142 = vpack.c.bf16 %v1103, %v1100
      %v1143 = vpack.c.bf16 %v1111, %v1108
      %v1144 = vpack.c.bf16 %v1119, %v1116
      %v1146 = vsel %vm912, %v1129, 0
      %v1149 = vsel %vm912, %v1130, 0
      %v1152 = vsel %vm912, %v1131, 0
      %v1155 = vsel %vm912, %v1132, 0
      %v1158 = vsel %vm912, %v1133, 0
      %v1161 = vsel %vm912, %v1134, 0
      %v1164 = vsel %vm912, %v1135, 0
      %v1167 = vsel %vm912, %v1136, 0
      %v1170 = vsel %vm912, %v1137, 0
      %v1173 = vsel %vm912, %v1138, 0
      %v1176 = vsel %vm912, %v1139, 0
      %v1179 = vsel %vm912, %v1140, 0
      %v1182 = vsel %vm912, %v1141, 0
      %v1185 = vsel %vm912, %v1142, 0
      %v1188 = vsel %vm912, %v1143, 0
      %v1191 = vsel %vm912, %v1144, 0
      %v1194 = vsel %vm912, %v1122, 0
      %v1197 = vsel %vm912, %v1123, 0
      %v1200 = vsel %vm912, %v1124, 0
      %1202 = vmatprep.subr.bf16.mxu0 0
      %1203 = vmatpush1.bf16.xpose.msra.mxu0 %v1194
      %1204 = vmatprep.subr.bf16.mxu0 0
      %1205 = vmatpush1.bf16.xpose.msra.mxu0 %v1197
      %1206 = vmatprep.subr.bf16.mxu0 0
      %1207 = vmatpush1.bf16.xpose.msra.mxu0 %v1200
      %1208 = vmatprep.subr.bf16.mxu0 0
      %1209 = vmatpush1.bf16.xpose.msra.mxu0 0
      %1210 = vmatprep.subr.bf16.mxu0 0
      %1211 = vmatpush1.bf16.xpose.msra.mxu0 0
      %1212 = vmatprep.subr.bf16.mxu0 0
      %1213 = vmatpush1.bf16.xpose.msra.mxu0 0
      %1214 = vmatprep.subr.bf16.mxu0 0
      %1215 = vmatpush1.bf16.xpose.msra.mxu0 0
      %1216 = vmatprep.subr.bf16.mxu0 0
      %1217 = vmatpush1.bf16.xpose.msra.mxu0 0
      %1218 = vmatprep.subr.bf16.mxu0 0
      %1219 = vmatpush1.bf16.xpose.msra.mxu0 0
      %1220 = vmatprep.subr.bf16.mxu0 0
      %1221 = vmatpush1.bf16.xpose.msra.mxu0 0
      %1222 = vmatprep.subr.bf16.mxu0 0
      %1223 = vmatpush1.bf16.xpose.msra.mxu0 0
      %1224 = vmatprep.subr.bf16.mxu0 0
      %1225 = vmatpush1.bf16.xpose.msra.mxu0 0
      %1226 = vmatprep.subr.bf16.mxu0 0
      %1227 = vmatpush1.bf16.xpose.msra.mxu0 0
      %1228 = vmatprep.subr.bf16.mxu0 0
      %1229 = vmatpush1.bf16.xpose.msra.mxu0 0
      %1230 = vmatprep.subr.bf16.mxu0 0
      %1231 = vmatpush1.bf16.xpose.msra.mxu0 0
      %1232 = vmatprep.subr.bf16.mxu0 0
      %1233 = vmatpush1.bf16.xpose.msra.mxu0 0
      %1234 = vmatprep.mubr.bf16.mxu0 0
      %1235 = vmatmul.mubr.bf16.gmra.mrb[0].mxu0 %v1146
      %v1236 = vpop.f32.mrb[0].mxu0
      %v1237 = vadd.f32 0.0, %v1236
      %v1238 = vpop.f32.mrb[0].mxu0
      %v1239 = vpop.f32.mrb[0].mxu0
      %v1240 = vadd.f32 0.0, %v1239
      %v1241 = vpop.f32.mrb[0].mxu0
      %1242 = vmatprep.mubr.bf16.mxu0 0
      %1243 = vmatmul.mubr.bf16.gmra.mrb[0].mxu0 %v1149
      %v1244 = vpop.f32.mrb[0].mxu0
      %v1245 = vadd.f32 0.0, %v1244
      %v1246 = vpop.f32.mrb[0].mxu0
      %v1247 = vpop.f32.mrb[0].mxu0
      %v1248 = vadd.f32 0.0, %v1247
      %v1249 = vpop.f32.mrb[0].mxu0
      %1250 = vmatprep.mubr.bf16.mxu0 0
      %1251 = vmatmul.mubr.bf16.gmra.mrb[0].mxu0 %v1152
      %v1252 = vpop.f32.mrb[0].mxu0
      %v1253 = vadd.f32 0.0, %v1252
      %v1254 = vpop.f32.mrb[0].mxu0
      %v1255 = vpop.f32.mrb[0].mxu0
      %v1256 = vadd.f32 0.0, %v1255
      %v1257 = vpop.f32.mrb[0].mxu0
      %1258 = vmatprep.mubr.bf16.mxu0 0
      %1259 = vmatmul.mubr.bf16.gmra.mrb[0].mxu0 %v1155
      %v1260 = vpop.f32.mrb[0].mxu0
      %v1261 = vadd.f32 0.0, %v1260
      %v1262 = vpop.f32.mrb[0].mxu0
      %v1263 = vpop.f32.mrb[0].mxu0
      %v1264 = vadd.f32 0.0, %v1263
      %v1265 = vpop.f32.mrb[0].mxu0
      %1266 = vmatprep.mubr.bf16.mxu0 0
      %1267 = vmatmul.mubr.bf16.gmra.mrb[0].mxu0 %v1158
      %v1268 = vpop.f32.mrb[0].mxu0
      %v1269 = vadd.f32 0.0, %v1268
      %v1270 = vpop.f32.mrb[0].mxu0
      %v1271 = vpop.f32.mrb[0].mxu0
      %v1272 = vadd.f32 0.0, %v1271
      %v1273 = vpop.f32.mrb[0].mxu0
      %1274 = vmatprep.mubr.bf16.mxu0 0
      %1275 = vmatmul.mubr.bf16.gmra.mrb[0].mxu0 %v1161
      %v1276 = vpop.f32.mrb[0].mxu0
      %v1277 = vadd.f32 0.0, %v1276
      %v1278 = vpop.f32.mrb[0].mxu0
      %v1279 = vpop.f32.mrb[0].mxu0
      %v1280 = vadd.f32 0.0, %v1279
      %v1281 = vpop.f32.mrb[0].mxu0
      %1282 = vmatprep.mubr.bf16.mxu0 0
      %1283 = vmatmul.mubr.bf16.gmra.mrb[0].mxu0 %v1164
      %v1284 = vpop.f32.mrb[0].mxu0
      %v1285 = vadd.f32 0.0, %v1284
      %v1286 = vpop.f32.mrb[0].mxu0
      %v1287 = vpop.f32.mrb[0].mxu0
      %v1288 = vadd.f32 0.0, %v1287
      %v1289 = vpop.f32.mrb[0].mxu0
      %1290 = vmatprep.mubr.bf16.mxu0 0
      %1291 = vmatmul.mubr.bf16.gmra.mrb[0].mxu0 %v1167
      %v1292 = vpop.f32.mrb[0].mxu0
      %v1293 = vadd.f32 0.0, %v1292
      %v1294 = vpop.f32.mrb[0].mxu0
      %v1295 = vpop.f32.mrb[0].mxu0
      %v1296 = vadd.f32 0.0, %v1295
      %v1297 = vpop.f32.mrb[0].mxu0
      %1298 = vmatprep.mubr.bf16.mxu0 0
      %1299 = vmatmul.mubr.bf16.gmra.mrb[0].mxu0 %v1170
      %v1300 = vpop.f32.mrb[0].mxu0
      %v1301 = vadd.f32 0.0, %v1300
      %v1302 = vpop.f32.mrb[0].mxu0
      %v1303 = vpop.f32.mrb[0].mxu0
      %v1304 = vadd.f32 0.0, %v1303
      %v1305 = vpop.f32.mrb[0].mxu0
      %1306 = vmatprep.mubr.bf16.mxu0 0
      %1307 = vmatmul.mubr.bf16.gmra.mrb[0].mxu0 %v1173
      %v1308 = vpop.f32.mrb[0].mxu0
      %v1309 = vadd.f32 0.0, %v1308
      %v1310 = vpop.f32.mrb[0].mxu0
      %v1311 = vpop.f32.mrb[0].mxu0
      %v1312 = vadd.f32 0.0, %v1311
      %v1313 = vpop.f32.mrb[0].mxu0
      %1314 = vmatprep.mubr.bf16.mxu0 0
      %1315 = vmatmul.mubr.bf16.gmra.mrb[0].mxu0 %v1176
      %v1316 = vpop.f32.mrb[0].mxu0
      %v1317 = vadd.f32 0.0, %v1316
      %v1318 = vpop.f32.mrb[0].mxu0
      %v1319 = vpop.f32.mrb[0].mxu0
      %v1320 = vadd.f32 0.0, %v1319
      %v1321 = vpop.f32.mrb[0].mxu0
      %1322 = vmatprep.mubr.bf16.mxu0 0
      %1323 = vmatmul.mubr.bf16.gmra.mrb[0].mxu0 %v1179
      %v1324 = vpop.f32.mrb[0].mxu0
      %v1325 = vadd.f32 0.0, %v1324
      %v1326 = vpop.f32.mrb[0].mxu0
      %v1327 = vpop.f32.mrb[0].mxu0
      %v1328 = vadd.f32 0.0, %v1327
      %v1329 = vpop.f32.mrb[0].mxu0
      %1330 = vmatprep.mubr.bf16.mxu0 0
      %1331 = vmatmul.mubr.bf16.gmra.mrb[0].mxu0 %v1182
      %v1332 = vpop.f32.mrb[0].mxu0
      %v1333 = vadd.f32 0.0, %v1332
      %v1334 = vpop.f32.mrb[0].mxu0
      %v1335 = vpop.f32.mrb[0].mxu0
      %v1336 = vadd.f32 0.0, %v1335
      %v1337 = vpop.f32.mrb[0].mxu0
      %1338 = vmatprep.mubr.bf16.mxu0 0
      %1339 = vmatmul.mubr.bf16.gmra.mrb[0].mxu0 %v1185
      %v1340 = vpop.f32.mrb[0].mxu0
      %v1341 = vadd.f32 0.0, %v1340
      %v1342 = vpop.f32.mrb[0].mxu0
      %v1343 = vpop.f32.mrb[0].mxu0
      %v1344 = vadd.f32 0.0, %v1343
      %v1345 = vpop.f32.mrb[0].mxu0
      %1346 = vmatprep.mubr.bf16.mxu0 0
      %1347 = vmatmul.mubr.bf16.gmra.mrb[0].mxu0 %v1188
      %v1348 = vpop.f32.mrb[0].mxu0
      %v1349 = vadd.f32 0.0, %v1348
      %v1350 = vpop.f32.mrb[0].mxu0
      %v1351 = vpop.f32.mrb[0].mxu0
      %v1352 = vadd.f32 0.0, %v1351
      %v1353 = vpop.f32.mrb[0].mxu0
      %1354 = vmatprep.mubr.bf16.mxu0 0
      %1355 = vmatmul.mubr.bf16.gmra.mrb[0].mxu0 %v1191
      %v1356 = vpop.f32.mrb[0].mxu0
      %v1357 = vadd.f32 0.0, %v1356
      %v1358 = vpop.f32.mrb[0].mxu0
      %v1359 = vpop.f32.mrb[0].mxu0
      %v1360 = vadd.f32 0.0, %v1359
      %v1361 = vpop.f32.mrb[0].mxu0
      %1362 = vdwg.mxu0
      %vm1363 = vcmask 392192
      %v1364 = vsel %vm1363, %v1237, -inf
      %1365 = vmax.xlane.f32.xlu0 %v1364
      %v1366 = vpop.xlane.xlu0 %1365
      %v1367 = vsel %vm1363, %v1240, -inf
      %1368 = vmax.xlane.f32.xlu0 %v1367
      %v1369 = vpop.xlane.xlu0 %1368
      %v1370 = vsel %vm1363, %v1245, -inf
      %1371 = vmax.xlane.f32.xlu0 %v1370
      %v1372 = vpop.xlane.xlu0 %1371
      %v1373 = vsel %vm1363, %v1248, -inf
      %1374 = vmax.xlane.f32.xlu0 %v1373
      %v1375 = vpop.xlane.xlu0 %1374
      %v1376 = vsel %vm1363, %v1253, -inf
      %1377 = vmax.xlane.f32.xlu0 %v1376
      %v1378 = vpop.xlane.xlu0 %1377
      %v1379 = vsel %vm1363, %v1256, -inf
      %1380 = vmax.xlane.f32.xlu0 %v1379
      %v1381 = vpop.xlane.xlu0 %1380
      %v1382 = vsel %vm1363, %v1261, -inf
      %1383 = vmax.xlane.f32.xlu0 %v1382
      %v1384 = vpop.xlane.xlu0 %1383
      %v1385 = vsel %vm1363, %v1264, -inf
      %1386 = vmax.xlane.f32.xlu0 %v1385
      %v1387 = vpop.xlane.xlu0 %1386
      %v1388 = vsel %vm1363, %v1269, -inf
      %1389 = vmax.xlane.f32.xlu0 %v1388
      %v1390 = vpop.xlane.xlu0 %1389
      %v1391 = vsel %vm1363, %v1272, -inf
      %1392 = vmax.xlane.f32.xlu0 %v1391
      %v1393 = vpop.xlane.xlu0 %1392
      %v1394 = vsel %vm1363, %v1277, -inf
      %1395 = vmax.xlane.f32.xlu0 %v1394
      %v1396 = vpop.xlane.xlu0 %1395
      %v1397 = vsel %vm1363, %v1280, -inf
      %1398 = vmax.xlane.f32.xlu0 %v1397
      %v1399 = vpop.xlane.xlu0 %1398
      %v1400 = vsel %vm1363, %v1285, -inf
      %1401 = vmax.xlane.f32.xlu0 %v1400
      %v1402 = vpop.xlane.xlu0 %1401
      %v1403 = vsel %vm1363, %v1288, -inf
      %1404 = vmax.xlane.f32.xlu0 %v1403
      %v1405 = vpop.xlane.xlu0 %1404
      %v1406 = vsel %vm1363, %v1293, -inf
      %1407 = vmax.xlane.f32.xlu0 %v1406
      %v1408 = vpop.xlane.xlu0 %1407
      %v1409 = vsel %vm1363, %v1296, -inf
      %1410 = vmax.xlane.f32.xlu0 %v1409
      %v1411 = vpop.xlane.xlu0 %1410
      %v1412 = vsel %vm1363, %v1301, -inf
      %1413 = vmax.xlane.f32.xlu0 %v1412
      %v1414 = vpop.xlane.xlu0 %1413
      %v1415 = vsel %vm1363, %v1304, -inf
      %1416 = vmax.xlane.f32.xlu0 %v1415
      %v1417 = vpop.xlane.xlu0 %1416
      %v1418 = vsel %vm1363, %v1309, -inf
      %1419 = vmax.xlane.f32.xlu0 %v1418
      %v1420 = vpop.xlane.xlu0 %1419
      %v1421 = vsel %vm1363, %v1312, -inf
      %1422 = vmax.xlane.f32.xlu0 %v1421
      %v1423 = vpop.xlane.xlu0 %1422
      %v1424 = vsel %vm1363, %v1317, -inf
      %1425 = vmax.xlane.f32.xlu0 %v1424
      %v1426 = vpop.xlane.xlu0 %1425
      %v1427 = vsel %vm1363, %v1320, -inf
      %1428 = vmax.xlane.f32.xlu0 %v1427
      %v1429 = vpop.xlane.xlu0 %1428
      %v1430 = vsel %vm1363, %v1325, -inf
      %1431 = vmax.xlane.f32.xlu0 %v1430
      %v1432 = vpop.xlane.xlu0 %1431
      %v1433 = vsel %vm1363, %v1328, -inf
      %1434 = vmax.xlane.f32.xlu0 %v1433
      %v1435 = vpop.xlane.xlu0 %1434
      %v1436 = vsel %vm1363, %v1333, -inf
      %1437 = vmax.xlane.f32.xlu0 %v1436
      %v1438 = vpop.xlane.xlu0 %1437
      %v1439 = vsel %vm1363, %v1336, -inf
      %1440 = vmax.xlane.f32.xlu0 %v1439
      %v1441 = vpop.xlane.xlu0 %1440
      %v1442 = vsel %vm1363, %v1341, -inf
      %1443 = vmax.xlane.f32.xlu0 %v1442
      %v1444 = vpop.xlane.xlu0 %1443
      %v1445 = vsel %vm1363, %v1344, -inf
      %1446 = vmax.xlane.f32.xlu0 %v1445
      %v1447 = vpop.xlane.xlu0 %1446
      %v1448 = vsel %vm1363, %v1349, -inf
      %1449 = vmax.xlane.f32.xlu0 %v1448
      %v1450 = vpop.xlane.xlu0 %1449
      %v1451 = vsel %vm1363, %v1352, -inf
      %1452 = vmax.xlane.f32.xlu0 %v1451
      %v1453 = vpop.xlane.xlu0 %1452
      %v1454 = vsel %vm1363, %v1357, -inf
      %1455 = vmax.xlane.f32.xlu0 %v1454
      %v1456 = vpop.xlane.xlu0 %1455
      %v1457 = vsel %vm1363, %v1360, -inf
      %1458 = vmax.xlane.f32.xlu0 %v1457
      %v1459 = vpop.xlane.xlu0 %1458
      %v1460 = vsub.f32 %v1237, %v1366
      %v1461 = vsub.f32 %v1240, %v1369
      %v1462 = vsub.f32 %v1245, %v1372
      %v1463 = vsub.f32 %v1248, %v1375
      %v1464 = vsub.f32 %v1253, %v1378
      %v1465 = vsub.f32 %v1256, %v1381
      %v1466 = vsub.f32 %v1261, %v1384
      %v1467 = vsub.f32 %v1264, %v1387
      %v1468 = vsub.f32 %v1269, %v1390
      %v1469 = vsub.f32 %v1272, %v1393
      %v1470 = vsub.f32 %v1277, %v1396
      %v1471 = vsub.f32 %v1280, %v1399
      %v1472 = vsub.f32 %v1285, %v1402
      %v1473 = vsub.f32 %v1288, %v1405
      %v1474 = vsub.f32 %v1293, %v1408
      %v1475 = vsub.f32 %v1296, %v1411
      %v1476 = vsub.f32 %v1301, %v1414
      %v1477 = vsub.f32 %v1304, %v1417
      %v1478 = vsub.f32 %v1309, %v1420
      %v1479 = vsub.f32 %v1312, %v1423
      %v1480 = vsub.f32 %v1317, %v1426
      %v1481 = vsub.f32 %v1320, %v1429
      %v1482 = vsub.f32 %v1325, %v1432
      %v1483 = vsub.f32 %v1328, %v1435
      %v1484 = vsub.f32 %v1333, %v1438
      %v1485 = vsub.f32 %v1336, %v1441
      %v1486 = vsub.f32 %v1341, %v1444
      %v1487 = vsub.f32 %v1344, %v1447
      %v1488 = vsub.f32 %v1349, %v1450
      %v1489 = vsub.f32 %v1352, %v1453
      %v1490 = vsub.f32 %v1357, %v1456
      %v1491 = vsub.f32 %v1360, %v1459
      %v1492 = vmul.f32 %v1460, 1.442695
      %v1493 = vpow.pop %v1492
      %v1494 = vmul.f32 %v1461, 1.442695
      %v1495 = vpow.pop %v1494
      %v1496 = vmul.f32 %v1462, 1.442695
      %v1497 = vpow.pop %v1496
      %v1498 = vmul.f32 %v1463, 1.442695
      %v1499 = vpow.pop %v1498
      %v1500 = vmul.f32 %v1464, 1.442695
      %v1501 = vpow.pop %v1500
      %v1502 = vmul.f32 %v1465, 1.442695
      %v1503 = vpow.pop %v1502
      %v1504 = vmul.f32 %v1466, 1.442695
      %v1505 = vpow.pop %v1504
      %v1506 = vmul.f32 %v1467, 1.442695
      %v1507 = vpow.pop %v1506
      %v1508 = vmul.f32 %v1468, 1.442695
      %v1509 = vpow.pop %v1508
      %v1510 = vmul.f32 %v1469, 1.442695
      %v1511 = vpow.pop %v1510
      %v1512 = vmul.f32 %v1470, 1.442695
      %v1513 = vpow.pop %v1512
      %v1514 = vmul.f32 %v1471, 1.442695
      %v1515 = vpow.pop %v1514
      %v1516 = vmul.f32 %v1472, 1.442695
      %v1517 = vpow.pop %v1516
      %v1518 = vmul.f32 %v1473, 1.442695
      %v1519 = vpow.pop %v1518
      %v1520 = vmul.f32 %v1474, 1.442695
      %v1521 = vpow.pop %v1520
      %v1522 = vmul.f32 %v1475, 1.442695
      %v1523 = vpow.pop %v1522
      %v1524 = vmul.f32 %v1476, 1.442695
      %v1525 = vpow.pop %v1524
      %v1526 = vmul.f32 %v1477, 1.442695
      %v1527 = vpow.pop %v1526
      %v1528 = vmul.f32 %v1478, 1.442695
      %v1529 = vpow.pop %v1528
      %v1530 = vmul.f32 %v1479, 1.442695
      %v1531 = vpow.pop %v1530
      %v1532 = vmul.f32 %v1480, 1.442695
      %v1533 = vpow.pop %v1532
      %v1534 = vmul.f32 %v1481, 1.442695
      %v1535 = vpow.pop %v1534
      %v1536 = vmul.f32 %v1482, 1.442695
      %v1537 = vpow.pop %v1536
      %v1538 = vmul.f32 %v1483, 1.442695
      %v1539 = vpow.pop %v1538
      %v1540 = vmul.f32 %v1484, 1.442695
      %v1541 = vpow.pop %v1540
      %v1542 = vmul.f32 %v1485, 1.442695
      %v1543 = vpow.pop %v1542
      %v1544 = vmul.f32 %v1486, 1.442695
      %v1545 = vpow.pop %v1544
      %v1546 = vmul.f32 %v1487, 1.442695
      %v1547 = vpow.pop %v1546
      %v1548 = vmul.f32 %v1488, 1.442695
      %v1549 = vpow.pop %v1548
      %v1550 = vmul.f32 %v1489, 1.442695
      %v1551 = vpow.pop %v1550
      %v1552 = vmul.f32 %v1490, 1.442695
      %v1553 = vpow.pop %v1552
      %v1554 = vmul.f32 %v1491, 1.442695
      %v1555 = vpow.pop %v1554
      %v1556 = vpack.c.bf16 %v1495, %v1493
      %v1557 = vpack.c.bf16 %v1499, %v1497
      %v1558 = vpack.c.bf16 %v1503, %v1501
      %v1559 = vpack.c.bf16 %v1507, %v1505
      %v1560 = vpack.c.bf16 %v1511, %v1509
      %v1561 = vpack.c.bf16 %v1515, %v1513
      %v1562 = vpack.c.bf16 %v1519, %v1517
      %v1563 = vpack.c.bf16 %v1523, %v1521
      %v1564 = vpack.c.bf16 %v1527, %v1525
      %v1565 = vpack.c.bf16 %v1531, %v1529
      %v1566 = vpack.c.bf16 %v1535, %v1533
      %v1567 = vpack.c.bf16 %v1539, %v1537
      %v1568 = vpack.c.bf16 %v1543, %v1541
      %v1569 = vpack.c.bf16 %v1547, %v1545
      %v1570 = vpack.c.bf16 %v1551, %v1549
      %v1571 = vpack.c.bf16 %v1555, %v1553
      %v1573 = vsel %vm1363, %v1556, 0
      %v1576 = vsel %vm1363, %v1557, 0
      %v1579 = vsel %vm1363, %v1558, 0
      %v1582 = vsel %vm1363, %v1559, 0
      %v1585 = vsel %vm1363, %v1560, 0
      %v1588 = vsel %vm1363, %v1561, 0
      %v1591 = vsel %vm1363, %v1562, 0
      %v1594 = vsel %vm1363, %v1563, 0
      %v1597 = vsel %vm1363, %v1564, 0
      %v1600 = vsel %vm1363, %v1565, 0
      %v1603 = vsel %vm1363, %v1566, 0
      %v1606 = vsel %vm1363, %v1567, 0
      %v1609 = vsel %vm1363, %v1568, 0
      %v1612 = vsel %vm1363, %v1569, 0
      %v1615 = vsel %vm1363, %v1570, 0
      %v1618 = vsel %vm1363, %v1571, 0
      %1620 = vmatprep.subr.bf16.mxu0 0
      %1621 = vmatpush1.bf16.msra.mxu0 %v1126
      %1622 = vmatprep.subr.bf16.mxu0 0
      %1623 = vmatpush1.bf16.msra.mxu0 %v1127
      %1624 = vmatprep.subr.bf16.mxu0 0
      %1625 = vmatpush1.bf16.msra.mxu0 %v1128
      %1626 = vmatprep.subr.bf16.mxu0 0
      %1627 = vmatpush1.bf16.msra.mxu0 0
      %1628 = vmatprep.subr.bf16.mxu0 0
      %1629 = vmatpush1.bf16.msra.mxu0 0
      %1630 = vmatprep.subr.bf16.mxu0 0
      %1631 = vmatpush1.bf16.msra.mxu0 0
      %1632 = vmatprep.subr.bf16.mxu0 0
      %1633 = vmatpush1.bf16.msra.mxu0 0
      %1634 = vmatprep.subr.bf16.mxu0 0
      %1635 = vmatpush1.bf16.msra.mxu0 0
      %1636 = vmatprep.subr.bf16.mxu0 0
      %1637 = vmatpush1.bf16.msra.mxu0 0
      %1638 = vmatprep.subr.bf16.mxu0 0
      %1639 = vmatpush1.bf16.msra.mxu0 0
      %1640 = vmatprep.subr.bf16.mxu0 0
      %1641 = vmatpush1.bf16.msra.mxu0 0
      %1642 = vmatprep.subr.bf16.mxu0 0
      %1643 = vmatpush1.bf16.msra.mxu0 0
      %1644 = vmatprep.subr.bf16.mxu0 0
      %1645 = vmatpush1.bf16.msra.mxu0 0
      %1646 = vmatprep.subr.bf16.mxu0 0
      %1647 = vmatpush1.bf16.msra.mxu0 0
      %1648 = vmatprep.subr.bf16.mxu0 0
      %1649 = vmatpush1.bf16.msra.mxu0 0
      %1650 = vmatprep.subr.bf16.mxu0 0
      %1651 = vmatpush1.bf16.msra.mxu0 0
      %1652 = vmatprep.mubr.bf16.mxu0 0
      %1653 = vmatmul.mubr.bf16.gmra.mrb[0].mxu0 %v1573
      %v1654 = vpop.f32.mrb[0].mxu0
      %v1655 = vadd.f32 0.0, %v1654
      %v1656 = vpop.f32.mrb[0].mxu0
      %v1657 = vpop.f32.mrb[0].mxu0
      %v1658 = vadd.f32 0.0, %v1657
      %v1659 = vpop.f32.mrb[0].mxu0
      %1660 = vmatprep.mubr.bf16.mxu0 0
      %1661 = vmatmul.mubr.bf16.gmra.mrb[0].mxu0 %v1576
      %v1662 = vpop.f32.mrb[0].mxu0
      %v1663 = vadd.f32 0.0, %v1662
      %v1664 = vpop.f32.mrb[0].mxu0
      %v1665 = vpop.f32.mrb[0].mxu0
      %v1666 = vadd.f32 0.0, %v1665
      %v1667 = vpop.f32.mrb[0].mxu0
      %1668 = vmatprep.mubr.bf16.mxu0 0
      %1669 = vmatmul.mubr.bf16.gmra.mrb[0].mxu0 %v1579
      %v1670 = vpop.f32.mrb[0].mxu0
      %v1671 = vadd.f32 0.0, %v1670
      %v1672 = vpop.f32.mrb[0].mxu0
      %v1673 = vpop.f32.mrb[0].mxu0
      %v1674 = vadd.f32 0.0, %v1673
      %v1675 = vpop.f32.mrb[0].mxu0
      %1676 = vmatprep.mubr.bf16.mxu0 0
      %1677 = vmatmul.mubr.bf16.gmra.mrb[0].mxu0 %v1582
      %v1678 = vpop.f32.mrb[0].mxu0
      %v1679 = vadd.f32 0.0, %v1678
      %v1680 = vpop.f32.mrb[0].mxu0
      %v1681 = vpop.f32.mrb[0].mxu0
      %v1682 = vadd.f32 0.0, %v1681
      %v1683 = vpop.f32.mrb[0].mxu0
      %1684 = vmatprep.mubr.bf16.mxu0 0
      %1685 = vmatmul.mubr.bf16.gmra.mrb[0].mxu0 %v1585
      %v1686 = vpop.f32.mrb[0].mxu0
      %v1687 = vadd.f32 0.0, %v1686
      %v1688 = vpop.f32.mrb[0].mxu0
      %v1689 = vpop.f32.mrb[0].mxu0
      %v1690 = vadd.f32 0.0, %v1689
      %v1691 = vpop.f32.mrb[0].mxu0
      %1692 = vmatprep.mubr.bf16.mxu0 0
      %1693 = vmatmul.mubr.bf16.gmra.mrb[0].mxu0 %v1588
      %v1694 = vpop.f32.mrb[0].mxu0
      %v1695 = vadd.f32 0.0, %v1694
      %v1696 = vpop.f32.mrb[0].mxu0
      %v1697 = vpop.f32.mrb[0].mxu0
      %v1698 = vadd.f32 0.0, %v1697
      %v1699 = vpop.f32.mrb[0].mxu0
      %1700 = vmatprep.mubr.bf16.mxu0 0
      %1701 = vmatmul.mubr.bf16.gmra.mrb[0].mxu0 %v1591
      %v1702 = vpop.f32.mrb[0].mxu0
      %v1703 = vadd.f32 0.0, %v1702
      %v1704 = vpop.f32.mrb[0].mxu0
      %v1705 = vpop.f32.mrb[0].mxu0
      %v1706 = vadd.f32 0.0, %v1705
      %v1707 = vpop.f32.mrb[0].mxu0
      %1708 = vmatprep.mubr.bf16.mxu0 0
      %1709 = vmatmul.mubr.bf16.gmra.mrb[0].mxu0 %v1594
      %v1710 = vpop.f32.mrb[0].mxu0
      %v1711 = vadd.f32 0.0, %v1710
      %v1712 = vpop.f32.mrb[0].mxu0
      %v1713 = vpop.f32.mrb[0].mxu0
      %v1714 = vadd.f32 0.0, %v1713
      %v1715 = vpop.f32.mrb[0].mxu0
      %1716 = vmatprep.mubr.bf16.mxu0 0
      %1717 = vmatmul.mubr.bf16.gmra.mrb[0].mxu0 %v1597
      %v1718 = vpop.f32.mrb[0].mxu0
      %v1719 = vadd.f32 0.0, %v1718
      %v1720 = vpop.f32.mrb[0].mxu0
      %v1721 = vpop.f32.mrb[0].mxu0
      %v1722 = vadd.f32 0.0, %v1721
      %v1723 = vpop.f32.mrb[0].mxu0
      %1724 = vmatprep.mubr.bf16.mxu0 0
      %1725 = vmatmul.mubr.bf16.gmra.mrb[0].mxu0 %v1600
      %v1726 = vpop.f32.mrb[0].mxu0
      %v1727 = vadd.f32 0.0, %v1726
      %v1728 = vpop.f32.mrb[0].mxu0
      %v1729 = vpop.f32.mrb[0].mxu0
      %v1730 = vadd.f32 0.0, %v1729
      %v1731 = vpop.f32.mrb[0].mxu0
      %1732 = vmatprep.mubr.bf16.mxu0 0
      %1733 = vmatmul.mubr.bf16.gmra.mrb[0].mxu0 %v1603
      %v1734 = vpop.f32.mrb[0].mxu0
      %v1735 = vadd.f32 0.0, %v1734
      %v1736 = vpop.f32.mrb[0].mxu0
      %v1737 = vpop.f32.mrb[0].mxu0
      %v1738 = vadd.f32 0.0, %v1737
      %v1739 = vpop.f32.mrb[0].mxu0
      %1740 = vmatprep.mubr.bf16.mxu0 0
      %1741 = vmatmul.mubr.bf16.gmra.mrb[0].mxu0 %v1606
      %v1742 = vpop.f32.mrb[0].mxu0
      %v1743 = vadd.f32 0.0, %v1742
      %v1744 = vpop.f32.mrb[0].mxu0
      %v1745 = vpop.f32.mrb[0].mxu0
      %v1746 = vadd.f32 0.0, %v1745
      %v1747 = vpop.f32.mrb[0].mxu0
      %1748 = vmatprep.mubr.bf16.mxu0 0
      %1749 = vmatmul.mubr.bf16.gmra.mrb[0].mxu0 %v1609
      %v1750 = vpop.f32.mrb[0].mxu0
      %v1751 = vadd.f32 0.0, %v1750
      %v1752 = vpop.f32.mrb[0].mxu0
      %v1753 = vpop.f32.mrb[0].mxu0
      %v1754 = vadd.f32 0.0, %v1753
      %v1755 = vpop.f32.mrb[0].mxu0
      %1756 = vmatprep.mubr.bf16.mxu0 0
      %1757 = vmatmul.mubr.bf16.gmra.mrb[0].mxu0 %v1612
      %v1758 = vpop.f32.mrb[0].mxu0
      %v1759 = vadd.f32 0.0, %v1758
      %v1760 = vpop.f32.mrb[0].mxu0
      %v1761 = vpop.f32.mrb[0].mxu0
      %v1762 = vadd.f32 0.0, %v1761
      %v1763 = vpop.f32.mrb[0].mxu0
      %1764 = vmatprep.mubr.bf16.mxu0 0
      %1765 = vmatmul.mubr.bf16.gmra.mrb[0].mxu0 %v1615
      %v1766 = vpop.f32.mrb[0].mxu0
      %v1767 = vadd.f32 0.0, %v1766
      %v1768 = vpop.f32.mrb[0].mxu0
      %v1769 = vpop.f32.mrb[0].mxu0
      %v1770 = vadd.f32 0.0, %v1769
      %v1771 = vpop.f32.mrb[0].mxu0
      %1772 = vmatprep.mubr.bf16.mxu0 0
      %1773 = vmatmul.mubr.bf16.gmra.mrb[0].mxu0 %v1618
      %v1774 = vpop.f32.mrb[0].mxu0
      %v1775 = vadd.f32 0.0, %v1774
      %v1776 = vpop.f32.mrb[0].mxu0
      %v1777 = vpop.f32.mrb[0].mxu0
      %v1778 = vadd.f32 0.0, %v1777
      %v1779 = vpop.f32.mrb[0].mxu0
      %1780 = vdwg.mxu0
      %v1781 = vld [vmem:[%s8] sm:$0xf]
      %v1782 = vld [vmem:[%s8 + $0x4] sm:$0xf]
      %v1783 = vld [vmem:[%s8 + $0x8] sm:$0xf]
      %v1784 = vld [vmem:[%s8 + $0xc] sm:$0xf]
      %v1785 = vld [vmem:[%s8 + $0x10] sm:$0xf]
      %v1786 = vld [vmem:[%s8 + $0x14] sm:$0xf]
      %v1793 = vunpack.c.l.b16 %v1781
      %v1794 = vunpack.c.l.b16 %v1782
      %v1795 = vunpack.c.l.b16 %v1783
      %v1796 = vunpack.c.l.b16 %v1784
      %v1797 = vunpack.c.l.b16 %v1785
      %v1798 = vunpack.c.l.b16 %v1786
      %v1799 = vpack.c.b16 %v1794, %v1793
      %v1800 = vpack.c.b16 %v1796, %v1795
      %v1801 = vpack.c.b16 %v1798, %v1797
      %1805 = vmatprep.subr.bf16.mxu0 0
      %1806 = vmatpush1.bf16.msra.mxu0 %v1799
      %1807 = vmatprep.subr.bf16.mxu0 0
      %1808 = vmatpush1.bf16.msra.mxu0 %v1800
      %1809 = vmatprep.subr.bf16.mxu0 0
      %1810 = vmatpush1.bf16.msra.mxu0 %v1801
      %1811 = vmatprep.subr.bf16.mxu0 0
      %1812 = vmatpush1.bf16.msra.mxu0 0
      %1813 = vmatprep.subr.bf16.mxu0 0
      %1814 = vmatpush1.bf16.msra.mxu0 0
      %1815 = vmatprep.subr.bf16.mxu0 0
      %1816 = vmatpush1.bf16.msra.mxu0 0
      %1817 = vmatprep.subr.bf16.mxu0 0
      %1818 = vmatpush1.bf16.msra.mxu0 0
      %1819 = vmatprep.subr.bf16.mxu0 0
      %1820 = vmatpush1.bf16.msra.mxu0 0
      %1821 = vmatprep.subr.bf16.mxu0 0
      %1822 = vmatpush1.bf16.msra.mxu0 0
      %1823 = vmatprep.subr.bf16.mxu0 0
      %1824 = vmatpush1.bf16.msra.mxu0 0
      %1825 = vmatprep.subr.bf16.mxu0 0
      %1826 = vmatpush1.bf16.msra.mxu0 0
      %1827 = vmatprep.subr.bf16.mxu0 0
      %1828 = vmatpush1.bf16.msra.mxu0 0
      %1829 = vmatprep.subr.bf16.mxu0 0
      %1830 = vmatpush1.bf16.msra.mxu0 0
      %1831 = vmatprep.subr.bf16.mxu0 0
      %1832 = vmatpush1.bf16.msra.mxu0 0
      %1833 = vmatprep.subr.bf16.mxu0 0
      %1834 = vmatpush1.bf16.msra.mxu0 0
      %1835 = vmatprep.subr.bf16.mxu0 0
      %1836 = vmatpush1.bf16.msra.mxu0 0
      %1837 = vmatprep.mubr.bf16.mxu0 0
      %1838 = vmatmul.mubr.bf16.gmra.mrb[0].mxu0 %v1573
      %v1839 = vpop.f32.mrb[0].mxu0
      %v1840 = vadd.f32 0.0, %v1839
      %v1841 = vpop.f32.mrb[0].mxu0
      %v1842 = vpop.f32.mrb[0].mxu0
      %v1843 = vadd.f32 0.0, %v1842
      %v1844 = vpop.f32.mrb[0].mxu0
      %1845 = vmatprep.mubr.bf16.mxu0 0
      %1846 = vmatmul.mubr.bf16.gmra.mrb[0].mxu0 %v1576
      %v1847 = vpop.f32.mrb[0].mxu0
      %v1848 = vadd.f32 0.0, %v1847
      %v1849 = vpop.f32.mrb[0].mxu0
      %v1850 = vpop.f32.mrb[0].mxu0
      %v1851 = vadd.f32 0.0, %v1850
      %v1852 = vpop.f32.mrb[0].mxu0
      %1853 = vmatprep.mubr.bf16.mxu0 0
      %1854 = vmatmul.mubr.bf16.gmra.mrb[0].mxu0 %v1579
      %v1855 = vpop.f32.mrb[0].mxu0
      %v1856 = vadd.f32 0.0, %v1855
      %v1857 = vpop.f32.mrb[0].mxu0
      %v1858 = vpop.f32.mrb[0].mxu0
      %v1859 = vadd.f32 0.0, %v1858
      %v1860 = vpop.f32.mrb[0].mxu0
      %1861 = vmatprep.mubr.bf16.mxu0 0
      %1862 = vmatmul.mubr.bf16.gmra.mrb[0].mxu0 %v1582
      %v1863 = vpop.f32.mrb[0].mxu0
      %v1864 = vadd.f32 0.0, %v1863
      %v1865 = vpop.f32.mrb[0].mxu0
      %v1866 = vpop.f32.mrb[0].mxu0
      %v1867 = vadd.f32 0.0, %v1866
      %v1868 = vpop.f32.mrb[0].mxu0
      %1869 = vmatprep.mubr.bf16.mxu0 0
      %1870 = vmatmul.mubr.bf16.gmra.mrb[0].mxu0 %v1585
      %v1871 = vpop.f32.mrb[0].mxu0
      %v1872 = vadd.f32 0.0, %v1871
      %v1873 = vpop.f32.mrb[0].mxu0
      %v1874 = vpop.f32.mrb[0].mxu0
      %v1875 = vadd.f32 0.0, %v1874
      %v1876 = vpop.f32.mrb[0].mxu0
      %1877 = vmatprep.mubr.bf16.mxu0 0
      %1878 = vmatmul.mubr.bf16.gmra.mrb[0].mxu0 %v1588
      %v1879 = vpop.f32.mrb[0].mxu0
      %v1880 = vadd.f32 0.0, %v1879
      %v1881 = vpop.f32.mrb[0].mxu0
      %v1882 = vpop.f32.mrb[0].mxu0
      %v1883 = vadd.f32 0.0, %v1882
      %v1884 = vpop.f32.mrb[0].mxu0
      %1885 = vmatprep.mubr.bf16.mxu0 0
      %1886 = vmatmul.mubr.bf16.gmra.mrb[0].mxu0 %v1591
      %v1887 = vpop.f32.mrb[0].mxu0
      %v1888 = vadd.f32 0.0, %v1887
      %v1889 = vpop.f32.mrb[0].mxu0
      %v1890 = vpop.f32.mrb[0].mxu0
      %v1891 = vadd.f32 0.0, %v1890
      %v1892 = vpop.f32.mrb[0].mxu0
      %1893 = vmatprep.mubr.bf16.mxu0 0
      %1894 = vmatmul.mubr.bf16.gmra.mrb[0].mxu0 %v1594
      %v1895 = vpop.f32.mrb[0].mxu0
      %v1896 = vadd.f32 0.0, %v1895
      %v1897 = vpop.f32.mrb[0].mxu0
      %v1898 = vpop.f32.mrb[0].mxu0
      %v1899 = vadd.f32 0.0, %v1898
      %v1900 = vpop.f32.mrb[0].mxu0
      %1901 = vmatprep.mubr.bf16.mxu0 0
      %1902 = vmatmul.mubr.bf16.gmra.mrb[0].mxu0 %v1597
      %v1903 = vpop.f32.mrb[0].mxu0
      %v1904 = vadd.f32 0.0, %v1903
      %v1905 = vpop.f32.mrb[0].mxu0
      %v1906 = vpop.f32.mrb[0].mxu0
      %v1907 = vadd.f32 0.0, %v1906
      %v1908 = vpop.f32.mrb[0].mxu0
      %1909 = vmatprep.mubr.bf16.mxu0 0
      %1910 = vmatmul.mubr.bf16.gmra.mrb[0].mxu0 %v1600
      %v1911 = vpop.f32.mrb[0].mxu0
      %v1912 = vadd.f32 0.0, %v1911
      %v1913 = vpop.f32.mrb[0].mxu0
      %v1914 = vpop.f32.mrb[0].mxu0
      %v1915 = vadd.f32 0.0, %v1914
      %v1916 = vpop.f32.mrb[0].mxu0
      %1917 = vmatprep.mubr.bf16.mxu0 0
      %1918 = vmatmul.mubr.bf16.gmra.mrb[0].mxu0 %v1603
      %v1919 = vpop.f32.mrb[0].mxu0
      %v1920 = vadd.f32 0.0, %v1919
      %v1921 = vpop.f32.mrb[0].mxu0
      %v1922 = vpop.f32.mrb[0].mxu0
      %v1923 = vadd.f32 0.0, %v1922
      %v1924 = vpop.f32.mrb[0].mxu0
      %1925 = vmatprep.mubr.bf16.mxu0 0
      %1926 = vmatmul.mubr.bf16.gmra.mrb[0].mxu0 %v1606
      %v1927 = vpop.f32.mrb[0].mxu0
      %v1928 = vadd.f32 0.0, %v1927
      %v1929 = vpop.f32.mrb[0].mxu0
      %v1930 = vpop.f32.mrb[0].mxu0
      %v1931 = vadd.f32 0.0, %v1930
      %v1932 = vpop.f32.mrb[0].mxu0
      %1933 = vmatprep.mubr.bf16.mxu0 0
      %1934 = vmatmul.mubr.bf16.gmra.mrb[0].mxu0 %v1609
      %v1935 = vpop.f32.mrb[0].mxu0
      %v1936 = vadd.f32 0.0, %v1935
      %v1937 = vpop.f32.mrb[0].mxu0
      %v1938 = vpop.f32.mrb[0].mxu0
      %v1939 = vadd.f32 0.0, %v1938
      %v1940 = vpop.f32.mrb[0].mxu0
      %1941 = vmatprep.mubr.bf16.mxu0 0
      %1942 = vmatmul.mubr.bf16.gmra.mrb[0].mxu0 %v1612
      %v1943 = vpop.f32.mrb[0].mxu0
      %v1944 = vadd.f32 0.0, %v1943
      %v1945 = vpop.f32.mrb[0].mxu0
      %v1946 = vpop.f32.mrb[0].mxu0
      %v1947 = vadd.f32 0.0, %v1946
      %v1948 = vpop.f32.mrb[0].mxu0
      %1949 = vmatprep.mubr.bf16.mxu0 0
      %1950 = vmatmul.mubr.bf16.gmra.mrb[0].mxu0 %v1615
      %v1951 = vpop.f32.mrb[0].mxu0
      %v1952 = vadd.f32 0.0, %v1951
      %v1953 = vpop.f32.mrb[0].mxu0
      %v1954 = vpop.f32.mrb[0].mxu0
      %v1955 = vadd.f32 0.0, %v1954
      %v1956 = vpop.f32.mrb[0].mxu0
      %1957 = vmatprep.mubr.bf16.mxu0 0
      %1958 = vmatmul.mubr.bf16.gmra.mrb[0].mxu0 %v1618
      %v1959 = vpop.f32.mrb[0].mxu0
      %v1960 = vadd.f32 0.0, %v1959
      %v1961 = vpop.f32.mrb[0].mxu0
      %v1962 = vpop.f32.mrb[0].mxu0
      %v1963 = vadd.f32 0.0, %v1962
      %v1964 = vpop.f32.mrb[0].mxu0
      %1965 = vdwg.mxu0
      %v1966 = vrcp.pop %v1840
      %v1967 = vrcp.pop %v1843
      %v1968 = vrcp.pop %v1848
      %v1969 = vrcp.pop %v1851
      %v1970 = vrcp.pop %v1856
      %v1971 = vrcp.pop %v1859
      %v1972 = vrcp.pop %v1864
      %v1973 = vrcp.pop %v1867
      %v1974 = vrcp.pop %v1872
      %v1975 = vrcp.pop %v1875
      %v1976 = vrcp.pop %v1880
      %v1977 = vrcp.pop %v1883
      %v1978 = vrcp.pop %v1888
      %v1979 = vrcp.pop %v1891
      %v1980 = vrcp.pop %v1896
      %v1981 = vrcp.pop %v1899
      %v1982 = vrcp.pop %v1904
      %v1983 = vrcp.pop %v1907
      %v1984 = vrcp.pop %v1912
      %v1985 = vrcp.pop %v1915
      %v1986 = vrcp.pop %v1920
      %v1987 = vrcp.pop %v1923
      %v1988 = vrcp.pop %v1928
      %v1989 = vrcp.pop %v1931
      %v1990 = vrcp.pop %v1936
      %v1991 = vrcp.pop %v1939
      %v1992 = vrcp.pop %v1944
      %v1993 = vrcp.pop %v1947
      %v1994 = vrcp.pop %v1952
      %v1995 = vrcp.pop %v1955
      %v1996 = vrcp.pop %v1960
      %v1997 = vrcp.pop %v1963
      %v1998 = vmul.f32 %v1655, %v1966
      %v1999 = vmul.f32 %v1658, %v1967
      %v2000 = vmul.f32 %v1663, %v1968
      %v2001 = vmul.f32 %v1666, %v1969
      %v2002 = vmul.f32 %v1671, %v1970
      %v2003 = vmul.f32 %v1674, %v1971
      %v2004 = vmul.f32 %v1679, %v1972
      %v2005 = vmul.f32 %v1682, %v1973
      %v2006 = vmul.f32 %v1687, %v1974
      %v2007 = vmul.f32 %v1690, %v1975
      %v2008 = vmul.f32 %v1695, %v1976
      %v2009 = vmul.f32 %v1698, %v1977
      %v2010 = vmul.f32 %v1703, %v1978
      %v2011 = vmul.f32 %v1706, %v1979
      %v2012 = vmul.f32 %v1711, %v1980
      %v2013 = vmul.f32 %v1714, %v1981
      %v2014 = vmul.f32 %v1719, %v1982
      %v2015 = vmul.f32 %v1722, %v1983
      %v2016 = vmul.f32 %v1727, %v1984
      %v2017 = vmul.f32 %v1730, %v1985
      %v2018 = vmul.f32 %v1735, %v1986
      %v2019 = vmul.f32 %v1738, %v1987
      %v2020 = vmul.f32 %v1743, %v1988
      %v2021 = vmul.f32 %v1746, %v1989
      %v2022 = vmul.f32 %v1751, %v1990
      %v2023 = vmul.f32 %v1754, %v1991
      %v2024 = vmul.f32 %v1759, %v1992
      %v2025 = vmul.f32 %v1762, %v1993
      %v2026 = vmul.f32 %v1767, %v1994
      %v2027 = vmul.f32 %v1770, %v1995
      %v2028 = vmul.f32 %v1775, %v1996
      %v2029 = vmul.f32 %v1778, %v1997
      %v2030 = vpack.c.bf16 %v1999, %v1998
      %v2031 = vpack.c.bf16 %v2001, %v2000
      %v2032 = vpack.c.bf16 %v2003, %v2002
      %v2033 = vpack.c.bf16 %v2005, %v2004
      %v2034 = vpack.c.bf16 %v2007, %v2006
      %v2035 = vpack.c.bf16 %v2009, %v2008
      %v2036 = vpack.c.bf16 %v2011, %v2010
      %v2037 = vpack.c.bf16 %v2013, %v2012
      %v2038 = vpack.c.bf16 %v2015, %v2014
      %v2039 = vpack.c.bf16 %v2017, %v2016
      %v2040 = vpack.c.bf16 %v2019, %v2018
      %v2041 = vpack.c.bf16 %v2021, %v2020
      %v2042 = vpack.c.bf16 %v2023, %v2022
      %v2043 = vpack.c.bf16 %v2025, %v2024
      %v2044 = vpack.c.bf16 %v2027, %v2026
      %v2045 = vpack.c.bf16 %v2029, %v2028
      %v2046 = vld [vmem:[%s7] sm:$0xf]
      %v2047 = vld [vmem:[%s7 + $0x4] sm:$0xf]
      %v2048 = vld [vmem:[%s7 + $0x8] sm:$0xf]
      %v2049 = vld [vmem:[%s7 + $0xc] sm:$0xf]
      %v2054 = vunpack.c.l.b16 %v2046
      %v2055 = vunpack.c.l.b16 %v2047
      %v2056 = vunpack.c.l.b16 %v2048
      %v2057 = vunpack.c.l.b16 %v2049
      %v2058 = vpack.c.b16 %v2055, %v2054
      %v2059 = vpack.c.b16 %v2057, %v2056
      %v2063 = vsel %vm912, %v2030, 0
      %v2066 = vsel %vm912, %v2031, 0
      %v2069 = vsel %vm912, %v2032, 0
      %v2072 = vsel %vm912, %v2033, 0
      %v2075 = vsel %vm912, %v2034, 0
      %v2078 = vsel %vm912, %v2035, 0
      %v2081 = vsel %vm912, %v2036, 0
      %v2084 = vsel %vm912, %v2037, 0
      %v2087 = vsel %vm912, %v2038, 0
      %v2090 = vsel %vm912, %v2039, 0
      %v2093 = vsel %vm912, %v2040, 0
      %v2096 = vsel %vm912, %v2041, 0
      %v2099 = vsel %vm912, %v2042, 0
      %v2102 = vsel %vm912, %v2043, 0
      %v2105 = vsel %vm912, %v2044, 0
      %v2108 = vsel %vm912, %v2045, 0
      %2110 = vmatprep.subr.bf16.mxu0 0
      %2111 = vmatpush1.bf16.msra.mxu0 %v2058
      %2112 = vmatprep.subr.bf16.mxu0 0
      %2113 = vmatpush1.bf16.msra.mxu0 %v2059
      %2114 = vmatprep.subr.bf16.mxu0 0
      %2115 = vmatpush1.bf16.msra.mxu0 0
      %2116 = vmatprep.subr.bf16.mxu0 0
      %2117 = vmatpush1.bf16.msra.mxu0 0
      %2118 = vmatprep.subr.bf16.mxu0 0
      %2119 = vmatpush1.bf16.msra.mxu0 0
      %2120 = vmatprep.subr.bf16.mxu0 0
      %2121 = vmatpush1.bf16.msra.mxu0 0
      %2122 = vmatprep.subr.bf16.mxu0 0
      %2123 = vmatpush1.bf16.msra.mxu0 0
      %2124 = vmatprep.subr.bf16.mxu0 0
      %2125 = vmatpush1.bf16.msra.mxu0 0
      %2126 = vmatprep.subr.bf16.mxu0 0
      %2127 = vmatpush1.bf16.msra.mxu0 0
      %2128 = vmatprep.subr.bf16.mxu0 0
      %2129 = vmatpush1.bf16.msra.mxu0 0
      %2130 = vmatprep.subr.bf16.mxu0 0
      %2131 = vmatpush1.bf16.msra.mxu0 0
      %2132 = vmatprep.subr.bf16.mxu0 0
      %2133 = vmatpush1.bf16.msra.mxu0 0
      %2134 = vmatprep.subr.bf16.mxu0 0
      %2135 = vmatpush1.bf16.msra.mxu0 0
      %2136 = vmatprep.subr.bf16.mxu0 0
      %2137 = vmatpush1.bf16.msra.mxu0 0
      %2138 = vmatprep.subr.bf16.mxu0 0
      %2139 = vmatpush1.bf16.msra.mxu0 0
      %2140 = vmatprep.subr.bf16.mxu0 0
      %2141 = vmatpush1.bf16.msra.mxu0 0
      %2142 = vmatprep.mubr.bf16.mxu0 0
      %2143 = vmatmul.mubr.bf16.gmra.mrb[0].mxu0 %v2063
      %v2144 = vpop.f32.mrb[0].mxu0
      %v2145 = vadd.f32 0.0, %v2144
      %v2146 = vpop.f32.mrb[0].mxu0
      %v2147 = vpop.f32.mrb[0].mxu0
      %v2148 = vadd.f32 0.0, %v2147
      %v2149 = vpop.f32.mrb[0].mxu0
      %2150 = vmatprep.mubr.bf16.mxu0 0
      %2151 = vmatmul.mubr.bf16.gmra.mrb[0].mxu0 %v2066
      %v2152 = vpop.f32.mrb[0].mxu0
      %v2153 = vadd.f32 0.0, %v2152
      %v2154 = vpop.f32.mrb[0].mxu0
      %v2155 = vpop.f32.mrb[0].mxu0
      %v2156 = vadd.f32 0.0, %v2155
      %v2157 = vpop.f32.mrb[0].mxu0
      %2158 = vmatprep.mubr.bf16.mxu0 0
      %2159 = vmatmul.mubr.bf16.gmra.mrb[0].mxu0 %v2069
      %v2160 = vpop.f32.mrb[0].mxu0
      %v2161 = vadd.f32 0.0, %v2160
      %v2162 = vpop.f32.mrb[0].mxu0
      %v2163 = vpop.f32.mrb[0].mxu0
      %v2164 = vadd.f32 0.0, %v2163
      %v2165 = vpop.f32.mrb[0].mxu0
      %2166 = vmatprep.mubr.bf16.mxu0 0
      %2167 = vmatmul.mubr.bf16.gmra.mrb[0].mxu0 %v2072
      %v2168 = vpop.f32.mrb[0].mxu0
      %v2169 = vadd.f32 0.0, %v2168
      %v2170 = vpop.f32.mrb[0].mxu0
      %v2171 = vpop.f32.mrb[0].mxu0
      %v2172 = vadd.f32 0.0, %v2171
      %v2173 = vpop.f32.mrb[0].mxu0
      %2174 = vmatprep.mubr.bf16.mxu0 0
      %2175 = vmatmul.mubr.bf16.gmra.mrb[0].mxu0 %v2075
      %v2176 = vpop.f32.mrb[0].mxu0
      %v2177 = vadd.f32 0.0, %v2176
      %v2178 = vpop.f32.mrb[0].mxu0
      %v2179 = vpop.f32.mrb[0].mxu0
      %v2180 = vadd.f32 0.0, %v2179
      %v2181 = vpop.f32.mrb[0].mxu0
      %2182 = vmatprep.mubr.bf16.mxu0 0
      %2183 = vmatmul.mubr.bf16.gmra.mrb[0].mxu0 %v2078
      %v2184 = vpop.f32.mrb[0].mxu0
      %v2185 = vadd.f32 0.0, %v2184
      %v2186 = vpop.f32.mrb[0].mxu0
      %v2187 = vpop.f32.mrb[0].mxu0
      %v2188 = vadd.f32 0.0, %v2187
      %v2189 = vpop.f32.mrb[0].mxu0
      %2190 = vmatprep.mubr.bf16.mxu0 0
      %2191 = vmatmul.mubr.bf16.gmra.mrb[0].mxu0 %v2081
      %v2192 = vpop.f32.mrb[0].mxu0
      %v2193 = vadd.f32 0.0, %v2192
      %v2194 = vpop.f32.mrb[0].mxu0
      %v2195 = vpop.f32.mrb[0].mxu0
      %v2196 = vadd.f32 0.0, %v2195
      %v2197 = vpop.f32.mrb[0].mxu0
      %2198 = vmatprep.mubr.bf16.mxu0 0
      %2199 = vmatmul.mubr.bf16.gmra.mrb[0].mxu0 %v2084
      %v2200 = vpop.f32.mrb[0].mxu0
      %v2201 = vadd.f32 0.0, %v2200
      %v2202 = vpop.f32.mrb[0].mxu0
      %v2203 = vpop.f32.mrb[0].mxu0
      %v2204 = vadd.f32 0.0, %v2203
      %v2205 = vpop.f32.mrb[0].mxu0
      %2206 = vmatprep.mubr.bf16.mxu0 0
      %2207 = vmatmul.mubr.bf16.gmra.mrb[0].mxu0 %v2087
      %v2208 = vpop.f32.mrb[0].mxu0
      %v2209 = vadd.f32 0.0, %v2208
      %v2210 = vpop.f32.mrb[0].mxu0
      %v2211 = vpop.f32.mrb[0].mxu0
      %v2212 = vadd.f32 0.0, %v2211
      %v2213 = vpop.f32.mrb[0].mxu0
      %2214 = vmatprep.mubr.bf16.mxu0 0
      %2215 = vmatmul.mubr.bf16.gmra.mrb[0].mxu0 %v2090
      %v2216 = vpop.f32.mrb[0].mxu0
      %v2217 = vadd.f32 0.0, %v2216
      %v2218 = vpop.f32.mrb[0].mxu0
      %v2219 = vpop.f32.mrb[0].mxu0
      %v2220 = vadd.f32 0.0, %v2219
      %v2221 = vpop.f32.mrb[0].mxu0
      %2222 = vmatprep.mubr.bf16.mxu0 0
      %2223 = vmatmul.mubr.bf16.gmra.mrb[0].mxu0 %v2093
      %v2224 = vpop.f32.mrb[0].mxu0
      %v2225 = vadd.f32 0.0, %v2224
      %v2226 = vpop.f32.mrb[0].mxu0
      %v2227 = vpop.f32.mrb[0].mxu0
      %v2228 = vadd.f32 0.0, %v2227
      %v2229 = vpop.f32.mrb[0].mxu0
      %2230 = vmatprep.mubr.bf16.mxu0 0
      %2231 = vmatmul.mubr.bf16.gmra.mrb[0].mxu0 %v2096
      %v2232 = vpop.f32.mrb[0].mxu0
      %v2233 = vadd.f32 0.0, %v2232
      %v2234 = vpop.f32.mrb[0].mxu0
      %v2235 = vpop.f32.mrb[0].mxu0
      %v2236 = vadd.f32 0.0, %v2235
      %v2237 = vpop.f32.mrb[0].mxu0
      %2238 = vmatprep.mubr.bf16.mxu0 0
      %2239 = vmatmul.mubr.bf16.gmra.mrb[0].mxu0 %v2099
      %v2240 = vpop.f32.mrb[0].mxu0
      %v2241 = vadd.f32 0.0, %v2240
      %v2242 = vpop.f32.mrb[0].mxu0
      %v2243 = vpop.f32.mrb[0].mxu0
      %v2244 = vadd.f32 0.0, %v2243
      %v2245 = vpop.f32.mrb[0].mxu0
      %2246 = vmatprep.mubr.bf16.mxu0 0
      %2247 = vmatmul.mubr.bf16.gmra.mrb[0].mxu0 %v2102
      %v2248 = vpop.f32.mrb[0].mxu0
      %v2249 = vadd.f32 0.0, %v2248
      %v2250 = vpop.f32.mrb[0].mxu0
      %v2251 = vpop.f32.mrb[0].mxu0
      %v2252 = vadd.f32 0.0, %v2251
      %v2253 = vpop.f32.mrb[0].mxu0
      %2254 = vmatprep.mubr.bf16.mxu0 0
      %2255 = vmatmul.mubr.bf16.gmra.mrb[0].mxu0 %v2105
      %v2256 = vpop.f32.mrb[0].mxu0
      %v2257 = vadd.f32 0.0, %v2256
      %v2258 = vpop.f32.mrb[0].mxu0
      %v2259 = vpop.f32.mrb[0].mxu0
      %v2260 = vadd.f32 0.0, %v2259
      %v2261 = vpop.f32.mrb[0].mxu0
      %2262 = vmatprep.mubr.bf16.mxu0 0
      %2263 = vmatmul.mubr.bf16.gmra.mrb[0].mxu0 %v2108
      %v2264 = vpop.f32.mrb[0].mxu0
      %v2265 = vadd.f32 0.0, %v2264
      %v2266 = vpop.f32.mrb[0].mxu0
      %v2267 = vpop.f32.mrb[0].mxu0
      %v2268 = vadd.f32 0.0, %v2267
      %v2269 = vpop.f32.mrb[0].mxu0
      %2270 = vdwg.mxu0
      %2271 = vst.msk [vmem:[%s417] sm:$0xff] %vm912, %v2145
      %2272 = vst.msk [vmem:[%s417 + $0x8] sm:$0xff] %vm912, %v2148
      %2273 = vst.msk [vmem:[%s417 + $0x10] sm:$0xff] %vm912, %v2153
      %2274 = vst.msk [vmem:[%s417 + $0x18] sm:$0xff] %vm912, %v2156
      %2275 = vst.msk [vmem:[%s417 + $0x20] sm:$0xff] %vm912, %v2161
      %2276 = vst.msk [vmem:[%s417 + $0x28] sm:$0xff] %vm912, %v2164
      %2277 = vst.msk [vmem:[%s417 + $0x30] sm:$0xff] %vm912, %v2169
      %2278 = vst.msk [vmem:[%s417 + $0x38] sm:$0xff] %vm912, %v2172
      %2279 = vst.msk [vmem:[%s417 + $0x40] sm:$0xff] %vm912, %v2177
      %2280 = vst.msk [vmem:[%s417 + $0x48] sm:$0xff] %vm912, %v2180
      %2281 = vst.msk [vmem:[%s417 + $0x50] sm:$0xff] %vm912, %v2185
      %2282 = vst.msk [vmem:[%s417 + $0x58] sm:$0xff] %vm912, %v2188
      %2283 = vst.msk [vmem:[%s417 + $0x60] sm:$0xff] %vm912, %v2193
      %2284 = vst.msk [vmem:[%s417 + $0x68] sm:$0xff] %vm912, %v2196
      %2285 = vst.msk [vmem:[%s417 + $0x70] sm:$0xff] %vm912, %v2201
      %2286 = vst.msk [vmem:[%s417 + $0x78] sm:$0xff] %vm912, %v2204
      %2287 = vst.msk [vmem:[%s417 + $0x80] sm:$0xff] %vm912, %v2209
      %2288 = vst.msk [vmem:[%s417 + $0x88] sm:$0xff] %vm912, %v2212
      %2289 = vst.msk [vmem:[%s417 + $0x90] sm:$0xff] %vm912, %v2217
      %2290 = vst.msk [vmem:[%s417 + $0x98] sm:$0xff] %vm912, %v2220
      %2291 = vst.msk [vmem:[%s417 + $0xa0] sm:$0xff] %vm912, %v2225
      %2292 = vst.msk [vmem:[%s417 + $0xa8] sm:$0xff] %vm912, %v2228
      %2293 = vst.msk [vmem:[%s417 + $0xb0] sm:$0xff] %vm912, %v2233
      %2294 = vst.msk [vmem:[%s417 + $0xb8] sm:$0xff] %vm912, %v2236
      %2295 = vst.msk [vmem:[%s417 + $0xc0] sm:$0xff] %vm912, %v2241
      %2296 = vst.msk [vmem:[%s417 + $0xc8] sm:$0xff] %vm912, %v2244
      %2297 = vst.msk [vmem:[%s417 + $0xd0] sm:$0xff] %vm912, %v2249
      %2298 = vst.msk [vmem:[%s417 + $0xd8] sm:$0xff] %vm912, %v2252
      %2299 = vst.msk [vmem:[%s417 + $0xe0] sm:$0xff] %vm912, %v2257
      %2300 = vst.msk [vmem:[%s417 + $0xe8] sm:$0xff] %vm912, %v2260
      %2301 = vst.msk [vmem:[%s417 + $0xf0] sm:$0xff] %vm912, %v2265
      %2302 = vst.msk [vmem:[%s417 + $0xf8] sm:$0xff] %vm912, %v2268
      %s2303 = smul.u32 32, %s26
      %p2304 = scmp.lt.s32.totalorder %s25, 1
      %s2305 = scalar_select %p2304, %s25, 1
      %p2306 = scmp.lt.s32.totalorder %s2303, 31
      %s2307 = scalar_select %p2306, %s2303, 31
      %s2308 = smul.addr %s2305, 32
      %s2309 = sadd.s32 %s2307, %s2308
      %s2310 = smul.addr %s2309, 8
      %s2311 = scalar_lea.vmem %s10, %s2310
      // Predicated region
      $region65: #{attention_forward.1} parent=59 // pred_check
        %p2312 = pneg %p275
      $region66: #{attention_forward.1} parent=59 // pred_check_branch
        %2314 = sbr.rel (%p2312) target = $region68
      $region67: #{attention_forward.1} parent=59 // pred_region
        %s2315 = smul.u32 32, %s26
      $region68: #{attention_forward.1} parent=59 // pred_fallthru
        _
    $region60: #{attention_forward.1} parent=5 // pred_fallthru
      _
    %p2316 = scmp.le.s32.totalorder 2, %s16
    // Predicated region
    $region69: #{attention_forward.1} parent=5 // pred_check
      %p2317 = pneg %p2316
    $region70: #{attention_forward.1} parent=5 // pred_check_branch
      %2319 = sbr.rel (%p2317) target = $region72
    $region71: #{attention_forward.1} parent=5 // pred_region
      %s2320 = ssub.s32 %s16, 2
      // Predicated region
      $region73: #{attention_forward.1} parent=71 // pred_check
        %p2321 = pneg %p281
      $region74: #{attention_forward.1} parent=71 // pred_check_branch
        %2323 = sbr.rel (%p2321) target = $region76
      $region75: #{attention_forward.1} parent=71 // pred_region
        %s2324 = smul.u32 32, %s28
        %p2325 = scmp.lt.s32.totalorder %s27, 1
        %s2326 = scalar_select %p2325, %s27, 1
        %p2327 = scmp.lt.s32.totalorder %s2324, 31
        %s2328 = scalar_select %p2327, %s2324, 31
        %s2329 = smul.addr %s2326, 32
        %s2330 = sadd.s32 %s2328, %s2329
        %s2331 = smul.addr %s2330, 8
        %s2332 = scalar_lea.vmem %s10, %s2331
      $region76: #{attention_forward.1} parent=71 // pred_fallthru
        _
    $region72: #{attention_forward.1} parent=5 // pred_fallthru
      _
  $region6: #{attention_forward.1} parent=0 // loop_footer
    %s20 = sadd.s32 1, %s16
  $region7: #{attention_forward.1} parent=0 // loop_footer_branch
    %15 = sbr.rel target = $region3
  $region8: #{attention_forward.1} parent=0 // loop_exit
    _

// kernel: attention_forward.1
$region0: #{attention_forward.1}
  #allocation0 [shape = 'u32[]', space=smem, size = 0x4, offset = 0x4, fixed_abs, tag = 'smem constant byte address 0x4 - core index']
  #allocation1 [shape = 'u32[144,128]{1,0:T(1,128)}', space=vmem, size = 0x12000, scoped, tag = 'internal scratch']
  #allocation2 [shape = 'bf16[2,48,32]{2,1,0:T(16,128)(2,1)}', space=vmem, size = 0x6000, scoped, tag = 'scratch operand']
  %s0 = inlined_call_operand.vmem [shape: bf16[2,256,32], index: 0, kind: input, shape index: {}]
  %s1 = inlined_call_operand.vmem [shape: bf16[2,12,32], index: 1, kind: input, shape index: {}]
  %s2 = inlined_call_operand.vmem [shape: f32[1,32], index: 2, kind: input, shape index: {}]
  %s3 = inlined_call_operand.vmem [shape: f32[1,32], index: 3, kind: input, shape index: {}]
  %s4 = inlined_call_operand.vmem [shape: bf16[32,32], index: 4, kind: input, shape index: {}]
  %s5 = inlined_call_operand.vmem [shape: bf16[32,32], index: 5, kind: input, shape index: {}]
  %s6 = inlined_call_operand.vmem [shape: bf16[32,32], index: 6, kind: input, shape index: {}]
  %s7 = inlined_call_operand.vmem [shape: bf16[32,32], index: 7, kind: input, shape index: {}]
  %s8 = inlined_call_operand.vmem [shape: bf16[48,32], index: 8, kind: input, shape index: {}]
  %s9 = inlined_call_operand.vmem [shape: bf16[48,12], index: 9, kind: input, shape index: {}]
  %s10 = inlined_call_operand.vmem [shape: f32[2,256,32], index: 10, kind: output, shape index: {}]
  %s11 = sld [smem:[#allocation0]]
  $region77: #{attention_forward.1} parent=0
    _
  %s13 = ssub.s32 1, %s11
  %s14 = scalar_select 0, %s13, %s11
  loop: start=0, step=1, limit=4
  $region2: #{attention_forward.1} parent=0 // loop_pre_header
    _
  $region3: #{attention_forward.1} parent=0 // loop_header
    %s16 = sphi 0, %s20
    %p17 = scmp.ge.s32.totalorder %s16, 4
    %s23 = sphi 0, %s35
    %s24 = sphi 0, %s31
    %s25 = sphi 0, %s23
    %s26 = sphi 0, %s24
    %s27 = sphi 0, %s25
    %s28 = sphi 0, %s26
    %s40 = sphi 0, %s42
    %s43 = sphi 0, %s40
    %s44 = sphi 0, %s43
    %s60 = sphi 0, %s44
    %s66 = sphi 0, %s68
    %s69 = sphi 0, %s66
    %s70 = sphi 0, %s69
    %s86 = sphi 0, %s70
    %s90 = sphi 0, %s90
    %s92 = sphi 0, %s90
    %s93 = sphi 0, %s92
    %s107 = sphi 0, %s93
    %s111 = sphi 0, %s111
    %s113 = sphi 0, %s111
    %s114 = sphi 0, %s113
    %s128 = sphi 0, %s114
    %s132 = sphi 0, %s132
    %s134 = sphi 0, %s132
    %s135 = sphi 0, %s134
    %s149 = sphi 0, %s135
    %s153 = sphi 0, %s153
    %s155 = sphi 0, %s153
    %s156 = sphi 0, %s155
    %s170 = sphi 0, %s156
    %s174 = sphi 0, %s174
    %s176 = sphi 0, %s174
    %s177 = sphi 0, %s176
    %s191 = sphi 0, %s177
    %s195 = sphi 0, %s195
    %s197 = sphi 0, %s195
    %s198 = sphi 0, %s197
    %s212 = sphi 0, %s198
    %s216 = sphi 0, %s216
    %s218 = sphi 0, %s216
    %s219 = sphi 0, %s218
    %s233 = sphi 0, %s219
    %s237 = sphi 0, %s237
    %s239 = sphi 0, %s237
    %s240 = sphi 0, %s239
    %s254 = sphi 0, %s240
    %s262 = sphi 0, %s264
    %s265 = sphi 0, %s262
    %s266 = sphi 0, %s265
    %s282 = sphi 0, %s266
  $region4: #{attention_forward.1} parent=0 // loop_header_branch
    %19 = sbr.rel (%p17) target = $region8
  $region5: #{attention_forward.1} parent=0 // loop_body
    %s21 = ssub.s32 %s16, 1
    %s22 = ssub.s32 %s16, 2
    %s29 = sadd.s32 1, %s24
    %p30 = scmp.ge.s32.totalorder %s29, 1
    %s31 = scalar_select %p30, 0, %s29
    %s32 = sadd.s32 1, %s23
    %s33 = scalar_select %p30, %s32, %s23
    %p34 = scmp.ge.s32.totalorder %s33, 2
    %s35 = scalar_select %p34, 0, %s33
    %s36 = ssub.s32 %s23, %s35
    %s37 = ssub.s32 %s24, %s31
    %s38 = sor.u32 %s36, %s37
    %p39 = scmp.eq.s32.totalorder %s38, 0
    %s41 = sadd.s32 %s40, 1
    %s42 = scalar_select %p39, %s40, %s41
    %p45 = pneg %p39
    %p46 = scmp.eq.s32.totalorder %s16, 1
    %p47 = por %p45, %p46
    %p48 = scmp.ne.s32.totalorder %s40, %s43
    %p49 = scmp.eq.s32.totalorder %s16, 0
    %p50 = por %p48, %p49
    %p51 = scmp.ne.s32.totalorder %s40, %s43
    %p52 = scmp.eq.s32.totalorder %s21, 1
    %p53 = por %p51, %p52
    %p54 = scmp.ne.s32.totalorder %s43, %s44
    %p55 = scmp.eq.s32.totalorder %s21, 0
    %p56 = por %p54, %p55
    %p57 = scmp.ne.s32.totalorder %s43, %s44
    %p58 = scmp.eq.s32.totalorder %s22, 1
    %p59 = por %p57, %p58
    %p61 = scmp.ne.s32.totalorder %s44, %s60
    %p62 = scmp.eq.s32.totalorder %s22, 0
    %p63 = por %p61, %p62
    %s64 = ssub.s32 %s23, %s35
    %p65 = scmp.eq.s32.totalorder %s64, 0
    %s67 = sadd.s32 %s66, 1
    %s68 = scalar_select %p65, %s66, %s67
    %p71 = pneg %p65
    %p72 = scmp.eq.s32.totalorder %s16, 1
    %p73 = por %p71, %p72
    %p74 = scmp.ne.s32.totalorder %s66, %s69
    %p75 = scmp.eq.s32.totalorder %s16, 0
    %p76 = por %p74, %p75
    %p77 = scmp.ne.s32.totalorder %s66, %s69
    %p78 = scmp.eq.s32.totalorder %s21, 1
    %p79 = por %p77, %p78
    %p80 = scmp.ne.s32.totalorder %s69, %s70
    %p81 = scmp.eq.s32.totalorder %s21, 0
    %p82 = por %p80, %p81
    %p83 = scmp.ne.s32.totalorder %s69, %s70
    %p84 = scmp.eq.s32.totalorder %s22, 1
    %p85 = por %p83, %p84
    %p87 = scmp.ne.s32.totalorder %s70, %s86
    %p88 = scmp.eq.s32.totalorder %s22, 0
    %p89 = por %p87, %p88
    %s91 = sadd.s32 %s90, 1
    %p94 = scmp.eq.s32.totalorder %s16, 1
    %p95 = scmp.ne.s32.totalorder %s90, %s92
    %p96 = scmp.eq.s32.totalorder %s16, 0
    %p97 = por %p95, %p96
    %p98 = scmp.ne.s32.totalorder %s90, %s92
    %p99 = scmp.eq.s32.totalorder %s21, 1
    %p100 = por %p98, %p99
    %p101 = scmp.ne.s32.totalorder %s92, %s93
    %p102 = scmp.eq.s32.totalorder %s21, 0
    %p103 = por %p101, %p102
    %p104 = scmp.ne.s32.totalorder %s92, %s93
    %p105 = scmp.eq.s32.totalorder %s22, 1
    %p106 = por %p104, %p105
    %p108 = scmp.ne.s32.totalorder %s93, %s107
    %p109 = scmp.eq.s32.totalorder %s22, 0
    %p110 = por %p108, %p109
    %s112 = sadd.s32 %s111, 1
    %p115 = scmp.eq.s32.totalorder %s16, 1
    %p116 = scmp.ne.s32.totalorder %s111, %s113
    %p117 = scmp.eq.s32.totalorder %s16, 0
    %p118 = por %p116, %p117
    %p119 = scmp.ne.s32.totalorder %s111, %s113
    %p120 = scmp.eq.s32.totalorder %s21, 1
    %p121 = por %p119, %p120
    %p122 = scmp.ne.s32.totalorder %s113, %s114
    %p123 = scmp.eq.s32.totalorder %s21, 0
    %p124 = por %p122, %p123
    %p125 = scmp.ne.s32.totalorder %s113, %s114
    %p126 = scmp.eq.s32.totalorder %s22, 1
    %p127 = por %p125, %p126
    %p129 = scmp.ne.s32.totalorder %s114, %s128
    %p130 = scmp.eq.s32.totalorder %s22, 0
    %p131 = por %p129, %p130
    %s133 = sadd.s32 %s132, 1
    %p136 = scmp.eq.s32.totalorder %s16, 1
    %p137 = scmp.ne.s32.totalorder %s132, %s134
    %p138 = scmp.eq.s32.totalorder %s16, 0
    %p139 = por %p137, %p138
    %p140 = scmp.ne.s32.totalorder %s132, %s134
    %p141 = scmp.eq.s32.totalorder %s21, 1
    %p142 = por %p140, %p141
    %p143 = scmp.ne.s32.totalorder %s134, %s135
    %p144 = scmp.eq.s32.totalorder %s21, 0
    %p145 = por %p143, %p144
    %p146 = scmp.ne.s32.totalorder %s134, %s135
    %p147 = scmp.eq.s32.totalorder %s22, 1
    %p148 = por %p146, %p147
    %p150 = scmp.ne.s32.totalorder %s135, %s149
    %p151 = scmp.eq.s32.totalorder %s22, 0
    %p152 = por %p150, %p151
    %s154 = sadd.s32 %s153, 1
    %p157 = scmp.eq.s32.totalorder %s16, 1
    %p158 = scmp.ne.s32.totalorder %s153, %s155
    %p159 = scmp.eq.s32.totalorder %s16, 0
    %p160 = por %p158, %p159
    %p161 = scmp.ne.s32.totalorder %s153, %s155
    %p162 = scmp.eq.s32.totalorder %s21, 1
    %p163 = por %p161, %p162
    %p164 = scmp.ne.s32.totalorder %s155, %s156
    %p165 = scmp.eq.s32.totalorder %s21, 0
    %p166 = por %p164, %p165
    %p167 = scmp.ne.s32.totalorder %s155, %s156
    %p168 = scmp.eq.s32.totalorder %s22, 1
    %p169 = por %p167, %p168
    %p171 = scmp.ne.s32.totalorder %s156, %s170
    %p172 = scmp.eq.s32.totalorder %s22, 0
    %p173 = por %p171, %p172
    %s175 = sadd.s32 %s174, 1
    %p178 = scmp.eq.s32.totalorder %s16, 1
    %p179 = scmp.ne.s32.totalorder %s174, %s176
    %p180 = scmp.eq.s32.totalorder %s16, 0
    %p181 = por %p179, %p180
    %p182 = scmp.ne.s32.totalorder %s174, %s176
    %p183 = scmp.eq.s32.totalorder %s21, 1
    %p184 = por %p182, %p183
    %p185 = scmp.ne.s32.totalorder %s176, %s177
    %p186 = scmp.eq.s32.totalorder %s21, 0
    %p187 = por %p185, %p186
    %p188 = scmp.ne.s32.totalorder %s176, %s177
    %p189 = scmp.eq.s32.totalorder %s22, 1
    %p190 = por %p188, %p189
    %p192 = scmp.ne.s32.totalorder %s177, %s191
    %p193 = scmp.eq.s32.totalorder %s22, 0
    %p194 = por %p192, %p193
    %s196 = sadd.s32 %s195, 1
    %p199 = scmp.eq.s32.totalorder %s16, 1
    %p200 = scmp.ne.s32.totalorder %s195, %s197
    %p201 = scmp.eq.s32.totalorder %s16, 0
    %p202 = por %p200, %p201
    %p203 = scmp.ne.s32.totalorder %s195, %s197
    %p204 = scmp.eq.s32.totalorder %s21, 1
    %p205 = por %p203, %p204
    %p206 = scmp.ne.s32.totalorder %s197, %s198
    %p207 = scmp.eq.s32.totalorder %s21, 0
    %p208 = por %p206, %p207
    %p209 = scmp.ne.s32.totalorder %s197, %s198
    %p210 = scmp.eq.s32.totalorder %s22, 1
    %p211 = por %p209, %p210
    %p213 = scmp.ne.s32.totalorder %s198, %s212
    %p214 = scmp.eq.s32.totalorder %s22, 0
    %p215 = por %p213, %p214
    %s217 = sadd.s32 %s216, 1
    %p220 = scmp.eq.s32.totalorder %s16, 1
    %p221 = scmp.ne.s32.totalorder %s216, %s218
    %p222 = scmp.eq.s32.totalorder %s16, 0
    %p223 = por %p221, %p222
    %p224 = scmp.ne.s32.totalorder %s216, %s218
    %p225 = scmp.eq.s32.totalorder %s21, 1
    %p226 = por %p224, %p225
    %p227 = scmp.ne.s32.totalorder %s218, %s219
    %p228 = scmp.eq.s32.totalorder %s21, 0
    %p229 = por %p227, %p228
    %p230 = scmp.ne.s32.totalorder %s218, %s219
    %p231 = scmp.eq.s32.totalorder %s22, 1
    %p232 = por %p230, %p231
    %p234 = scmp.ne.s32.totalorder %s219, %s233
    %p235 = scmp.eq.s32.totalorder %s22, 0
    %p236 = por %p234, %p235
    %s238 = sadd.s32 %s237, 1
    %p241 = scmp.eq.s32.totalorder %s16, 1
    %p242 = scmp.ne.s32.totalorder %s237, %s239
    %p243 = scmp.eq.s32.totalorder %s16, 0
    %p244 = por %p242, %p243
    %p245 = scmp.ne.s32.totalorder %s237, %s239
    %p246 = scmp.eq.s32.totalorder %s21, 1
    %p247 = por %p245, %p246
    %p248 = scmp.ne.s32.totalorder %s239, %s240
    %p249 = scmp.eq.s32.totalorder %s21, 0
    %p250 = por %p248, %p249
    %p251 = scmp.ne.s32.totalorder %s239, %s240
    %p252 = scmp.eq.s32.totalorder %s22, 1
    %p253 = por %p251, %p252
    %p255 = scmp.ne.s32.totalorder %s240, %s254
    %p256 = scmp.eq.s32.totalorder %s22, 0
    %p257 = por %p255, %p256
    %s258 = ssub.s32 %s23, %s35
    %s259 = ssub.s32 %s24, %s31
    %s260 = sor.u32 %s258, %s259
    %p261 = scmp.eq.s32.totalorder %s260, 0
    %s263 = sadd.s32 %s262, 1
    %s264 = scalar_select %p261, %s262, %s263
    %p267 = pneg %p261
    %p268 = scmp.eq.s32.totalorder %s16, 1
    %p269 = por %p267, %p268
    %p270 = scmp.ne.s32.totalorder %s262, %s265
    %p271 = scmp.eq.s32.totalorder %s16, 0
    %p272 = por %p270, %p271
    %p273 = scmp.ne.s32.totalorder %s262, %s265
    %p274 = scmp.eq.s32.totalorder %s21, 1
    %p275 = por %p273, %p274
    %p276 = scmp.ne.s32.totalorder %s265, %s266
    %p277 = scmp.eq.s32.totalorder %s21, 0
    %p278 = por %p276, %p277
    %p279 = scmp.ne.s32.totalorder %s265, %s266
    %p280 = scmp.eq.s32.totalorder %s22, 1
    %p281 = por %p279, %p280
    %p283 = scmp.ne.s32.totalorder %s266, %s282
    %p284 = scmp.eq.s32.totalorder %s22, 0
    %p285 = por %p283, %p284
    %p286 = scmp.le.s32.totalorder 1, %s16
    %p287 = scmp.lt.s32.totalorder %s16, 3
    %p288 = pnand %p286, %p287
    %p289 = pneg %p288
    // Predicated region
    $region9: #{attention_forward.1} parent=5 // pred_check
      _
    $region10: #{attention_forward.1} parent=5 // pred_check_branch
      %291 = sbr.rel (%p288) target = $region12
    $region11: #{attention_forward.1} parent=5 // pred_region
      %s292 = ssub.s32 %s16, 1
      // Predicated region
      $region13: #{attention_forward.1} parent=11 // pred_check
        %p293 = pneg %p103
      $region14: #{attention_forward.1} parent=11 // pred_check_branch
        %295 = sbr.rel (%p293) target = $region16
      $region15: #{attention_forward.1} parent=11 // pred_region
        _
      $region16: #{attention_forward.1} parent=11 // pred_fallthru
        _
      // Predicated region
      $region17: #{attention_forward.1} parent=11 // pred_check
        %p296 = pneg %p124
      $region18: #{attention_forward.1} parent=11 // pred_check_branch
        %298 = sbr.rel (%p296) target = $region20
      $region19: #{attention_forward.1} parent=11 // pred_region
        _
      $region20: #{attention_forward.1} parent=11 // pred_fallthru
        _
      // Predicated region
      $region21: #{attention_forward.1} parent=11 // pred_check
        %p299 = pneg %p145
      $region22: #{attention_forward.1} parent=11 // pred_check_branch
        %301 = sbr.rel (%p299) target = $region24
      $region23: #{attention_forward.1} parent=11 // pred_region
        _
      $region24: #{attention_forward.1} parent=11 // pred_fallthru
        _
      // Predicated region
      $region25: #{attention_forward.1} parent=11 // pred_check
        %p302 = pneg %p166
      $region26: #{attention_forward.1} parent=11 // pred_check_branch
        %304 = sbr.rel (%p302) target = $region28
      $region27: #{attention_forward.1} parent=11 // pred_region
        _
      $region28: #{attention_forward.1} parent=11 // pred_fallthru
        _
      // Predicated region
      $region29: #{attention_forward.1} parent=11 // pred_check
        %p305 = pneg %p187
      $region30: #{attention_forward.1} parent=11 // pred_check_branch
        %307 = sbr.rel (%p305) target = $region32
      $region31: #{attention_forward.1} parent=11 // pred_region
        _
      $region32: #{attention_forward.1} parent=11 // pred_fallthru
        _
      // Predicated region
      $region33: #{attention_forward.1} parent=11 // pred_check
        %p308 = pneg %p208
      $region34: #{attention_forward.1} parent=11 // pred_check_branch
        %310 = sbr.rel (%p308) target = $region36
      $region35: #{attention_forward.1} parent=11 // pred_region
        _
      $region36: #{attention_forward.1} parent=11 // pred_fallthru
        _
      // Predicated region
      $region37: #{attention_forward.1} parent=11 // pred_check
        %p311 = pneg %p229
      $region38: #{attention_forward.1} parent=11 // pred_check_branch
        %313 = sbr.rel (%p311) target = $region40
      $region39: #{attention_forward.1} parent=11 // pred_region
        _
      $region40: #{attention_forward.1} parent=11 // pred_fallthru
        _
      // Predicated region
      $region41: #{attention_forward.1} parent=11 // pred_check
        %p314 = pneg %p250
      $region42: #{attention_forward.1} parent=11 // pred_check_branch
        %316 = sbr.rel (%p314) target = $region44
      $region43: #{attention_forward.1} parent=11 // pred_region
        _
      $region44: #{attention_forward.1} parent=11 // pred_fallthru
        _
    $region12: #{attention_forward.1} parent=5 // pred_fallthru
      _
    %p317 = scmp.lt.s32.totalorder %s16, 2
    // Predicated region
    $region45: #{attention_forward.1} parent=5 // pred_check
      %p318 = pneg %p317
    $region46: #{attention_forward.1} parent=5 // pred_check_branch
      %320 = sbr.rel (%p318) target = $region48
    $region47: #{attention_forward.1} parent=5 // pred_region
      // Predicated region
      $region49: #{attention_forward.1} parent=47 // pred_check
        %p321 = pneg %p50
      $region50: #{attention_forward.1} parent=47 // pred_check_branch
        %323 = sbr.rel (%p321) target = $region52
      $region51: #{attention_forward.1} parent=47 // pred_region
        %s324 = smul.u32 32, %s24
        %p325 = scmp.lt.s32.totalorder %s23, 1
        %s326 = scalar_select %p325, %s23, 1
        %p327 = scmp.lt.s32.totalorder %s324, 31
        %s328 = scalar_select %p327, %s324, 31
        %s329 = smul.addr %s326, 32
        %s330 = sadd.s32 %s328, %s329
        %s331 = smul.addr %s330, 4
        %s332 = scalar_lea.vmem %s0, %s331
        %s333 = smul.u32 32, %s24
      $region52: #{attention_forward.1} parent=47 // pred_fallthru
        _
      // Predicated region
      $region53: #{attention_forward.1} parent=47 // pred_check
        %p334 = pneg %p76
      $region54: #{attention_forward.1} parent=47 // pred_check_branch
        %336 = sbr.rel (%p334) target = $region56
      $region55: #{attention_forward.1} parent=47 // pred_region
        %p337 = scmp.lt.s32.totalorder %s23, 1
        %s338 = scalar_select %p337, %s23, 1
        %s339 = smul.addr %s338, 2
        %s340 = smul.addr %s339, 4
        %s341 = scalar_lea.vmem %s1, %s340
      $region56: #{attention_forward.1} parent=47 // pred_fallthru
        _
    $region48: #{attention_forward.1} parent=5 // pred_fallthru
      _
    %p342 = scmp.le.s32.totalorder 1, %s16
    %p343 = scmp.lt.s32.totalorder %s16, 3
    %p344 = pnand %p342, %p343
    %p345 = pneg %p344
    // Predicated region
    $region57: #{attention_forward.1} parent=5 // pred_check
      _
    $region58: #{attention_forward.1} parent=5 // pred_check_branch
      %347 = sbr.rel (%p344) target = $region60
    $region59: #{attention_forward.1} parent=5 // pred_region
      %s348 = ssub.s32 %s16, 1
      %s349 = smul.u32 32, %s26
      %p350 = scmp.lt.s32.totalorder %s25, 1
      %s351 = scalar_select %p350, %s25, 1
      %p352 = scmp.lt.s32.totalorder %s349, 31
      %s353 = scalar_select %p352, %s349, 31
      %s354 = smul.addr %s351, 32
      %s355 = sadd.s32 %s353, %s354
      %s356 = smul.addr %s355, 4
      %s357 = scalar_lea.vmem %s0, %s356
      %p358 = pneg %p56
      %p359 = pneg %p53
      %p360 = scmp.lt.s32.totalorder %s25, 1
      %s361 = scalar_select %p360, %s25, 1
      %s362 = smul.addr %s361, 2
      %s363 = smul.addr %s362, 4
      %s364 = scalar_lea.vmem %s1, %s363
      %p365 = pneg %p82
      %p366 = pneg %p79
      %p367 = pneg %p103
      %p368 = pneg %p100
      %p369 = pneg %p124
      %p370 = pneg %p121
      %p371 = pneg %p145
      %p372 = pneg %p142
      %p373 = pneg %p166
      %p374 = pneg %p163
      %p375 = pneg %p187
      %p376 = pneg %p184
      %p377 = pneg %p208
      %p378 = pneg %p205
      %p379 = pneg %p229
      %p380 = pneg %p226
      %p381 = pneg %p250
      %p382 = pneg %p247
      %p383 = pneg %p278
      %p384 = pneg %p275
      %s385 = smul.u32 32, %s26
      %p386 = scmp.lt.s32.totalorder %s25, 1
      %s387 = scalar_select %p386, %s25, 1
      %p388 = scmp.lt.s32.totalorder %s385, 31
      %s389 = scalar_select %p388, %s385, 31
      %s390 = smul.addr %s387, 32
      %s391 = sadd.s32 %s389, %s390
      %s392 = smul.addr %s391, 8
      %s393 = scalar_lea.vmem %s10, %s392
      %s394 = smul.u32 32, %s26
      %p395 = scmp.lt.s32.totalorder %s25, 1
      %s396 = scalar_select %p395, %s25, 1
      %p397 = scmp.lt.s32.totalorder %s394, 31
      %s398 = scalar_select %p397, %s394, 31
      %s399 = smul.addr %s396, 32
      %s400 = sadd.s32 %s398, %s399
      %s401 = smul.addr %s400, 4
      %s402 = scalar_lea.vmem %s0, %s401
      %s403 = smul.u32 32, %s26
      %p404 = scmp.lt.s32.totalorder %s25, 1
      %s405 = scalar_select %p404, %s25, 1
      %s406 = smul.addr %s405, 2
      %s407 = smul.addr %s406, 4
      %s408 = scalar_lea.vmem %s1, %s407
      %s409 = smul.u32 32, %s26
      %p410 = scmp.lt.s32.totalorder %s25, 1
      %s411 = scalar_select %p410, %s25, 1
      %p412 = scmp.lt.s32.totalorder %s409, 31
      %s413 = scalar_select %p412, %s409, 31
      %s414 = smul.addr %s411, 32
      %s415 = sadd.s32 %s413, %s414
      %s416 = smul.addr %s415, 8
      %s417 = scalar_lea.vmem %s10, %s416
      %s418 = smul.u32 32, %s26
      %p420 = scmp.eq.s32.totalorder %s26, 0
      // Predicated region
      $region61: #{attention_forward.1} parent=59 // pred_check
        %p421 = pneg %p420
      $region62: #{attention_forward.1} parent=59 // pred_check_branch
        %423 = sbr.rel (%p421) target = $region64
      $region63: #{attention_forward.1} parent=59 // pred_region
        %v424 = vld [vmem:[%s408] sm:$0xf]
        %v425 = vld [vmem:[%s408 + $0x4] sm:$0x3]
        %v426 = vunpack.c.l.bf16 %v424
        %v427 = vunpack.c.l.bf16 %v425
        %vm428 = vcmask 261120
        %v429 = vsel %vm428, %v426, 0.0
        %430 = vadd.xlane.f32.xlu0 %v429
        %v431 = vpop.xlane.xlu0 %430
        %vm432 = vcmask 257024
        %v433 = vsel %vm432, %v427, 0.0
        %434 = vadd.xlane.f32.xlu0 %v433
        %v435 = vpop.xlane.xlu0 %434
        %v436 = vrcp.pop 32.0
        %v437 = vmul.f32 %v431, %v436
        %v438 = vmul.f32 %v435, %v436
        %v439 = vsub.f32 %v426, %v437
        %v440 = vsub.f32 %v427, %v438
        %v441 = vmul.f32 %v439, %v439
        %v442 = vmul.f32 %v440, %v440
        %v443 = vsel %vm428, %v441, 0.0
        %444 = vadd.xlane.f32.xlu0 %v443
        %v445 = vpop.xlane.xlu0 %444
        %v446 = vsel %vm432, %v442, 0.0
        %447 = vadd.xlane.f32.xlu0 %v446
        %v448 = vpop.xlane.xlu0 %447
        %v449 = vmul.f32 %v445, %v436
        %v450 = vmul.f32 %v448, %v436
        %v451 = vadd.f32 %v449, 1e-05
        %v452 = vadd.f32 %v450, 1e-05
        %v453 = vrsqrt.pop %v451
        %v454 = vrsqrt.pop %v452
        %v455 = vmul.f32 %v439, %v453
        %v456 = vmul.f32 %v440, %v454
        %v457 = vld [vmem:[%s2] sm:$0x1]
        %v459 = vlaneseq
        %v460 = vshrl.u32 %v459, 7
        %v461 = vsub.s32 0, %v460
        %v462 = vrot.slane %v457, %v461
        %v464 = vmul.f32 %v455, %v462
        %v465 = vmul.f32 %v456, %v462
        %v466 = vld [vmem:[%s3] sm:$0x1]
        %v468 = vlaneseq
        %v469 = vshrl.u32 %v468, 7
        %v470 = vsub.s32 0, %v469
        %v471 = vrot.slane %v466, %v470
        %v473 = vadd.f32 %v464, %v471
        %v474 = vadd.f32 %v465, %v471
        %v475 = vpack.c.bf16 %v474, %v473
        %v476 = vld [vmem:[%s5] sm:$0xf]
        %v477 = vld [vmem:[%s5 + $0x4] sm:$0xf]
        %v478 = vld [vmem:[%s5 + $0x8] sm:$0xf]
        %v479 = vld [vmem:[%s5 + $0xc] sm:$0xf]
        %v484 = vunpack.c.l.b16 %v476
        %v485 = vunpack.c.l.b16 %v477
        %v486 = vunpack.c.l.b16 %v478
        %v487 = vunpack.c.l.b16 %v479
        %v488 = vpack.c.b16 %v485, %v484
        %v489 = vpack.c.b16 %v487, %v486
        %v493 = vsel %vm428, %v475, 0
        %495 = vmatprep.subr.bf16.mxu0 0
        %496 = vmatpush1.bf16.msra.mxu0 %v488
        %497 = vmatprep.subr.bf16.mxu0 0
        %498 = vmatpush1.bf16.msra.mxu0 %v489
        %499 = vmatprep.subr.bf16.mxu0 0
        %500 = vmatpush1.bf16.msra.mxu0 0
        %501 = vmatprep.subr.bf16.mxu0 0
        %502 = vmatpush1.bf16.msra.mxu0 0
        %503 = vmatprep.subr.bf16.mxu0 0
        %504 = vmatpush1.bf16.msra.mxu0 0
        %505 = vmatprep.subr.bf16.mxu0 0
        %506 = vmatpush1.bf16.msra.mxu0 0
        %507 = vmatprep.subr.bf16.mxu0 0
        %508 = vmatpush1.bf16.msra.mxu0 0
        %509 = vmatprep.subr.bf16.mxu0 0
        %510 = vmatpush1.bf16.msra.mxu0 0
        %511 = vmatprep.subr.bf16.mxu0 0
        %512 = vmatpush1.bf16.msra.mxu0 0
        %513 = vmatprep.subr.bf16.mxu0 0
        %514 = vmatpush1.bf16.msra.mxu0 0
        %515 = vmatprep.subr.bf16.mxu0 0
        %516 = vmatpush1.bf16.msra.mxu0 0
        %517 = vmatprep.subr.bf16.mxu0 0
        %518 = vmatpush1.bf16.msra.mxu0 0
        %519 = vmatprep.subr.bf16.mxu0 0
        %520 = vmatpush1.bf16.msra.mxu0 0
        %521 = vmatprep.subr.bf16.mxu0 0
        %522 = vmatpush1.bf16.msra.mxu0 0
        %523 = vmatprep.subr.bf16.mxu0 0
        %524 = vmatpush1.bf16.msra.mxu0 0
        %525 = vmatprep.subr.bf16.mxu0 0
        %526 = vmatpush1.bf16.msra.mxu0 0
        %527 = vmatprep.mubr.bf16.mxu0 0
        %528 = vmatmul.mubr.bf16.gmra.mrb[0].mxu0 %v493
        %v529 = vpop.f32.mrb[0].mxu0
        %v530 = vadd.f32 0.0, %v529
        %v531 = vpop.f32.mrb[0].mxu0
        %v532 = vpop.f32.mrb[0].mxu0
        %v533 = vadd.f32 0.0, %v532
        %v534 = vpop.f32.mrb[0].mxu0
        %535 = vdwg.mxu0
        %v536 = vpack.c.bf16 %v533, %v530
        %v537 = vld [vmem:[%s6] sm:$0xf]
        %v538 = vld [vmem:[%s6 + $0x4] sm:$0xf]
        %v539 = vld [vmem:[%s6 + $0x8] sm:$0xf]
        %v540 = vld [vmem:[%s6 + $0xc] sm:$0xf]
        %v545 = vunpack.c.l.b16 %v537
        %v546 = vunpack.c.l.b16 %v538
        %v547 = vunpack.c.l.b16 %v539
        %v548 = vunpack.c.l.b16 %v540
        %v549 = vpack.c.b16 %v546, %v545
        %v550 = vpack.c.b16 %v548, %v547
        %553 = vmatprep.subr.bf16.mxu0 0
        %554 = vmatpush1.bf16.msra.mxu0 %v549
        %555 = vmatprep.subr.bf16.mxu0 0
        %556 = vmatpush1.bf16.msra.mxu0 %v550
        %557 = vmatprep.subr.bf16.mxu0 0
        %558 = vmatpush1.bf16.msra.mxu0 0
        %559 = vmatprep.subr.bf16.mxu0 0
        %560 = vmatpush1.bf16.msra.mxu0 0
        %561 = vmatprep.subr.bf16.mxu0 0
        %562 = vmatpush1.bf16.msra.mxu0 0
        %563 = vmatprep.subr.bf16.mxu0 0
        %564 = vmatpush1.bf16.msra.mxu0 0
        %565 = vmatprep.subr.bf16.mxu0 0
        %566 = vmatpush1.bf16.msra.mxu0 0
        %567 = vmatprep.subr.bf16.mxu0 0
        %568 = vmatpush1.bf16.msra.mxu0 0
        %569 = vmatprep.subr.bf16.mxu0 0
        %570 = vmatpush1.bf16.msra.mxu0 0
        %571 = vmatprep.subr.bf16.mxu0 0
        %572 = vmatpush1.bf16.msra.mxu0 0
        %573 = vmatprep.subr.bf16.mxu0 0
        %574 = vmatpush1.bf16.msra.mxu0 0
        %575 = vmatprep.subr.bf16.mxu0 0
        %576 = vmatpush1.bf16.msra.mxu0 0
        %577 = vmatprep.subr.bf16.mxu0 0
        %578 = vmatpush1.bf16.msra.mxu0 0
        %579 = vmatprep.subr.bf16.mxu0 0
        %580 = vmatpush1.bf16.msra.mxu0 0
        %581 = vmatprep.subr.bf16.mxu0 0
        %582 = vmatpush1.bf16.msra.mxu0 0
        %583 = vmatprep.subr.bf16.mxu0 0
        %584 = vmatpush1.bf16.msra.mxu0 0
        %585 = vmatprep.mubr.bf16.mxu0 0
        %586 = vmatmul.mubr.bf16.gmra.mrb[0].mxu0 %v493
        %v587 = vpop.f32.mrb[0].mxu0
        %v588 = vadd.f32 0.0, %v587
        %v589 = vpop.f32.mrb[0].mxu0
        %v590 = vpop.f32.mrb[0].mxu0
        %v591 = vadd.f32 0.0, %v590
        %v592 = vpop.f32.mrb[0].mxu0
        %593 = vdwg.mxu0
        %v594 = vpack.c.bf16 %v591, %v588
        %v595 = vld [vmem:[%s8] sm:$0xf]
        %v596 = vld [vmem:[%s8 + $0x4] sm:$0xf]
        %v597 = vld [vmem:[%s8 + $0x8] sm:$0xf]
        %v598 = vld [vmem:[%s8 + $0xc] sm:$0xf]
        %v599 = vld [vmem:[%s8 + $0x10] sm:$0xf]
        %v600 = vld [vmem:[%s8 + $0x14] sm:$0xf]
        %v601 = vunpack.c.l.bf16 %v595
        %v602 = vunpack.c.l.bf16 %v596
        %v603 = vunpack.c.l.bf16 %v597
        %v604 = vunpack.c.l.bf16 %v598
        %v605 = vunpack.c.l.bf16 %v599
        %v606 = vunpack.c.l.bf16 %v600
        %v607 = vld [vmem:[%s9] sm:$0xf]
        %v608 = vld [vmem:[%s9 + $0x4] sm:$0xf]
        %v609 = vld [vmem:[%s9 + $0x8] sm:$0xf]
        %v610 = vld [vmem:[%s9 + $0xc] sm:$0xf]
        %v611 = vld [vmem:[%s9 + $0x10] sm:$0xf]
        %v612 = vld [vmem:[%s9 + $0x14] sm:$0xf]
        %v619 = vunpack.c.l.b16 %v607
        %v620 = vunpack.c.l.b16 %v608
        %v621 = vunpack.c.l.b16 %v609
        %v622 = vunpack.c.l.b16 %v610
        %v623 = vunpack.c.l.b16 %v611
        %v624 = vunpack.c.l.b16 %v612
        %v625 = vpack.c.b16 %v620, %v619
        %v626 = vpack.c.b16 %v622, %v621
        %v627 = vpack.c.b16 %v624, %v623
        %vm628 = vcmask 97280
        %v630 = vsel %vm628, %v625, 0
        %v633 = vsel %vm628, %v626, 0
        %v636 = vsel %vm628, %v627, 0
        %vm638 = vcmask 1045504
        %v640 = vsel %vm638, %v536, 0
        %642 = vmatprep.subr.bf16.mxu0 0
        %643 = vmatpush1.bf16.msra.mxu0 %v640
        %644 = vmatprep.subr.bf16.mxu0 0
        %645 = vmatpush1.bf16.msra.mxu0 0
        %646 = vmatprep.subr.bf16.mxu0 0
        %647 = vmatpush1.bf16.msra.mxu0 0
        %648 = vmatprep.subr.bf16.mxu0 0
        %649 = vmatpush1.bf16.msra.mxu0 0
        %650 = vmatprep.subr.bf16.mxu0 0
        %651 = vmatpush1.bf16.msra.mxu0 0
        %652 = vmatprep.subr.bf16.mxu0 0
        %653 = vmatpush1.bf16.msra.mxu0 0
        %654 = vmatprep.subr.bf16.mxu0 0
        %655 = vmatpush1.bf16.msra.mxu0 0
        %656 = vmatprep.subr.bf16.mxu0 0
        %657 = vmatpush1.bf16.msra.mxu0 0
        %658 = vmatprep.subr.bf16.mxu0 0
        %659 = vmatpush1.bf16.msra.mxu0 0
        %660 = vmatprep.subr.bf16.mxu0 0
        %661 = vmatpush1.bf16.msra.mxu0 0
        %662 = vmatprep.subr.bf16.mxu0 0
        %663 = vmatpush1.bf16.msra.mxu0 0
        %664 = vmatprep.subr.bf16.mxu0 0
        %665 = vmatpush1.bf16.msra.mxu0 0
        %666 = vmatprep.subr.bf16.mxu0 0
        %667 = vmatpush1.bf16.msra.mxu0 0
        %668 = vmatprep.subr.bf16.mxu0 0
        %669 = vmatpush1.bf16.msra.mxu0 0
        %670 = vmatprep.subr.bf16.mxu0 0
        %671 = vmatpush1.bf16.msra.mxu0 0
        %672 = vmatprep.subr.bf16.mxu0 0
        %673 = vmatpush1.bf16.msra.mxu0 0
        %674 = vmatprep.mubr.bf16.mxu0 0
        %675 = vmatmul.mubr.bf16.gmra.mrb[0].mxu0 %v630
        %v676 = vpop.f32.mrb[0].mxu0
        %v677 = vadd.f32 0.0, %v676
        %v678 = vpop.f32.mrb[0].mxu0
        %v679 = vpop.f32.mrb[0].mxu0
        %v680 = vadd.f32 0.0, %v679
        %v681 = vpop.f32.mrb[0].mxu0
        %682 = vmatprep.mubr.bf16.mxu0 0
        %683 = vmatmul.mubr.bf16.gmra.mrb[0].mxu0 %v633
        %v684 = vpop.f32.mrb[0].mxu0
        %v685 = vadd.f32 0.0, %v684
        %v686 = vpop.f32.mrb[0].mxu0
        %v687 = vpop.f32.mrb[0].mxu0
        %v688 = vadd.f32 0.0, %v687
        %v689 = vpop.f32.mrb[0].mxu0
        %690 = vmatprep.mubr.bf16.mxu0 0
        %691 = vmatmul.mubr.bf16.gmra.mrb[0].mxu0 %v636
        %v692 = vpop.f32.mrb[0].mxu0
        %v693 = vadd.f32 0.0, %v692
        %v694 = vpop.f32.mrb[0].mxu0
        %v695 = vpop.f32.mrb[0].mxu0
        %v696 = vadd.f32 0.0, %v695
        %v697 = vpop.f32.mrb[0].mxu0
        %698 = vdwg.mxu0
        %v699 = vmul.f32 %v677, %v601
        %v700 = vmul.f32 %v680, %v602
        %v701 = vmul.f32 %v685, %v603
        %v702 = vmul.f32 %v688, %v604
        %v703 = vmul.f32 %v693, %v605
        %v704 = vmul.f32 %v696, %v606
        %v705 = vpack.c.bf16 %v700, %v699
        %v706 = vpack.c.bf16 %v702, %v701
        %v707 = vpack.c.bf16 %v704, %v703
        %708 = vst.msk [vmem:[#allocation2] sm:$0xff] %vm428, %v705
        %709 = vst.msk [vmem:[#allocation2 + $0x8] sm:$0xff] %vm428, %v706
        %710 = vst.msk [vmem:[#allocation2 + $0x10] sm:$0xff] %vm428, %v707
        %v712 = vsel %vm638, %v594, 0
        %714 = vmatprep.subr.bf16.mxu0 0
        %715 = vmatpush1.bf16.msra.mxu0 %v712
        %716 = vmatprep.subr.bf16.mxu0 0
        %717 = vmatpush1.bf16.msra.mxu0 0
        %718 = vmatprep.subr.bf16.mxu0 0
        %719 = vmatpush1.bf16.msra.mxu0 0
        %720 = vmatprep.subr.bf16.mxu0 0
        %721 = vmatpush1.bf16.msra.mxu0 0
        %722 = vmatprep.subr.bf16.mxu0 0
        %723 = vmatpush1.bf16.msra.mxu0 0
        %724 = vmatprep.subr.bf16.mxu0 0
        %725 = vmatpush1.bf16.msra.mxu0 0
        %726 = vmatprep.subr.bf16.mxu0 0
        %727 = vmatpush1.bf16.msra.mxu0 0
        %728 = vmatprep.subr.bf16.mxu0 0
        %729 = vmatpush1.bf16.msra.mxu0 0
        %730 = vmatprep.subr.bf16.mxu0 0
        %731 = vmatpush1.bf16.msra.mxu0 0
        %732 = vmatprep.subr.bf16.mxu0 0
        %733 = vmatpush1.bf16.msra.mxu0 0
        %734 = vmatprep.subr.bf16.mxu0 0
        %735 = vmatpush1.bf16.msra.mxu0 0
        %736 = vmatprep.subr.bf16.mxu0 0
        %737 = vmatpush1.bf16.msra.mxu0 0
        %738 = vmatprep.subr.bf16.mxu0 0
        %739 = vmatpush1.bf16.msra.mxu0 0
        %740 = vmatprep.subr.bf16.mxu0 0
        %741 = vmatpush1.bf16.msra.mxu0 0
        %742 = vmatprep.subr.bf16.mxu0 0
        %743 = vmatpush1.bf16.msra.mxu0 0
        %744 = vmatprep.subr.bf16.mxu0 0
        %745 = vmatpush1.bf16.msra.mxu0 0
        %746 = vmatprep.mubr.bf16.mxu0 0
        %747 = vmatmul.mubr.bf16.gmra.mrb[0].mxu0 %v630
        %v748 = vpop.f32.mrb[0].mxu0
        %v749 = vadd.f32 0.0, %v748
        %v750 = vpop.f32.mrb[0].mxu0
        %v751 = vpop.f32.mrb[0].mxu0
        %v752 = vadd.f32 0.0, %v751
        %v753 = vpop.f32.mrb[0].mxu0
        %754 = vmatprep.mubr.bf16.mxu0 0
        %755 = vmatmul.mubr.bf16.gmra.mrb[0].mxu0 %v633
        %v756 = vpop.f32.mrb[0].mxu0
        %v757 = vadd.f32 0.0, %v756
        %v758 = vpop.f32.mrb[0].mxu0
        %v759 = vpop.f32.mrb[0].mxu0
        %v760 = vadd.f32 0.0, %v759
        %v761 = vpop.f32.mrb[0].mxu0
        %762 = vmatprep.mubr.bf16.mxu0 0
        %763 = vmatmul.mubr.bf16.gmra.mrb[0].mxu0 %v636
        %v764 = vpop.f32.mrb[0].mxu0
        %v765 = vadd.f32 0.0, %v764
        %v766 = vpop.f32.mrb[0].mxu0
        %v767 = vpop.f32.mrb[0].mxu0
        %v768 = vadd.f32 0.0, %v767
        %v769 = vpop.f32.mrb[0].mxu0
        %770 = vdwg.mxu0
        %v771 = vmul.f32 %v749, %v601
        %v772 = vmul.f32 %v752, %v602
        %v773 = vmul.f32 %v757, %v603
        %v774 = vmul.f32 %v760, %v604
        %v775 = vmul.f32 %v765, %v605
        %v776 = vmul.f32 %v768, %v606
        %v777 = vpack.c.bf16 %v772, %v771
        %v778 = vpack.c.bf16 %v774, %v773
        %v779 = vpack.c.bf16 %v776, %v775
        %s780 = scalar_lea.vmem [#allocation2], 24
        %781 = vst.msk [vmem:[%s780] sm:$0xff] %vm428, %v777
        %782 = vst.msk [vmem:[%s780 + $0x8] sm:$0xff] %vm428, %v778
        %783 = vst.msk [vmem:[%s780 + $0x10] sm:$0xff] %vm428, %v779
      $region64: #{attention_forward.1} parent=59 // pred_fallthru
        _
      %v784 = vld [vmem:[%s402] sm:$0xf]
      %v785 = vld [vmem:[%s402 + $0x4] sm:$0xf]
      %v786 = vld [vmem:[%s402 + $0x8] sm:$0xf]
      %v787 = vld [vmem:[%s402 + $0xc] sm:$0xf]
      %v788 = vld [vmem:[%s402 + $0x10] sm:$0xf]
      %v789 = vld [vmem:[%s402 + $0x14] sm:$0xf]
      %v790 = vld [vmem:[%s402 + $0x18] sm:$0xf]
      %v791 = vld [vmem:[%s402 + $0x1c] sm:$0xf]
      %v792 = vld [vmem:[%s402 + $0x20] sm:$0xf]
      %v793 = vld [vmem:[%s402 + $0x24] sm:$0xf]
      %v794 = vld [vmem:[%s402 + $0x28] sm:$0xf]
      %v795 = vld [vmem:[%s402 + $0x2c] sm:$0xf]
      %v796 = vld [vmem:[%s402 + $0x30] sm:$0xf]
      %v797 = vld [vmem:[%s402 + $0x34] sm:$0xf]
      %v798 = vld [vmem:[%s402 + $0x38] sm:$0xf]
      %v799 = vld [vmem:[%s402 + $0x3c] sm:$0xf]
      %v800 = vld [vmem:[%s402 + $0x40] sm:$0xf]
      %v801 = vld [vmem:[%s402 + $0x44] sm:$0xf]
      %v802 = vld [vmem:[%s402 + $0x48] sm:$0xf]
      %v803 = vld [vmem:[%s402 + $0x4c] sm:$0xf]
      %v804 = vld [vmem:[%s402 + $0x50] sm:$0xf]
      %v805 = vld [vmem:[%s402 + $0x54] sm:$0xf]
      %v806 = vld [vmem:[%s402 + $0x58] sm:$0xf]
      %v807 = vld [vmem:[%s402 + $0x5c] sm:$0xf]
      %v808 = vld [vmem:[%s402 + $0x60] sm:$0xf]
      %v809 = vld [vmem:[%s402 + $0x64] sm:$0xf]
      %v810 = vld [vmem:[%s402 + $0x68] sm:$0xf]
      %v811 = vld [vmem:[%s402 + $0x6c] sm:$0xf]
      %v812 = vld [vmem:[%s402 + $0x70] sm:$0xf]
      %v813 = vld [vmem:[%s402 + $0x74] sm:$0xf]
      %v814 = vld [vmem:[%s402 + $0x78] sm:$0xf]
      %v815 = vld [vmem:[%s402 + $0x7c] sm:$0xf]
      %v816 = vld [vmem:[%s4] sm:$0xf]
      %v817 = vld [vmem:[%s4 + $0x4] sm:$0xf]
      %v818 = vld [vmem:[%s4 + $0x8] sm:$0xf]
      %v819 = vld [vmem:[%s4 + $0xc] sm:$0xf]
      %v852 = vunpack.c.l.b16 %v784
      %v853 = vunpack.c.l.b16 %v785
      %v854 = vunpack.c.l.b16 %v786
      %v855 = vunpack.c.l.b16 %v787
      %v856 = vunpack.c.l.b16 %v788
      %v857 = vunpack.c.l.b16 %v789
      %v858 = vunpack.c.l.b16 %v790
      %v859 = vunpack.c.l.b16 %v791
      %v860 = vunpack.c.l.b16 %v792
      %v861 = vunpack.c.l.b16 %v793
      %v862 = vunpack.c.l.b16 %v794
      %v863 = vunpack.c.l.b16 %v795
      %v864 = vunpack.c.l.b16 %v796
      %v865 = vunpack.c.l.b16 %v797
      %v866 = vunpack.c.l.b16 %v798
      %v867 = vunpack.c.l.b16 %v799
      %v868 = vunpack.c.l.b16 %v800
      %v869 = vunpack.c.l.b16 %v801
      %v870 = vunpack.c.l.b16 %v802
      %v871 = vunpack.c.l.b16 %v803
      %v872 = vunpack.c.l.b16 %v804
      %v873 = vunpack.c.l.b16 %v805
      %v874 = vunpack.c.l.b16 %v806
      %v875 = vunpack.c.l.b16 %v807
      %v876 = vunpack.c.l.b16 %v808
      %v877 = vunpack.c.l.b16 %v809
      %v878 = vunpack.c.l.b16 %v810
      %v879 = vunpack.c.l.b16 %v811
      %v880 = vunpack.c.l.b16 %v812
      %v881 = vunpack.c.l.b16 %v813
      %v882 = vunpack.c.l.b16 %v814
      %v883 = vunpack.c.l.b16 %v815
      %v884 = vpack.c.b16 %v853, %v852
      %v885 = vpack.c.b16 %v855, %v854
      %v886 = vpack.c.b16 %v857, %v856
      %v887 = vpack.c.b16 %v859, %v858
      %v888 = vpack.c.b16 %v861, %v860
      %v889 = vpack.c.b16 %v863, %v862
      %v890 = vpack.c.b16 %v865, %v864
      %v891 = vpack.c.b16 %v867, %v866
      %v892 = vpack.c.b16 %v869, %v868
      %v893 = vpack.c.b16 %v871, %v870
      %v894 = vpack.c.b16 %v873, %v872
      %v895 = vpack.c.b16 %v875, %v874
      %v896 = vpack.c.b16 %v877, %v876
      %v897 = vpack.c.b16 %v879, %v878
      %v898 = vpack.c.b16 %v881, %v880
      %v899 = vpack.c.b16 %v883, %v882
      %v904 = vunpack.c.l.b16 %v816
      %v905 = vunpack.c.l.b16 %v817
      %v906 = vunpack.c.l.b16 %v818
      %v907 = vunpack.c.l.b16 %v819
      %v908 = vpack.c.b16 %v905, %v904
      %v909 = vpack.c.b16 %v907, %v906
      %vm912 = vcmask 261120
      %v914 = vsel %vm912, %v884, 0
      %v917 = vsel %vm912, %v885, 0
      %v920 = vsel %vm912, %v886, 0
      %v923 = vsel %vm912, %v887, 0
      %v926 = vsel %vm912, %v888, 0
      %v929 = vsel %vm912, %v889, 0
      %v932 = vsel %vm912, %v890, 0
      %v935 = vsel %vm912, %v891, 0
      %v938 = vsel %vm912, %v892, 0
      %v941 = vsel %vm912, %v893, 0
      %v944 = vsel %vm912, %v894, 0
      %v947 = vsel %vm912, %v895, 0
      %v950 = vsel %vm912, %v896, 0
      %v953 = vsel %vm912, %v897, 0
      %v956 = vsel %vm912, %v898, 0
      %v959 = vsel %vm912, %v899, 0
      %961 = vmatprep.subr.bf16.mxu0 0
      %962 = vmatpush1.bf16.msra.mxu0 %v908
      %963 = vmatprep.subr.bf16.mxu0 0
      %964 = vmatpush1.bf16.msra.mxu0 %v909
      %965 = vmatprep.subr.bf16.mxu0 0
      %966 = vmatpush1.bf16.msra.mxu0 0
      %967 = vmatprep.subr.bf16.mxu0 0
      %968 = vmatpush1.bf16.msra.mxu0 0
      %969 = vmatprep.subr.bf16.mxu0 0
      %970 = vmatpush1.bf16.msra.mxu0 0
      %971 = vmatprep.subr.bf16.mxu0 0
      %972 = vmatpush1.bf16.msra.mxu0 0
      %973 = vmatprep.subr.bf16.mxu0 0
      %974 = vmatpush1.bf16.msra.mxu0 0
      %975 = vmatprep.subr.bf16.mxu0 0
      %976 = vmatpush1.bf16.msra.mxu0 0
      %977 = vmatprep.subr.bf16.mxu0 0
      %978 = vmatpush1.bf16.msra.mxu0 0
      %979 = vmatprep.subr.bf16.mxu0 0
      %980 = vmatpush1.bf16.msra.mxu0 0
      %981 = vmatprep.subr.bf16.mxu0 0
      %982 = vmatpush1.bf16.msra.mxu0 0
      %983 = vmatprep.subr.bf16.mxu0 0
      %984 = vmatpush1.bf16.msra.mxu0 0
      %985 = vmatprep.subr.bf16.mxu0 0
      %986 = vmatpush1.bf16.msra.mxu0 0
      %987 = vmatprep.subr.bf16.mxu0 0
      %988 = vmatpush1.bf16.msra.mxu0 0
      %989 = vmatprep.subr.bf16.mxu0 0
      %990 = vmatpush1.bf16.msra.mxu0 0
      %991 = vmatprep.subr.bf16.mxu0 0
      %992 = vmatpush1.bf16.msra.mxu0 0
      %993 = vmatprep.mubr.bf16.mxu0 0
      %994 = vmatmul.mubr.bf16.gmra.mrb[0].mxu0 %v914
      %v995 = vpop.f32.mrb[0].mxu0
      %v996 = vadd.f32 0.0, %v995
      %v997 = vpop.f32.mrb[0].mxu0
      %v998 = vpop.f32.mrb[0].mxu0
      %v999 = vadd.f32 0.0, %v998
      %v1000 = vpop.f32.mrb[0].mxu0
      %1001 = vmatprep.mubr.bf16.mxu0 0
      %1002 = vmatmul.mubr.bf16.gmra.mrb[0].mxu0 %v917
      %v1003 = vpop.f32.mrb[0].mxu0
      %v1004 = vadd.f32 0.0, %v1003
      %v1005 = vpop.f32.mrb[0].mxu0
      %v1006 = vpop.f32.mrb[0].mxu0
      %v1007 = vadd.f32 0.0, %v1006
      %v1008 = vpop.f32.mrb[0].mxu0
      %1009 = vmatprep.mubr.bf16.mxu0 0
      %1010 = vmatmul.mubr.bf16.gmra.mrb[0].mxu0 %v920
      %v1011 = vpop.f32.mrb[0].mxu0
      %v1012 = vadd.f32 0.0, %v1011
      %v1013 = vpop.f32.mrb[0].mxu0
      %v1014 = vpop.f32.mrb[0].mxu0
      %v1015 = vadd.f32 0.0, %v1014
      %v1016 = vpop.f32.mrb[0].mxu0
      %1017 = vmatprep.mubr.bf16.mxu0 0
      %1018 = vmatmul.mubr.bf16.gmra.mrb[0].mxu0 %v923
      %v1019 = vpop.f32.mrb[0].mxu0
      %v1020 = vadd.f32 0.0, %v1019
      %v1021 = vpop.f32.mrb[0].mxu0
      %v1022 = vpop.f32.mrb[0].mxu0
      %v1023 = vadd.f32 0.0, %v1022
      %v1024 = vpop.f32.mrb[0].mxu0
      %1025 = vmatprep.mubr.bf16.mxu0 0
      %1026 = vmatmul.mubr.bf16.gmra.mrb[0].mxu0 %v926
      %v1027 = vpop.f32.mrb[0].mxu0
      %v1028 = vadd.f32 0.0, %v1027
      %v1029 = vpop.f32.mrb[0].mxu0
      %v1030 = vpop.f32.mrb[0].mxu0
      %v1031 = vadd.f32 0.0, %v1030
      %v1032 = vpop.f32.mrb[0].mxu0
      %1033 = vmatprep.mubr.bf16.mxu0 0
      %1034 = vmatmul.mubr.bf16.gmra.mrb[0].mxu0 %v929
      %v1035 = vpop.f32.mrb[0].mxu0
      %v1036 = vadd.f32 0.0, %v1035
      %v1037 = vpop.f32.mrb[0].mxu0
      %v1038 = vpop.f32.mrb[0].mxu0
      %v1039 = vadd.f32 0.0, %v1038
      %v1040 = vpop.f32.mrb[0].mxu0
      %1041 = vmatprep.mubr.bf16.mxu0 0
      %1042 = vmatmul.mubr.bf16.gmra.mrb[0].mxu0 %v932
      %v1043 = vpop.f32.mrb[0].mxu0
      %v1044 = vadd.f32 0.0, %v1043
      %v1045 = vpop.f32.mrb[0].mxu0
      %v1046 = vpop.f32.mrb[0].mxu0
      %v1047 = vadd.f32 0.0, %v1046
      %v1048 = vpop.f32.mrb[0].mxu0
      %1049 = vmatprep.mubr.bf16.mxu0 0
      %1050 = vmatmul.mubr.bf16.gmra.mrb[0].mxu0 %v935
      %v1051 = vpop.f32.mrb[0].mxu0
      %v1052 = vadd.f32 0.0, %v1051
      %v1053 = vpop.f32.mrb[0].mxu0
      %v1054 = vpop.f32.mrb[0].mxu0
      %v1055 = vadd.f32 0.0, %v1054
      %v1056 = vpop.f32.mrb[0].mxu0
      %1057 = vmatprep.mubr.bf16.mxu0 0
      %1058 = vmatmul.mubr.bf16.gmra.mrb[0].mxu0 %v938
      %v1059 = vpop.f32.mrb[0].mxu0
      %v1060 = vadd.f32 0.0, %v1059
      %v1061 = vpop.f32.mrb[0].mxu0
      %v1062 = vpop.f32.mrb[0].mxu0
      %v1063 = vadd.f32 0.0, %v1062
      %v1064 = vpop.f32.mrb[0].mxu0
      %1065 = vmatprep.mubr.bf16.mxu0 0
      %1066 = vmatmul.mubr.bf16.gmra.mrb[0].mxu0 %v941
      %v1067 = vpop.f32.mrb[0].mxu0
      %v1068 = vadd.f32 0.0, %v1067
      %v1069 = vpop.f32.mrb[0].mxu0
      %v1070 = vpop.f32.mrb[0].mxu0
      %v1071 = vadd.f32 0.0, %v1070
      %v1072 = vpop.f32.mrb[0].mxu0
      %1073 = vmatprep.mubr.bf16.mxu0 0
      %1074 = vmatmul.mubr.bf16.gmra.mrb[0].mxu0 %v944
      %v1075 = vpop.f32.mrb[0].mxu0
      %v1076 = vadd.f32 0.0, %v1075
      %v1077 = vpop.f32.mrb[0].mxu0
      %v1078 = vpop.f32.mrb[0].mxu0
      %v1079 = vadd.f32 0.0, %v1078
      %v1080 = vpop.f32.mrb[0].mxu0
      %1081 = vmatprep.mubr.bf16.mxu0 0
      %1082 = vmatmul.mubr.bf16.gmra.mrb[0].mxu0 %v947
      %v1083 = vpop.f32.mrb[0].mxu0
      %v1084 = vadd.f32 0.0, %v1083
      %v1085 = vpop.f32.mrb[0].mxu0
      %v1086 = vpop.f32.mrb[0].mxu0
      %v1087 = vadd.f32 0.0, %v1086
      %v1088 = vpop.f32.mrb[0].mxu0
      %1089 = vmatprep.mubr.bf16.mxu0 0
      %1090 = vmatmul.mubr.bf16.gmra.mrb[0].mxu0 %v950
      %v1091 = vpop.f32.mrb[0].mxu0
      %v1092 = vadd.f32 0.0, %v1091
      %v1093 = vpop.f32.mrb[0].mxu0
      %v1094 = vpop.f32.mrb[0].mxu0
      %v1095 = vadd.f32 0.0, %v1094
      %v1096 = vpop.f32.mrb[0].mxu0
      %1097 = vmatprep.mubr.bf16.mxu0 0
      %1098 = vmatmul.mubr.bf16.gmra.mrb[0].mxu0 %v953
      %v1099 = vpop.f32.mrb[0].mxu0
      %v1100 = vadd.f32 0.0, %v1099
      %v1101 = vpop.f32.mrb[0].mxu0
      %v1102 = vpop.f32.mrb[0].mxu0
      %v1103 = vadd.f32 0.0, %v1102
      %v1104 = vpop.f32.mrb[0].mxu0
      %1105 = vmatprep.mubr.bf16.mxu0 0
      %1106 = vmatmul.mubr.bf16.gmra.mrb[0].mxu0 %v956
      %v1107 = vpop.f32.mrb[0].mxu0
      %v1108 = vadd.f32 0.0, %v1107
      %v1109 = vpop.f32.mrb[0].mxu0
      %v1110 = vpop.f32.mrb[0].mxu0
      %v1111 = vadd.f32 0.0, %v1110
      %v1112 = vpop.f32.mrb[0].mxu0
      %1113 = vmatprep.mubr.bf16.mxu0 0
      %1114 = vmatmul.mubr.bf16.gmra.mrb[0].mxu0 %v959
      %v1115 = vpop.f32.mrb[0].mxu0
      %v1116 = vadd.f32 0.0, %v1115
      %v1117 = vpop.f32.mrb[0].mxu0
      %v1118 = vpop.f32.mrb[0].mxu0
      %v1119 = vadd.f32 0.0, %v1118
      %v1120 = vpop.f32.mrb[0].mxu0
      %1121 = vdwg.mxu0
      %v1122 = vld [vmem:[#allocation2] sm:$0xff]
      %v1123 = vld [vmem:[#allocation2 + $0x8] sm:$0xff]
      %v1124 = vld [vmem:[#allocation2 + $0x10] sm:$0xff]
      %s1125 = scalar_lea.vmem [#allocation2], 24
      %v1126 = vld [vmem:[%s1125] sm:$0xff]
      %v1127 = vld [vmem:[%s1125 + $0x8] sm:$0xff]
      %v1128 = vld [vmem:[%s1125 + $0x10] sm:$0xff]
      %v1129 = vpack.c.bf16 %v999, %v996
      %v1130 = vpack.c.bf16 %v1007, %v1004
      %v1131 = vpack.c.bf16 %v1015, %v1012
      %v1132 = vpack.c.bf16 %v1023, %v1020
      %v1133 = vpack.c.bf16 %v1031, %v1028
      %v1134 = vpack.c.bf16 %v1039, %v1036
      %v1135 = vpack.c.bf16 %v1047, %v1044
      %v1136 = vpack.c.bf16 %v1055, %v1052
      %v1137 = vpack.c.bf16 %v1063, %v1060
      %v1138 = vpack.c.bf16 %v1071, %v1068
      %v1139 = vpack.c.bf16 %v1079, %v1076
      %v1140 = vpack.c.bf16 %v1087, %v1084
      %v1141 = vpack.c.bf16 %v1095, %v1092
      %v1142 = vpack.c.bf16 %v1103, %v1100
      %v1143 = vpack.c.bf16 %v1111, %v1108
      %v1144 = vpack.c.bf16 %v1119, %v1116
      %v1146 = vsel %vm912, %v1129, 0
      %v1149 = vsel %vm912, %v1130, 0
      %v1152 = vsel %vm912, %v1131, 0
      %v1155 = vsel %vm912, %v1132, 0
      %v1158 = vsel %vm912, %v1133, 0
      %v1161 = vsel %vm912, %v1134, 0
      %v1164 = vsel %vm912, %v1135, 0
      %v1167 = vsel %vm912, %v1136, 0
      %v1170 = vsel %vm912, %v1137, 0
      %v1173 = vsel %vm912, %v1138, 0
      %v1176 = vsel %vm912, %v1139, 0
      %v1179 = vsel %vm912, %v1140, 0
      %v1182 = vsel %vm912, %v1141, 0
      %v1185 = vsel %vm912, %v1142, 0
      %v1188 = vsel %vm912, %v1143, 0
      %v1191 = vsel %vm912, %v1144, 0
      %v1194 = vsel %vm912, %v1122, 0
      %v1197 = vsel %vm912, %v1123, 0
      %v1200 = vsel %vm912, %v1124, 0
      %1202 = vmatprep.subr.bf16.mxu0 0
      %1203 = vmatpush1.bf16.xpose.msra.mxu0 %v1194
      %1204 = vmatprep.subr.bf16.mxu0 0
      %1205 = vmatpush1.bf16.xpose.msra.mxu0 %v1197
      %1206 = vmatprep.subr.bf16.mxu0 0
      %1207 = vmatpush1.bf16.xpose.msra.mxu0 %v1200
      %1208 = vmatprep.subr.bf16.mxu0 0
      %1209 = vmatpush1.bf16.xpose.msra.mxu0 0
      %1210 = vmatprep.subr.bf16.mxu0 0
      %1211 = vmatpush1.bf16.xpose.msra.mxu0 0
      %1212 = vmatprep.subr.bf16.mxu0 0
      %1213 = vmatpush1.bf16.xpose.msra.mxu0 0
      %1214 = vmatprep.subr.bf16.mxu0 0
      %1215 = vmatpush1.bf16.xpose.msra.mxu0 0
      %1216 = vmatprep.subr.bf16.mxu0 0
      %1217 = vmatpush1.bf16.xpose.msra.mxu0 0
      %1218 = vmatprep.subr.bf16.mxu0 0
      %1219 = vmatpush1.bf16.xpose.msra.mxu0 0
      %1220 = vmatprep.subr.bf16.mxu0 0
      %1221 = vmatpush1.bf16.xpose.msra.mxu0 0
      %1222 = vmatprep.subr.bf16.mxu0 0
      %1223 = vmatpush1.bf16.xpose.msra.mxu0 0
      %1224 = vmatprep.subr.bf16.mxu0 0
      %1225 = vmatpush1.bf16.xpose.msra.mxu0 0
      %1226 = vmatprep.subr.bf16.mxu0 0
      %1227 = vmatpush1.bf16.xpose.msra.mxu0 0
      %1228 = vmatprep.subr.bf16.mxu0 0
      %1229 = vmatpush1.bf16.xpose.msra.mxu0 0
      %1230 = vmatprep.subr.bf16.mxu0 0
      %1231 = vmatpush1.bf16.xpose.msra.mxu0 0
      %1232 = vmatprep.subr.bf16.mxu0 0
      %1233 = vmatpush1.bf16.xpose.msra.mxu0 0
      %1234 = vmatprep.mubr.bf16.mxu0 0
      %1235 = vmatmul.mubr.bf16.gmra.mrb[0].mxu0 %v1146
      %v1236 = vpop.f32.mrb[0].mxu0
      %v1237 = vadd.f32 0.0, %v1236
      %v1238 = vpop.f32.mrb[0].mxu0
      %v1239 = vpop.f32.mrb[0].mxu0
      %v1240 = vadd.f32 0.0, %v1239
      %v1241 = vpop.f32.mrb[0].mxu0
      %1242 = vmatprep.mubr.bf16.mxu0 0
      %1243 = vmatmul.mubr.bf16.gmra.mrb[0].mxu0 %v1149
      %v1244 = vpop.f32.mrb[0].mxu0
      %v1245 = vadd.f32 0.0, %v1244
      %v1246 = vpop.f32.mrb[0].mxu0
      %v1247 = vpop.f32.mrb[0].mxu0
      %v1248 = vadd.f32 0.0, %v1247
      %v1249 = vpop.f32.mrb[0].mxu0
      %1250 = vmatprep.mubr.bf16.mxu0 0
      %1251 = vmatmul.mubr.bf16.gmra.mrb[0].mxu0 %v1152
      %v1252 = vpop.f32.mrb[0].mxu0
      %v1253 = vadd.f32 0.0, %v1252
      %v1254 = vpop.f32.mrb[0].mxu0
      %v1255 = vpop.f32.mrb[0].mxu0
      %v1256 = vadd.f32 0.0, %v1255
      %v1257 = vpop.f32.mrb[0].mxu0
      %1258 = vmatprep.mubr.bf16.mxu0 0
      %1259 = vmatmul.mubr.bf16.gmra.mrb[0].mxu0 %v1155
      %v1260 = vpop.f32.mrb[0].mxu0
      %v1261 = vadd.f32 0.0, %v1260
      %v1262 = vpop.f32.mrb[0].mxu0
      %v1263 = vpop.f32.mrb[0].mxu0
      %v1264 = vadd.f32 0.0, %v1263
      %v1265 = vpop.f32.mrb[0].mxu0
      %1266 = vmatprep.mubr.bf16.mxu0 0
      %1267 = vmatmul.mubr.bf16.gmra.mrb[0].mxu0 %v1158
      %v1268 = vpop.f32.mrb[0].mxu0
      %v1269 = vadd.f32 0.0, %v1268
      %v1270 = vpop.f32.mrb[0].mxu0
      %v1271 = vpop.f32.mrb[0].mxu0
      %v1272 = vadd.f32 0.0, %v1271
      %v1273 = vpop.f32.mrb[0].mxu0
      %1274 = vmatprep.mubr.bf16.mxu0 0
      %1275 = vmatmul.mubr.bf16.gmra.mrb[0].mxu0 %v1161
      %v1276 = vpop.f32.mrb[0].mxu0
      %v1277 = vadd.f32 0.0, %v1276
      %v1278 = vpop.f32.mrb[0].mxu0
      %v1279 = vpop.f32.mrb[0].mxu0
      %v1280 = vadd.f32 0.0, %v1279
      %v1281 = vpop.f32.mrb[0].mxu0
      %1282 = vmatprep.mubr.bf16.mxu0 0
      %1283 = vmatmul.mubr.bf16.gmra.mrb[0].mxu0 %v1164
      %v1284 = vpop.f32.mrb[0].mxu0
      %v1285 = vadd.f32 0.0, %v1284
      %v1286 = vpop.f32.mrb[0].mxu0
      %v1287 = vpop.f32.mrb[0].mxu0
      %v1288 = vadd.f32 0.0, %v1287
      %v1289 = vpop.f32.mrb[0].mxu0
      %1290 = vmatprep.mubr.bf16.mxu0 0
      %1291 = vmatmul.mubr.bf16.gmra.mrb[0].mxu0 %v1167
      %v1292 = vpop.f32.mrb[0].mxu0
      %v1293 = vadd.f32 0.0, %v1292
      %v1294 = vpop.f32.mrb[0].mxu0
      %v1295 = vpop.f32.mrb[0].mxu0
      %v1296 = vadd.f32 0.0, %v1295
      %v1297 = vpop.f32.mrb[0].mxu0
      %1298 = vmatprep.mubr.bf16.mxu0 0
      %1299 = vmatmul.mubr.bf16.gmra.mrb[0].mxu0 %v1170
      %v1300 = vpop.f32.mrb[0].mxu0
      %v1301 = vadd.f32 0.0, %v1300
      %v1302 = vpop.f32.mrb[0].mxu0
      %v1303 = vpop.f32.mrb[0].mxu0
      %v1304 = vadd.f32 0.0, %v1303
      %v1305 = vpop.f32.mrb[0].mxu0
      %1306 = vmatprep.mubr.bf16.mxu0 0
      %1307 = vmatmul.mubr.bf16.gmra.mrb[0].mxu0 %v1173
      %v1308 = vpop.f32.mrb[0].mxu0
      %v1309 = vadd.f32 0.0, %v1308
      %v1310 = vpop.f32.mrb[0].mxu0
      %v1311 = vpop.f32.mrb[0].mxu0
      %v1312 = vadd.f32 0.0, %v1311
      %v1313 = vpop.f32.mrb[0].mxu0
      %1314 = vmatprep.mubr.bf16.mxu0 0
      %1315 = vmatmul.mubr.bf16.gmra.mrb[0].mxu0 %v1176
      %v1316 = vpop.f32.mrb[0].mxu0
      %v1317 = vadd.f32 0.0, %v1316
      %v1318 = vpop.f32.mrb[0].mxu0
      %v1319 = vpop.f32.mrb[0].mxu0
      %v1320 = vadd.f32 0.0, %v1319
      %v1321 = vpop.f32.mrb[0].mxu0
      %1322 = vmatprep.mubr.bf16.mxu0 0
      %1323 = vmatmul.mubr.bf16.gmra.mrb[0].mxu0 %v1179
      %v1324 = vpop.f32.mrb[0].mxu0
      %v1325 = vadd.f32 0.0, %v1324
      %v1326 = vpop.f32.mrb[0].mxu0
      %v1327 = vpop.f32.mrb[0].mxu0
      %v1328 = vadd.f32 0.0, %v1327
      %v1329 = vpop.f32.mrb[0].mxu0
      %1330 = vmatprep.mubr.bf16.mxu0 0
      %1331 = vmatmul.mubr.bf16.gmra.mrb[0].mxu0 %v1182
      %v1332 = vpop.f32.mrb[0].mxu0
      %v1333 = vadd.f32 0.0, %v1332
      %v1334 = vpop.f32.mrb[0].mxu0
      %v1335 = vpop.f32.mrb[0].mxu0
      %v1336 = vadd.f32 0.0, %v1335
      %v1337 = vpop.f32.mrb[0].mxu0
      %1338 = vmatprep.mubr.bf16.mxu0 0
      %1339 = vmatmul.mubr.bf16.gmra.mrb[0].mxu0 %v1185
      %v1340 = vpop.f32.mrb[0].mxu0
      %v1341 = vadd.f32 0.0, %v1340
      %v1342 = vpop.f32.mrb[0].mxu0
      %v1343 = vpop.f32.mrb[0].mxu0
      %v1344 = vadd.f32 0.0, %v1343
      %v1345 = vpop.f32.mrb[0].mxu0
      %1346 = vmatprep.mubr.bf16.mxu0 0
      %1347 = vmatmul.mubr.bf16.gmra.mrb[0].mxu0 %v1188
      %v1348 = vpop.f32.mrb[0].mxu0
      %v1349 = vadd.f32 0.0, %v1348
      %v1350 = vpop.f32.mrb[0].mxu0
      %v1351 = vpop.f32.mrb[0].mxu0
      %v1352 = vadd.f32 0.0, %v1351
      %v1353 = vpop.f32.mrb[0].mxu0
      %1354 = vmatprep.mubr.bf16.mxu0 0
      %1355 = vmatmul.mubr.bf16.gmra.mrb[0].mxu0 %v1191
      %v1356 = vpop.f32.mrb[0].mxu0
      %v1357 = vadd.f32 0.0, %v1356
      %v1358 = vpop.f32.mrb[0].mxu0
      %v1359 = vpop.f32.mrb[0].mxu0
      %v1360 = vadd.f32 0.0, %v1359
      %v1361 = vpop.f32.mrb[0].mxu0
      %1362 = vdwg.mxu0
      %vm1363 = vcmask 392192
      %v1364 = vsel %vm1363, %v1237, -inf
      %1365 = vmax.xlane.f32.xlu0 %v1364
      %v1366 = vpop.xlane.xlu0 %1365
      %v1367 = vsel %vm1363, %v1240, -inf
      %1368 = vmax.xlane.f32.xlu0 %v1367
      %v1369 = vpop.xlane.xlu0 %1368
      %v1370 = vsel %vm1363, %v1245, -inf
      %1371 = vmax.xlane.f32.xlu0 %v1370
      %v1372 = vpop.xlane.xlu0 %1371
      %v1373 = vsel %vm1363, %v1248, -inf
      %1374 = vmax.xlane.f32.xlu0 %v1373
      %v1375 = vpop.xlane.xlu0 %1374
      %v1376 = vsel %vm1363, %v1253, -inf
      %1377 = vmax.xlane.f32.xlu0 %v1376
      %v1378 = vpop.xlane.xlu0 %1377
      %v1379 = vsel %vm1363, %v1256, -inf
      %1380 = vmax.xlane.f32.xlu0 %v1379
      %v1381 = vpop.xlane.xlu0 %1380
      %v1382 = vsel %vm1363, %v1261, -inf
      %1383 = vmax.xlane.f32.xlu0 %v1382
      %v1384 = vpop.xlane.xlu0 %1383
      %v1385 = vsel %vm1363, %v1264, -inf
      %1386 = vmax.xlane.f32.xlu0 %v1385
      %v1387 = vpop.xlane.xlu0 %1386
      %v1388 = vsel %vm1363, %v1269, -inf
      %1389 = vmax.xlane.f32.xlu0 %v1388
      %v1390 = vpop.xlane.xlu0 %1389
      %v1391 = vsel %vm1363, %v1272, -inf
      %1392 = vmax.xlane.f32.xlu0 %v1391
      %v1393 = vpop.xlane.xlu0 %1392
      %v1394 = vsel %vm1363, %v1277, -inf
      %1395 = vmax.xlane.f32.xlu0 %v1394
      %v1396 = vpop.xlane.xlu0 %1395
      %v1397 = vsel %vm1363, %v1280, -inf
      %1398 = vmax.xlane.f32.xlu0 %v1397
      %v1399 = vpop.xlane.xlu0 %1398
      %v1400 = vsel %vm1363, %v1285, -inf
      %1401 = vmax.xlane.f32.xlu0 %v1400
      %v1402 = vpop.xlane.xlu0 %1401
      %v1403 = vsel %vm1363, %v1288, -inf
      %1404 = vmax.xlane.f32.xlu0 %v1403
      %v1405 = vpop.xlane.xlu0 %1404
      %v1406 = vsel %vm1363, %v1293, -inf
      %1407 = vmax.xlane.f32.xlu0 %v1406
      %v1408 = vpop.xlane.xlu0 %1407
      %v1409 = vsel %vm1363, %v1296, -inf
      %1410 = vmax.xlane.f32.xlu0 %v1409
      %v1411 = vpop.xlane.xlu0 %1410
      %v1412 = vsel %vm1363, %v1301, -inf
      %1413 = vmax.xlane.f32.xlu0 %v1412
      %v1414 = vpop.xlane.xlu0 %1413
      %v1415 = vsel %vm1363, %v1304, -inf
      %1416 = vmax.xlane.f32.xlu0 %v1415
      %v1417 = vpop.xlane.xlu0 %1416
      %v1418 = vsel %vm1363, %v1309, -inf
      %1419 = vmax.xlane.f32.xlu0 %v1418
      %v1420 = vpop.xlane.xlu0 %1419
      %v1421 = vsel %vm1363, %v1312, -inf
      %1422 = vmax.xlane.f32.xlu0 %v1421
      %v1423 = vpop.xlane.xlu0 %1422
      %v1424 = vsel %vm1363, %v1317, -inf
      %1425 = vmax.xlane.f32.xlu0 %v1424
      %v1426 = vpop.xlane.xlu0 %1425
      %v1427 = vsel %vm1363, %v1320, -inf
      %1428 = vmax.xlane.f32.xlu0 %v1427
      %v1429 = vpop.xlane.xlu0 %1428
      %v1430 = vsel %vm1363, %v1325, -inf
      %1431 = vmax.xlane.f32.xlu0 %v1430
      %v1432 = vpop.xlane.xlu0 %1431
      %v1433 = vsel %vm1363, %v1328, -inf
      %1434 = vmax.xlane.f32.xlu0 %v1433
      %v1435 = vpop.xlane.xlu0 %1434
      %v1436 = vsel %vm1363, %v1333, -inf
      %1437 = vmax.xlane.f32.xlu0 %v1436
      %v1438 = vpop.xlane.xlu0 %1437
      %v1439 = vsel %vm1363, %v1336, -inf
      %1440 = vmax.xlane.f32.xlu0 %v1439
      %v1441 = vpop.xlane.xlu0 %1440
      %v1442 = vsel %vm1363, %v1341, -inf
      %1443 = vmax.xlane.f32.xlu0 %v1442
      %v1444 = vpop.xlane.xlu0 %1443
      %v1445 = vsel %vm1363, %v1344, -inf
      %1446 = vmax.xlane.f32.xlu0 %v1445
      %v1447 = vpop.xlane.xlu0 %1446
      %v1448 = vsel %vm1363, %v1349, -inf
      %1449 = vmax.xlane.f32.xlu0 %v1448
      %v1450 = vpop.xlane.xlu0 %1449
      %v1451 = vsel %vm1363, %v1352, -inf
      %1452 = vmax.xlane.f32.xlu0 %v1451
      %v1453 = vpop.xlane.xlu0 %1452
      %v1454 = vsel %vm1363, %v1357, -inf
      %1455 = vmax.xlane.f32.xlu0 %v1454
      %v1456 = vpop.xlane.xlu0 %1455
      %v1457 = vsel %vm1363, %v1360, -inf
      %1458 = vmax.xlane.f32.xlu0 %v1457
      %v1459 = vpop.xlane.xlu0 %1458
      %v1460 = vsub.f32 %v1237, %v1366
      %v1461 = vsub.f32 %v1240, %v1369
      %v1462 = vsub.f32 %v1245, %v1372
      %v1463 = vsub.f32 %v1248, %v1375
      %v1464 = vsub.f32 %v1253, %v1378
      %v1465 = vsub.f32 %v1256, %v1381
      %v1466 = vsub.f32 %v1261, %v1384
      %v1467 = vsub.f32 %v1264, %v1387
      %v1468 = vsub.f32 %v1269, %v1390
      %v1469 = vsub.f32 %v1272, %v1393
      %v1470 = vsub.f32 %v1277, %v1396
      %v1471 = vsub.f32 %v1280, %v1399
      %v1472 = vsub.f32 %v1285, %v1402
      %v1473 = vsub.f32 %v1288, %v1405
      %v1474 = vsub.f32 %v1293, %v1408
      %v1475 = vsub.f32 %v1296, %v1411
      %v1476 = vsub.f32 %v1301, %v1414
      %v1477 = vsub.f32 %v1304, %v1417
      %v1478 = vsub.f32 %v1309, %v1420
      %v1479 = vsub.f32 %v1312, %v1423
      %v1480 = vsub.f32 %v1317, %v1426
      %v1481 = vsub.f32 %v1320, %v1429
      %v1482 = vsub.f32 %v1325, %v1432
      %v1483 = vsub.f32 %v1328, %v1435
      %v1484 = vsub.f32 %v1333, %v1438
      %v1485 = vsub.f32 %v1336, %v1441
      %v1486 = vsub.f32 %v1341, %v1444
      %v1487 = vsub.f32 %v1344, %v1447
      %v1488 = vsub.f32 %v1349, %v1450
      %v1489 = vsub.f32 %v1352, %v1453
      %v1490 = vsub.f32 %v1357, %v1456
      %v1491 = vsub.f32 %v1360, %v1459
      %v1492 = vmul.f32 %v1460, 1.442695
      %v1493 = vpow.pop %v1492
      %v1494 = vmul.f32 %v1461, 1.442695
      %v1495 = vpow.pop %v1494
      %v1496 = vmul.f32 %v1462, 1.442695
      %v1497 = vpow.pop %v1496
      %v1498 = vmul.f32 %v1463, 1.442695
      %v1499 = vpow.pop %v1498
      %v1500 = vmul.f32 %v1464, 1.442695
      %v1501 = vpow.pop %v1500
      %v1502 = vmul.f32 %v1465, 1.442695
      %v1503 = vpow.pop %v1502
      %v1504 = vmul.f32 %v1466, 1.442695
      %v1505 = vpow.pop %v1504
      %v1506 = vmul.f32 %v1467, 1.442695
      %v1507 = vpow.pop %v1506
      %v1508 = vmul.f32 %v1468, 1.442695
      %v1509 = vpow.pop %v1508
      %v1510 = vmul.f32 %v1469, 1.442695
      %v1511 = vpow.pop %v1510
      %v1512 = vmul.f32 %v1470, 1.442695
      %v1513 = vpow.pop %v1512
      %v1514 = vmul.f32 %v1471, 1.442695
      %v1515 = vpow.pop %v1514
      %v1516 = vmul.f32 %v1472, 1.442695
      %v1517 = vpow.pop %v1516
      %v1518 = vmul.f32 %v1473, 1.442695
      %v1519 = vpow.pop %v1518
      %v1520 = vmul.f32 %v1474, 1.442695
      %v1521 = vpow.pop %v1520
      %v1522 = vmul.f32 %v1475, 1.442695
      %v1523 = vpow.pop %v1522
      %v1524 = vmul.f32 %v1476, 1.442695
      %v1525 = vpow.pop %v1524
      %v1526 = vmul.f32 %v1477, 1.442695
      %v1527 = vpow.pop %v1526
      %v1528 = vmul.f32 %v1478, 1.442695
      %v1529 = vpow.pop %v1528
      %v1530 = vmul.f32 %v1479, 1.442695
      %v1531 = vpow.pop %v1530
      %v1532 = vmul.f32 %v1480, 1.442695
      %v1533 = vpow.pop %v1532
      %v1534 = vmul.f32 %v1481, 1.442695
      %v1535 = vpow.pop %v1534
      %v1536 = vmul.f32 %v1482, 1.442695
      %v1537 = vpow.pop %v1536
      %v1538 = vmul.f32 %v1483, 1.442695
      %v1539 = vpow.pop %v1538
      %v1540 = vmul.f32 %v1484, 1.442695
      %v1541 = vpow.pop %v1540
      %v1542 = vmul.f32 %v1485, 1.442695
      %v1543 = vpow.pop %v1542
      %v1544 = vmul.f32 %v1486, 1.442695
      %v1545 = vpow.pop %v1544
      %v1546 = vmul.f32 %v1487, 1.442695
      %v1547 = vpow.pop %v1546
      %v1548 = vmul.f32 %v1488, 1.442695
      %v1549 = vpow.pop %v1548
      %v1550 = vmul.f32 %v1489, 1.442695
      %v1551 = vpow.pop %v1550
      %v1552 = vmul.f32 %v1490, 1.442695
      %v1553 = vpow.pop %v1552
      %v1554 = vmul.f32 %v1491, 1.442695
      %v1555 = vpow.pop %v1554
      %v1556 = vpack.c.bf16 %v1495, %v1493
      %v1557 = vpack.c.bf16 %v1499, %v1497
      %v1558 = vpack.c.bf16 %v1503, %v1501
      %v1559 = vpack.c.bf16 %v1507, %v1505
      %v1560 = vpack.c.bf16 %v1511, %v1509
      %v1561 = vpack.c.bf16 %v1515, %v1513
      %v1562 = vpack.c.bf16 %v1519, %v1517
      %v1563 = vpack.c.bf16 %v1523, %v1521
      %v1564 = vpack.c.bf16 %v1527, %v1525
      %v1565 = vpack.c.bf16 %v1531, %v1529
      %v1566 = vpack.c.bf16 %v1535, %v1533
      %v1567 = vpack.c.bf16 %v1539, %v1537
      %v1568 = vpack.c.bf16 %v1543, %v1541
      %v1569 = vpack.c.bf16 %v1547, %v1545
      %v1570 = vpack.c.bf16 %v1551, %v1549
      %v1571 = vpack.c.bf16 %v1555, %v1553
      %v1573 = vsel %vm1363, %v1556, 0
      %v1576 = vsel %vm1363, %v1557, 0
      %v1579 = vsel %vm1363, %v1558, 0
      %v1582 = vsel %vm1363, %v1559, 0
      %v1585 = vsel %vm1363, %v1560, 0
      %v1588 = vsel %vm1363, %v1561, 0
      %v1591 = vsel %vm1363, %v1562, 0
      %v1594 = vsel %vm1363, %v1563, 0
      %v1597 = vsel %vm1363, %v1564, 0
      %v1600 = vsel %vm1363, %v1565, 0
      %v1603 = vsel %vm1363, %v1566, 0
      %v1606 = vsel %vm1363, %v1567, 0
      %v1609 = vsel %vm1363, %v1568, 0
      %v1612 = vsel %vm1363, %v1569, 0
      %v1615 = vsel %vm1363, %v1570, 0
      %v1618 = vsel %vm1363, %v1571, 0
      %1620 = vmatprep.subr.bf16.mxu0 0
      %1621 = vmatpush1.bf16.msra.mxu0 %v1126
      %1622 = vmatprep.subr.bf16.mxu0 0
      %1623 = vmatpush1.bf16.msra.mxu0 %v1127
      %1624 = vmatprep.subr.bf16.mxu0 0
      %1625 = vmatpush1.bf16.msra.mxu0 %v1128
      %1626 = vmatprep.subr.bf16.mxu0 0
      %1627 = vmatpush1.bf16.msra.mxu0 0
      %1628 = vmatprep.subr.bf16.mxu0 0
      %1629 = vmatpush1.bf16.msra.mxu0 0
      %1630 = vmatprep.subr.bf16.mxu0 0
      %1631 = vmatpush1.bf16.msra.mxu0 0
      %1632 = vmatprep.subr.bf16.mxu0 0
      %1633 = vmatpush1.bf16.msra.mxu0 0
      %1634 = vmatprep.subr.bf16.mxu0 0
      %1635 = vmatpush1.bf16.msra.mxu0 0
      %1636 = vmatprep.subr.bf16.mxu0 0
      %1637 = vmatpush1.bf16.msra.mxu0 0
      %1638 = vmatprep.subr.bf16.mxu0 0
      %1639 = vmatpush1.bf16.msra.mxu0 0
      %1640 = vmatprep.subr.bf16.mxu0 0
      %1641 = vmatpush1.bf16.msra.mxu0 0
      %1642 = vmatprep.subr.bf16.mxu0 0
      %1643 = vmatpush1.bf16.msra.mxu0 0
      %1644 = vmatprep.subr.bf16.mxu0 0
      %1645 = vmatpush1.bf16.msra.mxu0 0
      %1646 = vmatprep.subr.bf16.mxu0 0
      %1647 = vmatpush1.bf16.msra.mxu0 0
      %1648 = vmatprep.subr.bf16.mxu0 0
      %1649 = vmatpush1.bf16.msra.mxu0 0
      %1650 = vmatprep.subr.bf16.mxu0 0
      %1651 = vmatpush1.bf16.msra.mxu0 0
      %1652 = vmatprep.mubr.bf16.mxu0 0
      %1653 = vmatmul.mubr.bf16.gmra.mrb[0].mxu0 %v1573
      %v1654 = vpop.f32.mrb[0].mxu0
      %v1655 = vadd.f32 0.0, %v1654
      %v1656 = vpop.f32.mrb[0].mxu0
      %v1657 = vpop.f32.mrb[0].mxu0
      %v1658 = vadd.f32 0.0, %v1657
      %v1659 = vpop.f32.mrb[0].mxu0
      %1660 = vmatprep.mubr.bf16.mxu0 0
      %1661 = vmatmul.mubr.bf16.gmra.mrb[0].mxu0 %v1576
      %v1662 = vpop.f32.mrb[0].mxu0
      %v1663 = vadd.f32 0.0, %v1662
      %v1664 = vpop.f32.mrb[0].mxu0
      %v1665 = vpop.f32.mrb[0].mxu0
      %v1666 = vadd.f32 0.0, %v1665
      %v1667 = vpop.f32.mrb[0].mxu0
      %1668 = vmatprep.mubr.bf16.mxu0 0
      %1669 = vmatmul.mubr.bf16.gmra.mrb[0].mxu0 %v1579
      %v1670 = vpop.f32.mrb[0].mxu0
      %v1671 = vadd.f32 0.0, %v1670
      %v1672 = vpop.f32.mrb[0].mxu0
      %v1673 = vpop.f32.mrb[0].mxu0
      %v1674 = vadd.f32 0.0, %v1673
      %v1675 = vpop.f32.mrb[0].mxu0
      %1676 = vmatprep.mubr.bf16.mxu0 0
      %1677 = vmatmul.mubr.bf16.gmra.mrb[0].mxu0 %v1582
      %v1678 = vpop.f32.mrb[0].mxu0
      %v1679 = vadd.f32 0.0, %v1678
      %v1680 = vpop.f32.mrb[0].mxu0
      %v1681 = vpop.f32.mrb[0].mxu0
      %v1682 = vadd.f32 0.0, %v1681
      %v1683 = vpop.f32.mrb[0].mxu0
      %1684 = vmatprep.mubr.bf16.mxu0 0
      %1685 = vmatmul.mubr.bf16.gmra.mrb[0].mxu0 %v1585
      %v1686 = vpop.f32.mrb[0].mxu0
      %v1687 = vadd.f32 0.0, %v1686
      %v1688 = vpop.f32.mrb[0].mxu0
      %v1689 = vpop.f32.mrb[0].mxu0
      %v1690 = vadd.f32 0.0, %v1689
      %v1691 = vpop.f32.mrb[0].mxu0
      %1692 = vmatprep.mubr.bf16.mxu0 0
      %1693 = vmatmul.mubr.bf16.gmra.mrb[0].mxu0 %v1588
      %v1694 = vpop.f32.mrb[0].mxu0
      %v1695 = vadd.f32 0.0, %v1694
      %v1696 = vpop.f32.mrb[0].mxu0
      %v1697 = vpop.f32.mrb[0].mxu0
      %v1698 = vadd.f32 0.0, %v1697
      %v1699 = vpop.f32.mrb[0].mxu0
      %1700 = vmatprep.mubr.bf16.mxu0 0
      %1701 = vmatmul.mubr.bf16.gmra.mrb[0].mxu0 %v1591
      %v1702 = vpop.f32.mrb[0].mxu0
      %v1703 = vadd.f32 0.0, %v1702
      %v1704 = vpop.f32.mrb[0].mxu0
      %v1705 = vpop.f32.mrb[0].mxu0
      %v1706 = vadd.f32 0.0, %v1705
      %v1707 = vpop.f32.mrb[0].mxu0
      %1708 = vmatprep.mubr.bf16.mxu0 0
      %1709 = vmatmul.mubr.bf16.gmra.mrb[0].mxu0 %v1594
      %v1710 = vpop.f32.mrb[0].mxu0
      %v1711 = vadd.f32 0.0, %v1710
      %v1712 = vpop.f32.mrb[0].mxu0
      %v1713 = vpop.f32.mrb[0].mxu0
      %v1714 = vadd.f32 0.0, %v1713
      %v1715 = vpop.f32.mrb[0].mxu0
      %1716 = vmatprep.mubr.bf16.mxu0 0
      %1717 = vmatmul.mubr.bf16.gmra.mrb[0].mxu0 %v1597
      %v1718 = vpop.f32.mrb[0].mxu0
      %v1719 = vadd.f32 0.0, %v1718
      %v1720 = vpop.f32.mrb[0].mxu0
      %v1721 = vpop.f32.mrb[0].mxu0
      %v1722 = vadd.f32 0.0, %v1721
      %v1723 = vpop.f32.mrb[0].mxu0
      %1724 = vmatprep.mubr.bf16.mxu0 0
      %1725 = vmatmul.mubr.bf16.gmra.mrb[0].mxu0 %v1600
      %v1726 = vpop.f32.mrb[0].mxu0
      %v1727 = vadd.f32 0.0, %v1726
      %v1728 = vpop.f32.mrb[0].mxu0
      %v1729 = vpop.f32.mrb[0].mxu0
      %v1730 = vadd.f32 0.0, %v1729
      %v1731 = vpop.f32.mrb[0].mxu0
      %1732 = vmatprep.mubr.bf16.mxu0 0
      %1733 = vmatmul.mubr.bf16.gmra.mrb[0].mxu0 %v1603
      %v1734 = vpop.f32.mrb[0].mxu0
      %v1735 = vadd.f32 0.0, %v1734
      %v1736 = vpop.f32.mrb[0].mxu0
      %v1737 = vpop.f32.mrb[0].mxu0
      %v1738 = vadd.f32 0.0, %v1737
      %v1739 = vpop.f32.mrb[0].mxu0
      %1740 = vmatprep.mubr.bf16.mxu0 0
      %1741 = vmatmul.mubr.bf16.gmra.mrb[0].mxu0 %v1606
      %v1742 = vpop.f32.mrb[0].mxu0
      %v1743 = vadd.f32 0.0, %v1742
      %v1744 = vpop.f32.mrb[0].mxu0
      %v1745 = vpop.f32.mrb[0].mxu0
      %v1746 = vadd.f32 0.0, %v1745
      %v1747 = vpop.f32.mrb[0].mxu0
      %1748 = vmatprep.mubr.bf16.mxu0 0
      %1749 = vmatmul.mubr.bf16.gmra.mrb[0].mxu0 %v1609
      %v1750 = vpop.f32.mrb[0].mxu0
      %v1751 = vadd.f32 0.0, %v1750
      %v1752 = vpop.f32.mrb[0].mxu0
      %v1753 = vpop.f32.mrb[0].mxu0
      %v1754 = vadd.f32 0.0, %v1753
      %v1755 = vpop.f32.mrb[0].mxu0
      %1756 = vmatprep.mubr.bf16.mxu0 0
      %1757 = vmatmul.mubr.bf16.gmra.mrb[0].mxu0 %v1612
      %v1758 = vpop.f32.mrb[0].mxu0
      %v1759 = vadd.f32 0.0, %v1758
      %v1760 = vpop.f32.mrb[0].mxu0
      %v1761 = vpop.f32.mrb[0].mxu0
      %v1762 = vadd.f32 0.0, %v1761
      %v1763 = vpop.f32.mrb[0].mxu0
      %1764 = vmatprep.mubr.bf16.mxu0 0
      %1765 = vmatmul.mubr.bf16.gmra.mrb[0].mxu0 %v1615
      %v1766 = vpop.f32.mrb[0].mxu0
      %v1767 = vadd.f32 0.0, %v1766
      %v1768 = vpop.f32.mrb[0].mxu0
      %v1769 = vpop.f32.mrb[0].mxu0
      %v1770 = vadd.f32 0.0, %v1769
      %v1771 = vpop.f32.mrb[0].mxu0
      %1772 = vmatprep.mubr.bf16.mxu0 0
      %1773 = vmatmul.mubr.bf16.gmra.mrb[0].mxu0 %v1618
      %v1774 = vpop.f32.mrb[0].mxu0
      %v1775 = vadd.f32 0.0, %v1774
      %v1776 = vpop.f32.mrb[0].mxu0
      %v1777 = vpop.f32.mrb[0].mxu0
      %v1778 = vadd.f32 0.0, %v1777
      %v1779 = vpop.f32.mrb[0].mxu0
      %1780 = vdwg.mxu0
      %v1781 = vld [vmem:[%s8] sm:$0xf]
      %v1782 = vld [vmem:[%s8 + $0x4] sm:$0xf]
      %v1783 = vld [vmem:[%s8 + $0x8] sm:$0xf]
      %v1784 = vld [vmem:[%s8 + $0xc] sm:$0xf]
      %v1785 = vld [vmem:[%s8 + $0x10] sm:$0xf]
      %v1786 = vld [vmem:[%s8 + $0x14] sm:$0xf]
      %v1793 = vunpack.c.l.b16 %v1781
      %v1794 = vunpack.c.l.b16 %v1782
      %v1795 = vunpack.c.l.b16 %v1783
      %v1796 = vunpack.c.l.b16 %v1784
      %v1797 = vunpack.c.l.b16 %v1785
      %v1798 = vunpack.c.l.b16 %v1786
      %v1799 = vpack.c.b16 %v1794, %v1793
      %v1800 = vpack.c.b16 %v1796, %v1795
      %v1801 = vpack.c.b16 %v1798, %v1797
      %1805 = vmatprep.subr.bf16.mxu0 0
      %1806 = vmatpush1.bf16.msra.mxu0 %v1799
      %1807 = vmatprep.subr.bf16.mxu0 0
      %1808 = vmatpush1.bf16.msra.mxu0 %v1800
      %1809 = vmatprep.subr.bf16.mxu0 0
      %1810 = vmatpush1.bf16.msra.mxu0 %v1801
      %1811 = vmatprep.subr.bf16.mxu0 0
      %1812 = vmatpush1.bf16.msra.mxu0 0
      %1813 = vmatprep.subr.bf16.mxu0 0
      %1814 = vmatpush1.bf16.msra.mxu0 0
      %1815 = vmatprep.subr.bf16.mxu0 0
      %1816 = vmatpush1.bf16.msra.mxu0 0
      %1817 = vmatprep.subr.bf16.mxu0 0
      %1818 = vmatpush1.bf16.msra.mxu0 0
      %1819 = vmatprep.subr.bf16.mxu0 0
      %1820 = vmatpush1.bf16.msra.mxu0 0
      %1821 = vmatprep.subr.bf16.mxu0 0
      %1822 = vmatpush1.bf16.msra.mxu0 0
      %1823 = vmatprep.subr.bf16.mxu0 0
      %1824 = vmatpush1.bf16.msra.mxu0 0
      %1825 = vmatprep.subr.bf16.mxu0 0
      %1826 = vmatpush1.bf16.msra.mxu0 0
      %1827 = vmatprep.subr.bf16.mxu0 0
      %1828 = vmatpush1.bf16.msra.mxu0 0
      %1829 = vmatprep.subr.bf16.mxu0 0
      %1830 = vmatpush1.bf16.msra.mxu0 0
      %1831 = vmatprep.subr.bf16.mxu0 0
      %1832 = vmatpush1.bf16.msra.mxu0 0
      %1833 = vmatprep.subr.bf16.mxu0 0
      %1834 = vmatpush1.bf16.msra.mxu0 0
      %1835 = vmatprep.subr.bf16.mxu0 0
      %1836 = vmatpush1.bf16.msra.mxu0 0
      %1837 = vmatprep.mubr.bf16.mxu0 0
      %1838 = vmatmul.mubr.bf16.gmra.mrb[0].mxu0 %v1573
      %v1839 = vpop.f32.mrb[0].mxu0
      %v1840 = vadd.f32 0.0, %v1839
      %v1841 = vpop.f32.mrb[0].mxu0
      %v1842 = vpop.f32.mrb[0].mxu0
      %v1843 = vadd.f32 0.0, %v1842
      %v1844 = vpop.f32.mrb[0].mxu0
      %1845 = vmatprep.mubr.bf16.mxu0 0
      %1846 = vmatmul.mubr.bf16.gmra.mrb[0].mxu0 %v1576
      %v1847 = vpop.f32.mrb[0].mxu0
      %v1848 = vadd.f32 0.0, %v1847
      %v1849 = vpop.f32.mrb[0].mxu0
      %v1850 = vpop.f32.mrb[0].mxu0
      %v1851 = vadd.f32 0.0, %v1850
      %v1852 = vpop.f32.mrb[0].mxu0
      %1853 = vmatprep.mubr.bf16.mxu0 0
      %1854 = vmatmul.mubr.bf16.gmra.mrb[0].mxu0 %v1579
      %v1855 = vpop.f32.mrb[0].mxu0
      %v1856 = vadd.f32 0.0, %v1855
      %v1857 = vpop.f32.mrb[0].mxu0
      %v1858 = vpop.f32.mrb[0].mxu0
      %v1859 = vadd.f32 0.0, %v1858
      %v1860 = vpop.f32.mrb[0].mxu0
      %1861 = vmatprep.mubr.bf16.mxu0 0
      %1862 = vmatmul.mubr.bf16.gmra.mrb[0].mxu0 %v1582
      %v1863 = vpop.f32.mrb[0].mxu0
      %v1864 = vadd.f32 0.0, %v1863
      %v1865 = vpop.f32.mrb[0].mxu0
      %v1866 = vpop.f32.mrb[0].mxu0
      %v1867 = vadd.f32 0.0, %v1866
      %v1868 = vpop.f32.mrb[0].mxu0
      %1869 = vmatprep.mubr.bf16.mxu0 0
      %1870 = vmatmul.mubr.bf16.gmra.mrb[0].mxu0 %v1585
      %v1871 = vpop.f32.mrb[0].mxu0
      %v1872 = vadd.f32 0.0, %v1871
      %v1873 = vpop.f32.mrb[0].mxu0
      %v1874 = vpop.f32.mrb[0].mxu0
      %v1875 = vadd.f32 0.0, %v1874
      %v1876 = vpop.f32.mrb[0].mxu0
      %1877 = vmatprep.mubr.bf16.mxu0 0
      %1878 = vmatmul.mubr.bf16.gmra.mrb[0].mxu0 %v1588
      %v1879 = vpop.f32.mrb[0].mxu0
      %v1880 = vadd.f32 0.0, %v1879
      %v1881 = vpop.f32.mrb[0].mxu0
      %v1882 = vpop.f32.mrb[0].mxu0
      %v1883 = vadd.f32 0.0, %v1882
      %v1884 = vpop.f32.mrb[0].mxu0
      %1885 = vmatprep.mubr.bf16.mxu0 0
      %1886 = vmatmul.mubr.bf16.gmra.mrb[0].mxu0 %v1591
      %v1887 = vpop.f32.mrb[0].mxu0
      %v1888 = vadd.f32 0.0, %v1887
      %v1889 = vpop.f32.mrb[0].mxu0
      %v1890 = vpop.f32.mrb[0].mxu0
      %v1891 = vadd.f32 0.0, %v1890
      %v1892 = vpop.f32.mrb[0].mxu0
      %1893 = vmatprep.mubr.bf16.mxu0 0
      %1894 = vmatmul.mubr.bf16.gmra.mrb[0].mxu0 %v1594
      %v1895 = vpop.f32.mrb[0].mxu0
      %v1896 = vadd.f32 0.0, %v1895
      %v1897 = vpop.f32.mrb[0].mxu0
      %v1898 = vpop.f32.mrb[0].mxu0
      %v1899 = vadd.f32 0.0, %v1898
      %v1900 = vpop.f32.mrb[0].mxu0
      %1901 = vmatprep.mubr.bf16.mxu0 0
      %1902 = vmatmul.mubr.bf16.gmra.mrb[0].mxu0 %v1597
      %v1903 = vpop.f32.mrb[0].mxu0
      %v1904 = vadd.f32 0.0, %v1903
      %v1905 = vpop.f32.mrb[0].mxu0
      %v1906 = vpop.f32.mrb[0].mxu0
      %v1907 = vadd.f32 0.0, %v1906
      %v1908 = vpop.f32.mrb[0].mxu0
      %1909 = vmatprep.mubr.bf16.mxu0 0
      %1910 = vmatmul.mubr.bf16.gmra.mrb[0].mxu0 %v1600
      %v1911 = vpop.f32.mrb[0].mxu0
      %v1912 = vadd.f32 0.0, %v1911
      %v1913 = vpop.f32.mrb[0].mxu0
      %v1914 = vpop.f32.mrb[0].mxu0
      %v1915 = vadd.f32 0.0, %v1914
      %v1916 = vpop.f32.mrb[0].mxu0
      %1917 = vmatprep.mubr.bf16.mxu0 0
      %1918 = vmatmul.mubr.bf16.gmra.mrb[0].mxu0 %v1603
      %v1919 = vpop.f32.mrb[0].mxu0
      %v1920 = vadd.f32 0.0, %v1919
      %v1921 = vpop.f32.mrb[0].mxu0
      %v1922 = vpop.f32.mrb[0].mxu0
      %v1923 = vadd.f32 0.0, %v1922
      %v1924 = vpop.f32.mrb[0].mxu0
      %1925 = vmatprep.mubr.bf16.mxu0 0
      %1926 = vmatmul.mubr.bf16.gmra.mrb[0].mxu0 %v1606
      %v1927 = vpop.f32.mrb[0].mxu0
      %v1928 = vadd.f32 0.0, %v1927
      %v1929 = vpop.f32.mrb[0].mxu0
      %v1930 = vpop.f32.mrb[0].mxu0
      %v1931 = vadd.f32 0.0, %v1930
      %v1932 = vpop.f32.mrb[0].mxu0
      %1933 = vmatprep.mubr.bf16.mxu0 0
      %1934 = vmatmul.mubr.bf16.gmra.mrb[0].mxu0 %v1609
      %v1935 = vpop.f32.mrb[0].mxu0
      %v1936 = vadd.f32 0.0, %v1935
      %v1937 = vpop.f32.mrb[0].mxu0
      %v1938 = vpop.f32.mrb[0].mxu0
      %v1939 = vadd.f32 0.0, %v1938
      %v1940 = vpop.f32.mrb[0].mxu0
      %1941 = vmatprep.mubr.bf16.mxu0 0
      %1942 = vmatmul.mubr.bf16.gmra.mrb[0].mxu0 %v1612
      %v1943 = vpop.f32.mrb[0].mxu0
      %v1944 = vadd.f32 0.0, %v1943
      %v1945 = vpop.f32.mrb[0].mxu0
      %v1946 = vpop.f32.mrb[0].mxu0
      %v1947 = vadd.f32 0.0, %v1946
      %v1948 = vpop.f32.mrb[0].mxu0
      %1949 = vmatprep.mubr.bf16.mxu0 0
      %1950 = vmatmul.mubr.bf16.gmra.mrb[0].mxu0 %v1615
      %v1951 = vpop.f32.mrb[0].mxu0
      %v1952 = vadd.f32 0.0, %v1951
      %v1953 = vpop.f32.mrb[0].mxu0
      %v1954 = vpop.f32.mrb[0].mxu0
      %v1955 = vadd.f32 0.0, %v1954
      %v1956 = vpop.f32.mrb[0].mxu0
      %1957 = vmatprep.mubr.bf16.mxu0 0
      %1958 = vmatmul.mubr.bf16.gmra.mrb[0].mxu0 %v1618
      %v1959 = vpop.f32.mrb[0].mxu0
      %v1960 = vadd.f32 0.0, %v1959
      %v1961 = vpop.f32.mrb[0].mxu0
      %v1962 = vpop.f32.mrb[0].mxu0
      %v1963 = vadd.f32 0.0, %v1962
      %v1964 = vpop.f32.mrb[0].mxu0
      %1965 = vdwg.mxu0
      %v1966 = vrcp.pop %v1840
      %v1967 = vrcp.pop %v1843
      %v1968 = vrcp.pop %v1848
      %v1969 = vrcp.pop %v1851
      %v1970 = vrcp.pop %v1856
      %v1971 = vrcp.pop %v1859
      %v1972 = vrcp.pop %v1864
      %v1973 = vrcp.pop %v1867
      %v1974 = vrcp.pop %v1872
      %v1975 = vrcp.pop %v1875
      %v1976 = vrcp.pop %v1880
      %v1977 = vrcp.pop %v1883
      %v1978 = vrcp.pop %v1888
      %v1979 = vrcp.pop %v1891
      %v1980 = vrcp.pop %v1896
      %v1981 = vrcp.pop %v1899
      %v1982 = vrcp.pop %v1904
      %v1983 = vrcp.pop %v1907
      %v1984 = vrcp.pop %v1912
      %v1985 = vrcp.pop %v1915
      %v1986 = vrcp.pop %v1920
      %v1987 = vrcp.pop %v1923
      %v1988 = vrcp.pop %v1928
      %v1989 = vrcp.pop %v1931
      %v1990 = vrcp.pop %v1936
      %v1991 = vrcp.pop %v1939
      %v1992 = vrcp.pop %v1944
      %v1993 = vrcp.pop %v1947
      %v1994 = vrcp.pop %v1952
      %v1995 = vrcp.pop %v1955
      %v1996 = vrcp.pop %v1960
      %v1997 = vrcp.pop %v1963
      %v1998 = vmul.f32 %v1655, %v1966
      %v1999 = vmul.f32 %v1658, %v1967
      %v2000 = vmul.f32 %v1663, %v1968
      %v2001 = vmul.f32 %v1666, %v1969
      %v2002 = vmul.f32 %v1671, %v1970
      %v2003 = vmul.f32 %v1674, %v1971
      %v2004 = vmul.f32 %v1679, %v1972
      %v2005 = vmul.f32 %v1682, %v1973
      %v2006 = vmul.f32 %v1687, %v1974
      %v2007 = vmul.f32 %v1690, %v1975
      %v2008 = vmul.f32 %v1695, %v1976
      %v2009 = vmul.f32 %v1698, %v1977
      %v2010 = vmul.f32 %v1703, %v1978
      %v2011 = vmul.f32 %v1706, %v1979
      %v2012 = vmul.f32 %v1711, %v1980
      %v2013 = vmul.f32 %v1714, %v1981
      %v2014 = vmul.f32 %v1719, %v1982
      %v2015 = vmul.f32 %v1722, %v1983
      %v2016 = vmul.f32 %v1727, %v1984
      %v2017 = vmul.f32 %v1730, %v1985
      %v2018 = vmul.f32 %v1735, %v1986
      %v2019 = vmul.f32 %v1738, %v1987
      %v2020 = vmul.f32 %v1743, %v1988
      %v2021 = vmul.f32 %v1746, %v1989
      %v2022 = vmul.f32 %v1751, %v1990
      %v2023 = vmul.f32 %v1754, %v1991
      %v2024 = vmul.f32 %v1759, %v1992
      %v2025 = vmul.f32 %v1762, %v1993
      %v2026 = vmul.f32 %v1767, %v1994
      %v2027 = vmul.f32 %v1770, %v1995
      %v2028 = vmul.f32 %v1775, %v1996
      %v2029 = vmul.f32 %v1778, %v1997
      %v2030 = vpack.c.bf16 %v1999, %v1998
      %v2031 = vpack.c.bf16 %v2001, %v2000
      %v2032 = vpack.c.bf16 %v2003, %v2002
      %v2033 = vpack.c.bf16 %v2005, %v2004
      %v2034 = vpack.c.bf16 %v2007, %v2006
      %v2035 = vpack.c.bf16 %v2009, %v2008
      %v2036 = vpack.c.bf16 %v2011, %v2010
      %v2037 = vpack.c.bf16 %v2013, %v2012
      %v2038 = vpack.c.bf16 %v2015, %v2014
      %v2039 = vpack.c.bf16 %v2017, %v2016
      %v2040 = vpack.c.bf16 %v2019, %v2018
      %v2041 = vpack.c.bf16 %v2021, %v2020
      %v2042 = vpack.c.bf16 %v2023, %v2022
      %v2043 = vpack.c.bf16 %v2025, %v2024
      %v2044 = vpack.c.bf16 %v2027, %v2026
      %v2045 = vpack.c.bf16 %v2029, %v2028
      %v2046 = vld [vmem:[%s7] sm:$0xf]
      %v2047 = vld [vmem:[%s7 + $0x4] sm:$0xf]
      %v2048 = vld [vmem:[%s7 + $0x8] sm:$0xf]
      %v2049 = vld [vmem:[%s7 + $0xc] sm:$0xf]
      %v2054 = vunpack.c.l.b16 %v2046
      %v2055 = vunpack.c.l.b16 %v2047
      %v2056 = vunpack.c.l.b16 %v2048
      %v2057 = vunpack.c.l.b16 %v2049
      %v2058 = vpack.c.b16 %v2055, %v2054
      %v2059 = vpack.c.b16 %v2057, %v2056
      %v2063 = vsel %vm912, %v2030, 0
      %v2066 = vsel %vm912, %v2031, 0
      %v2069 = vsel %vm912, %v2032, 0
      %v2072 = vsel %vm912, %v2033, 0
      %v2075 = vsel %vm912, %v2034, 0
      %v2078 = vsel %vm912, %v2035, 0
      %v2081 = vsel %vm912, %v2036, 0
      %v2084 = vsel %vm912, %v2037, 0
      %v2087 = vsel %vm912, %v2038, 0
      %v2090 = vsel %vm912, %v2039, 0
      %v2093 = vsel %vm912, %v2040, 0
      %v2096 = vsel %vm912, %v2041, 0
      %v2099 = vsel %vm912, %v2042, 0
      %v2102 = vsel %vm912, %v2043, 0
      %v2105 = vsel %vm912, %v2044, 0
      %v2108 = vsel %vm912, %v2045, 0
      %2110 = vmatprep.subr.bf16.mxu0 0
      %2111 = vmatpush1.bf16.msra.mxu0 %v2058
      %2112 = vmatprep.subr.bf16.mxu0 0
      %2113 = vmatpush1.bf16.msra.mxu0 %v2059
      %2114 = vmatprep.subr.bf16.mxu0 0
      %2115 = vmatpush1.bf16.msra.mxu0 0
      %2116 = vmatprep.subr.bf16.mxu0 0
      %2117 = vmatpush1.bf16.msra.mxu0 0
      %2118 = vmatprep.subr.bf16.mxu0 0
      %2119 = vmatpush1.bf16.msra.mxu0 0
      %2120 = vmatprep.subr.bf16.mxu0 0
      %2121 = vmatpush1.bf16.msra.mxu0 0
      %2122 = vmatprep.subr.bf16.mxu0 0
      %2123 = vmatpush1.bf16.msra.mxu0 0
      %2124 = vmatprep.subr.bf16.mxu0 0
      %2125 = vmatpush1.bf16.msra.mxu0 0
      %2126 = vmatprep.subr.bf16.mxu0 0
      %2127 = vmatpush1.bf16.msra.mxu0 0
      %2128 = vmatprep.subr.bf16.mxu0 0
      %2129 = vmatpush1.bf16.msra.mxu0 0
      %2130 = vmatprep.subr.bf16.mxu0 0
      %2131 = vmatpush1.bf16.msra.mxu0 0
      %2132 = vmatprep.subr.bf16.mxu0 0
      %2133 = vmatpush1.bf16.msra.mxu0 0
      %2134 = vmatprep.subr.bf16.mxu0 0
      %2135 = vmatpush1.bf16.msra.mxu0 0
      %2136 = vmatprep.subr.bf16.mxu0 0
      %2137 = vmatpush1.bf16.msra.mxu0 0
      %2138 = vmatprep.subr.bf16.mxu0 0
      %2139 = vmatpush1.bf16.msra.mxu0 0
      %2140 = vmatprep.subr.bf16.mxu0 0
      %2141 = vmatpush1.bf16.msra.mxu0 0
      %2142 = vmatprep.mubr.bf16.mxu0 0
      %2143 = vmatmul.mubr.bf16.gmra.mrb[0].mxu0 %v2063
      %v2144 = vpop.f32.mrb[0].mxu0
      %v2145 = vadd.f32 0.0, %v2144
      %v2146 = vpop.f32.mrb[0].mxu0
      %v2147 = vpop.f32.mrb[0].mxu0
      %v2148 = vadd.f32 0.0, %v2147
      %v2149 = vpop.f32.mrb[0].mxu0
      %2150 = vmatprep.mubr.bf16.mxu0 0
      %2151 = vmatmul.mubr.bf16.gmra.mrb[0].mxu0 %v2066
      %v2152 = vpop.f32.mrb[0].mxu0
      %v2153 = vadd.f32 0.0, %v2152
      %v2154 = vpop.f32.mrb[0].mxu0
      %v2155 = vpop.f32.mrb[0].mxu0
      %v2156 = vadd.f32 0.0, %v2155
      %v2157 = vpop.f32.mrb[0].mxu0
      %2158 = vmatprep.mubr.bf16.mxu0 0
      %2159 = vmatmul.mubr.bf16.gmra.mrb[0].mxu0 %v2069
      %v2160 = vpop.f32.mrb[0].mxu0
      %v2161 = vadd.f32 0.0, %v2160
      %v2162 = vpop.f32.mrb[0].mxu0
      %v2163 = vpop.f32.mrb[0].mxu0
      %v2164 = vadd.f32 0.0, %v2163
      %v2165 = vpop.f32.mrb[0].mxu0
      %2166 = vmatprep.mubr.bf16.mxu0 0
      %2167 = vmatmul.mubr.bf16.gmra.mrb[0].mxu0 %v2072
      %v2168 = vpop.f32.mrb[0].mxu0
      %v2169 = vadd.f32 0.0, %v2168
      %v2170 = vpop.f32.mrb[0].mxu0
      %v2171 = vpop.f32.mrb[0].mxu0
      %v2172 = vadd.f32 0.0, %v2171
      %v2173 = vpop.f32.mrb[0].mxu0
      %2174 = vmatprep.mubr.bf16.mxu0 0
      %2175 = vmatmul.mubr.bf16.gmra.mrb[0].mxu0 %v2075
      %v2176 = vpop.f32.mrb[0].mxu0
      %v2177 = vadd.f32 0.0, %v2176
      %v2178 = vpop.f32.mrb[0].mxu0
      %v2179 = vpop.f32.mrb[0].mxu0
      %v2180 = vadd.f32 0.0, %v2179
      %v2181 = vpop.f32.mrb[0].mxu0
      %2182 = vmatprep.mubr.bf16.mxu0 0
      %2183 = vmatmul.mubr.bf16.gmra.mrb[0].mxu0 %v2078
      %v2184 = vpop.f32.mrb[0].mxu0
      %v2185 = vadd.f32 0.0, %v2184
      %v2186 = vpop.f32.mrb[0].mxu0
      %v2187 = vpop.f32.mrb[0].mxu0
      %v2188 = vadd.f32 0.0, %v2187
      %v2189 = vpop.f32.mrb[0].mxu0
      %2190 = vmatprep.mubr.bf16.mxu0 0
      %2191 = vmatmul.mubr.bf16.gmra.mrb[0].mxu0 %v2081
      %v2192 = vpop.f32.mrb[0].mxu0
      %v2193 = vadd.f32 0.0, %v2192
      %v2194 = vpop.f32.mrb[0].mxu0
      %v2195 = vpop.f32.mrb[0].mxu0
      %v2196 = vadd.f32 0.0, %v2195
      %v2197 = vpop.f32.mrb[0].mxu0
      %2198 = vmatprep.mubr.bf16.mxu0 0
      %2199 = vmatmul.mubr.bf16.gmra.mrb[0].mxu0 %v2084
      %v2200 = vpop.f32.mrb[0].mxu0
      %v2201 = vadd.f32 0.0, %v2200
      %v2202 = vpop.f32.mrb[0].mxu0
      %v2203 = vpop.f32.mrb[0].mxu0
      %v2204 = vadd.f32 0.0, %v2203
      %v2205 = vpop.f32.mrb[0].mxu0
      %2206 = vmatprep.mubr.bf16.mxu0 0
      %2207 = vmatmul.mubr.bf16.gmra.mrb[0].mxu0 %v2087
      %v2208 = vpop.f32.mrb[0].mxu0
      %v2209 = vadd.f32 0.0, %v2208
      %v2210 = vpop.f32.mrb[0].mxu0
      %v2211 = vpop.f32.mrb[0].mxu0
      %v2212 = vadd.f32 0.0, %v2211
      %v2213 = vpop.f32.mrb[0].mxu0
      %2214 = vmatprep.mubr.bf16.mxu0 0
      %2215 = vmatmul.mubr.bf16.gmra.mrb[0].mxu0 %v2090
      %v2216 = vpop.f32.mrb[0].mxu0
      %v2217 = vadd.f32 0.0, %v2216
      %v2218 = vpop.f32.mrb[0].mxu0
      %v2219 = vpop.f32.mrb[0].mxu0
      %v2220 = vadd.f32 0.0, %v2219
      %v2221 = vpop.f32.mrb[0].mxu0
      %2222 = vmatprep.mubr.bf16.mxu0 0
      %2223 = vmatmul.mubr.bf16.gmra.mrb[0].mxu0 %v2093
      %v2224 = vpop.f32.mrb[0].mxu0
      %v2225 = vadd.f32 0.0, %v2224
      %v2226 = vpop.f32.mrb[0].mxu0
      %v2227 = vpop.f32.mrb[0].mxu0
      %v2228 = vadd.f32 0.0, %v2227
      %v2229 = vpop.f32.mrb[0].mxu0
      %2230 = vmatprep.mubr.bf16.mxu0 0
      %2231 = vmatmul.mubr.bf16.gmra.mrb[0].mxu0 %v2096
      %v2232 = vpop.f32.mrb[0].mxu0
      %v2233 = vadd.f32 0.0, %v2232
      %v2234 = vpop.f32.mrb[0].mxu0
      %v2235 = vpop.f32.mrb[0].mxu0
      %v2236 = vadd.f32 0.0, %v2235
      %v2237 = vpop.f32.mrb[0].mxu0
      %2238 = vmatprep.mubr.bf16.mxu0 0
      %2239 = vmatmul.mubr.bf16.gmra.mrb[0].mxu0 %v2099
      %v2240 = vpop.f32.mrb[0].mxu0
      %v2241 = vadd.f32 0.0, %v2240
      %v2242 = vpop.f32.mrb[0].mxu0
      %v2243 = vpop.f32.mrb[0].mxu0
      %v2244 = vadd.f32 0.0, %v2243
      %v2245 = vpop.f32.mrb[0].mxu0
      %2246 = vmatprep.mubr.bf16.mxu0 0
      %2247 = vmatmul.mubr.bf16.gmra.mrb[0].mxu0 %v2102
      %v2248 = vpop.f32.mrb[0].mxu0
      %v2249 = vadd.f32 0.0, %v2248
      %v2250 = vpop.f32.mrb[0].mxu0
      %v2251 = vpop.f32.mrb[0].mxu0
      %v2252 = vadd.f32 0.0, %v2251
      %v2253 = vpop.f32.mrb[0].mxu0
      %2254 = vmatprep.mubr.bf16.mxu0 0
      %2255 = vmatmul.mubr.bf16.gmra.mrb[0].mxu0 %v2105
      %v2256 = vpop.f32.mrb[0].mxu0
      %v2257 = vadd.f32 0.0, %v2256
      %v2258 = vpop.f32.mrb[0].mxu0
      %v2259 = vpop.f32.mrb[0].mxu0
      %v2260 = vadd.f32 0.0, %v2259
      %v2261 = vpop.f32.mrb[0].mxu0
      %2262 = vmatprep.mubr.bf16.mxu0 0
      %2263 = vmatmul.mubr.bf16.gmra.mrb[0].mxu0 %v2108
      %v2264 = vpop.f32.mrb[0].mxu0
      %v2265 = vadd.f32 0.0, %v2264
      %v2266 = vpop.f32.mrb[0].mxu0
      %v2267 = vpop.f32.mrb[0].mxu0
      %v2268 = vadd.f32 0.0, %v2267
      %v2269 = vpop.f32.mrb[0].mxu0
      %2270 = vdwg.mxu0
      %2271 = vst.msk [vmem:[%s417] sm:$0xff] %vm912, %v2145
      %2272 = vst.msk [vmem:[%s417 + $0x8] sm:$0xff] %vm912, %v2148
      %2273 = vst.msk [vmem:[%s417 + $0x10] sm:$0xff] %vm912, %v2153
      %2274 = vst.msk [vmem:[%s417 + $0x18] sm:$0xff] %vm912, %v2156
      %2275 = vst.msk [vmem:[%s417 + $0x20] sm:$0xff] %vm912, %v2161
      %2276 = vst.msk [vmem:[%s417 + $0x28] sm:$0xff] %vm912, %v2164
      %2277 = vst.msk [vmem:[%s417 + $0x30] sm:$0xff] %vm912, %v2169
      %2278 = vst.msk [vmem:[%s417 + $0x38] sm:$0xff] %vm912, %v2172
      %2279 = vst.msk [vmem:[%s417 + $0x40] sm:$0xff] %vm912, %v2177
      %2280 = vst.msk [vmem:[%s417 + $0x48] sm:$0xff] %vm912, %v2180
      %2281 = vst.msk [vmem:[%s417 + $0x50] sm:$0xff] %vm912, %v2185
      %2282 = vst.msk [vmem:[%s417 + $0x58] sm:$0xff] %vm912, %v2188
      %2283 = vst.msk [vmem:[%s417 + $0x60] sm:$0xff] %vm912, %v2193
      %2284 = vst.msk [vmem:[%s417 + $0x68] sm:$0xff] %vm912, %v2196
      %2285 = vst.msk [vmem:[%s417 + $0x70] sm:$0xff] %vm912, %v2201
      %2286 = vst.msk [vmem:[%s417 + $0x78] sm:$0xff] %vm912, %v2204
      %2287 = vst.msk [vmem:[%s417 + $0x80] sm:$0xff] %vm912, %v2209
      %2288 = vst.msk [vmem:[%s417 + $0x88] sm:$0xff] %vm912, %v2212
      %2289 = vst.msk [vmem:[%s417 + $0x90] sm:$0xff] %vm912, %v2217
      %2290 = vst.msk [vmem:[%s417 + $0x98] sm:$0xff] %vm912, %v2220
      %2291 = vst.msk [vmem:[%s417 + $0xa0] sm:$0xff] %vm912, %v2225
      %2292 = vst.msk [vmem:[%s417 + $0xa8] sm:$0xff] %vm912, %v2228
      %2293 = vst.msk [vmem:[%s417 + $0xb0] sm:$0xff] %vm912, %v2233
      %2294 = vst.msk [vmem:[%s417 + $0xb8] sm:$0xff] %vm912, %v2236
      %2295 = vst.msk [vmem:[%s417 + $0xc0] sm:$0xff] %vm912, %v2241
      %2296 = vst.msk [vmem:[%s417 + $0xc8] sm:$0xff] %vm912, %v2244
      %2297 = vst.msk [vmem:[%s417 + $0xd0] sm:$0xff] %vm912, %v2249
      %2298 = vst.msk [vmem:[%s417 + $0xd8] sm:$0xff] %vm912, %v2252
      %2299 = vst.msk [vmem:[%s417 + $0xe0] sm:$0xff] %vm912, %v2257
      %2300 = vst.msk [vmem:[%s417 + $0xe8] sm:$0xff] %vm912, %v2260
      %2301 = vst.msk [vmem:[%s417 + $0xf0] sm:$0xff] %vm912, %v2265
      %2302 = vst.msk [vmem:[%s417 + $0xf8] sm:$0xff] %vm912, %v2268
      %s2303 = smul.u32 32, %s26
      %p2304 = scmp.lt.s32.totalorder %s25, 1
      %s2305 = scalar_select %p2304, %s25, 1
      %p2306 = scmp.lt.s32.totalorder %s2303, 31
      %s2307 = scalar_select %p2306, %s2303, 31
      %s2308 = smul.addr %s2305, 32
      %s2309 = sadd.s32 %s2307, %s2308
      %s2310 = smul.addr %s2309, 8
      %s2311 = scalar_lea.vmem %s10, %s2310
      // Predicated region
      $region65: #{attention_forward.1} parent=59 // pred_check
        %p2312 = pneg %p275
      $region66: #{attention_forward.1} parent=59 // pred_check_branch
        %2314 = sbr.rel (%p2312) target = $region68
      $region67: #{attention_forward.1} parent=59 // pred_region
        %s2315 = smul.u32 32, %s26
      $region68: #{attention_forward.1} parent=59 // pred_fallthru
        _
    $region60: #{attention_forward.1} parent=5 // pred_fallthru
      _
    %p2316 = scmp.le.s32.totalorder 2, %s16
    // Predicated region
    $region69: #{attention_forward.1} parent=5 // pred_check
      %p2317 = pneg %p2316
    $region70: #{attention_forward.1} parent=5 // pred_check_branch
      %2319 = sbr.rel (%p2317) target = $region72
    $region71: #{attention_forward.1} parent=5 // pred_region
      %s2320 = ssub.s32 %s16, 2
      // Predicated region
      $region73: #{attention_forward.1} parent=71 // pred_check
        %p2321 = pneg %p281
      $region74: #{attention_forward.1} parent=71 // pred_check_branch
        %2323 = sbr.rel (%p2321) target = $region76
      $region75: #{attention_forward.1} parent=71 // pred_region
        %s2324 = smul.u32 32, %s28
        %p2325 = scmp.lt.s32.totalorder %s27, 1
        %s2326 = scalar_select %p2325, %s27, 1
        %p2327 = scmp.lt.s32.totalorder %s2324, 31
        %s2328 = scalar_select %p2327, %s2324, 31
        %s2329 = smul.addr %s2326, 32
        %s2330 = sadd.s32 %s2328, %s2329
        %s2331 = smul.addr %s2330, 8
        %s2332 = scalar_lea.vmem %s10, %s2331
      $region76: #{attention_forward.1} parent=71 // pred_fallthru
        _
    $region72: #{attention_forward.1} parent=5 // pred_fallthru
      _
  $region6: #{attention_forward.1} parent=0 // loop_footer
    %s20 = sadd.s32 1, %s16
  $region7: #{attention_forward.1} parent=0 // loop_footer_branch
    %15 = sbr.rel target = $region3
  $region8: #{attention_forward.1} parent=0 // loop_exit
    _

</llo_original>
